<compile_context>
chip_gen: v7x
topology: tpu7x:2x2x1
jax: 0.10.0
libtpu: 0.0.40
codegen_flags: <defaults>
</compile_context>

<pallas_src>
import jax
import jax.numpy as jnp
from jax.experimental import pallas as pl
from jax.experimental.pallas import tpu as pltpu


def _concat_fusion_kernel(
    x_ref, y_ref,            # (B, HALF) bf16, resident (constant block index)
    wx_ref, wy_ref,          # (1, HALF, D) int8, one full-width slab per branch
    aff_ref,                 # (1, 2, D) f32: row 0 = fused scale, row 1 = fused shift
    wout_ref,                # (D, OPAD) bf16, resident
    bout_ref,                # (1, OPAD) f32, resident
    mu_std_ref,              # out: (1, B, D) f32   (branch 0 -> mu, branch 1 -> std)
    out_ref,                 # out: (1, B, OPAD) f32 (branch 0 only; branch 1 zeroed)
):
    branch = pl.program_id(0)

    # int8 -> bf16 dequant on the VPU (VALU slot is otherwise idle; keeps the MXU
    # path identical on v5e/v6e/v7x).  The per-column quant scale is folded into
    # the BN affine applied after the f32-accumulated dot.
    wx = wx_ref[0].astype(jnp.bfloat16)
    wy = wy_ref[0].astype(jnp.bfloat16)

    # Split contraction replaces torch.cat((x, y), dim=1) @ W.
    lin = (jnp.dot(x_ref[...], wx, preferred_element_type=jnp.float32)
           + jnp.dot(y_ref[...], wy, preferred_element_type=jnp.float32))

    aff = aff_ref[0]                       # (2, D)
    z = lin * aff[0:1] + aff[1:2]          # fused (quant-scale * BN-scale, bias+BN-shift)

    @pl.when(branch == 0)
    def _():
        # mu branch: emit mu and compute fc_out(mu) in one shot.
        mu_std_ref[0] = z
        out_ref[0] = bout_ref[...] + jnp.dot(
            z.astype(wout_ref.dtype), wout_ref[...],
            preferred_element_type=jnp.float32)

    @pl.when(branch == 1)
    def _():
        # logvar branch: emit std; zero the (discarded) fc_out slab so its
        # writeback is deterministic.
        mu_std_ref[0] = jnp.exp(0.5 * z)
        out_ref[...] = jnp.zeros_like(out_ref)


def _fold_bn(gamma, beta, running_mean, running_var, eps=1e-5):
    """Eval-mode BatchNorm1d is an exact per-feature affine: z*scale + shift."""
    scale = gamma * jax.lax.rsqrt(running_var + eps)
    shift = beta - running_mean * scale
    return scale, shift


def _quantize_int8(w):
    """Per-output-column symmetric int8 quantization; returns (int8 weights, f32 scale)."""
    amax = jnp.maximum(jnp.max(jnp.abs(w), axis=0), 1e-12)
    qs = amax / 127.0
    wq = jnp.clip(jnp.round(w / qs), -127.0, 127.0).astype(jnp.int8)
    return wq, qs.astype(jnp.float32)


def concat_fusion_forward(x, y, params):
    """Pallas forward of ConcatFusion (pme=True, eval mode).

    Returns (x, y, out, auxi_out, mu_dul, std_dul), matching the torch module.
    """
    B, HALF = x.shape                    # HALF = 512
    D = params["w_mu"].shape[0]          # 1024 (concat width)
    O = params["w_out"].shape[1]         # 100
    OPAD = pl.cdiv(O, 128) * 128         # lane-dense fc_out width
    assert 2 * HALF == D

    # Fold eval-mode BN and the Linear bias into one per-feature affine.
    mu_scale, mu_shift = _fold_bn(
        params["bn_mu_gamma"], params["bn_mu_beta"],
        params["bn_mu_rmean"], params["bn_mu_rvar"])
    lv_scale, lv_shift = _fold_bn(
        params["bn_lv_gamma"], params["bn_lv_beta"],
        params["bn_lv_rmean"], params["bn_lv_rvar"])
    mu_shift = mu_shift + params["b_mu"] * mu_scale
    lv_shift = lv_shift + params["b_lv"] * lv_scale

    # int8 backbone weights; quant scale folded into the BN affine scale.
    wq_mu, qs_mu = _quantize_int8(params["w_mu"])
    wq_lv, qs_lv = _quantize_int8(params["w_lv"])

    scale = jnp.stack([mu_scale * qs_mu, lv_scale * qs_lv])            # (2, D)
    shift = jnp.stack([mu_shift, lv_shift])                            # (2, D)
    affine = jnp.stack([scale, shift], axis=1).astype(jnp.float32)     # (2, 2, D)

    # Branch-stacked, x/y-split backbone weights in int8.
    wx = jnp.stack([wq_mu[:HALF], wq_lv[:HALF]])   # (2, HALF, D) int8
    wy = jnp.stack([wq_mu[HALF:], wq_lv[HALF:]])   # (2, HALF, D) int8

    # fc_out padded to a lane-aligned width.
    w_out = jnp.pad(params["w_out"], ((0, 0), (0, OPAD - O))).astype(jnp.bfloat16)
    b_out = jnp.pad(params["b_out"], (0, OPAD - O)).reshape(1, OPAD).astype(jnp.float32)

    xb = x.astype(jnp.bfloat16)
    yb = y.astype(jnp.bfloat16)

    flops = 2 * (2 * B * HALF * D) * 2 + 2 * B * D * OPAD
    bytes_accessed = (wx.size + wy.size                        # int8 backbone weights
                      + w_out.size * 2 + b_out.size * 4        # fc_out params
                      + affine.size * 4
                      + (xb.size + yb.size) * 2                # activations in
                      + (2 * B * D + 2 * B * OPAD) * 4)        # outputs

    mu_std, out_pad = pl.pallas_call(
        _concat_fusion_kernel,
        grid=(2,),   # branch 0 = mu backbone (+fc_out), branch 1 = logvar backbone
        in_specs=[
            pl.BlockSpec((B, HALF), lambda b: (0, 0)),
            pl.BlockSpec((B, HALF), lambda b: (0, 0)),
            pl.BlockSpec((1, HALF, D), lambda b: (b, 0, 0)),
            pl.BlockSpec((1, HALF, D), lambda b: (b, 0, 0)),
            pl.BlockSpec((1, 2, D), lambda b: (b, 0, 0)),
            pl.BlockSpec((D, OPAD), lambda b: (0, 0)),
            pl.BlockSpec((1, OPAD), lambda b: (0, 0)),
        ],
        out_specs=[
            pl.BlockSpec((1, B, D), lambda b: (b, 0, 0)),
            pl.BlockSpec((1, B, OPAD), lambda b: (b, 0, 0)),
        ],
        out_shape=(
            jax.ShapeDtypeStruct((2, B, D), jnp.float32),     # [mu ; std]
            jax.ShapeDtypeStruct((2, B, OPAD), jnp.float32),  # per-branch fc_out slab
        ),
        compiler_params=pltpu.CompilerParams(
            dimension_semantics=("parallel",)),
        cost_estimate=pl.CostEstimate(
            flops=int(flops),
            transcendentals=int(B * D),
            bytes_accessed=int(bytes_accessed)),
    )(xb, yb, wx, wy, affine, w_out, b_out)

    mu_dul = mu_std[0]
    std_dul = mu_std[1]
    out = out_pad[0, :, :O]
    # auxi_out is bit-identical to out (module reuses fc_out); no second compute.
    return x, y, out, out, mu_dul, std_dul


def init_params(key, input_dim=1024, output_dim=100):
    """Deterministic synthetic parameters mirroring the module's __init__ shapes."""
    ks = jax.random.split(key, 16)
    bnd = 1.0 / (input_dim ** 0.5)

    def uni(k, shape):
        # torch nn.Linear default: U(-1/sqrt(fan_in), 1/sqrt(fan_in))
        return jax.random.uniform(k, shape, jnp.float32, -bnd, bnd)

    params = {
        # Linear weights stored already transposed to [in, out]
        "w_mu": uni(ks[0], (input_dim, input_dim)),
        "b_mu": uni(ks[1], (input_dim,)),
        "w_lv": uni(ks[2], (input_dim, input_dim)),
        "b_lv": uni(ks[3], (input_dim,)),
        "w_out": uni(ks[4], (input_dim, output_dim)),
        "b_out": uni(ks[5], (output_dim,)),
        # BatchNorm1d affine params + (non-trivial) running statistics
        "bn_mu_gamma": 1.0 + 0.1 * jax.random.normal(ks[6], (input_dim,), jnp.float32),
        "bn_mu_beta": 0.1 * jax.random.normal(ks[7], (input_dim,), jnp.float32),
        "bn_mu_rmean": 0.1 * jax.random.normal(ks[8], (input_dim,), jnp.float32),
        "bn_mu_rvar": jnp.abs(1.0 + 0.1 * jax.random.normal(ks[9], (input_dim,), jnp.float32)),
        "bn_lv_gamma": 1.0 + 0.1 * jax.random.normal(ks[10], (input_dim,), jnp.float32),
        "bn_lv_beta": 0.1 * jax.random.normal(ks[11], (input_dim,), jnp.float32),
        "bn_lv_rmean": 0.1 * jax.random.normal(ks[12], (input_dim,), jnp.float32),
        "bn_lv_rvar": jnp.abs(1.0 + 0.1 * jax.random.normal(ks[13], (input_dim,), jnp.float32)),
    }
    return params


def _reference_forward(x, y, params):
    """Pure-JAX f32 reference of the same (pme=True, eval) path, for validation."""
    h = jnp.concatenate([x, y], axis=1)
    mu_scale, mu_shift = _fold_bn(
        params["bn_mu_gamma"], params["bn_mu_beta"],
        params["bn_mu_rmean"], params["bn_mu_rvar"])
    lv_scale, lv_shift = _fold_bn(
        params["bn_lv_gamma"], params["bn_lv_beta"],
        params["bn_lv_rmean"], params["bn_lv_rvar"])
    hp = jax.lax.Precision.HIGHEST
    mu = (jnp.dot(h, params["w_mu"], precision=hp) + params["b_mu"]) * mu_scale + mu_shift
    lv = (jnp.dot(h, params["w_lv"], precision=hp) + params["b_lv"]) * lv_scale + lv_shift
    std = jnp.exp(0.5 * lv)
    out = jnp.dot(mu, params["w_out"], precision=hp) + params["b_out"]
    return out, out, mu, std


if __name__ == "__main__":
    key = jax.random.PRNGKey(0)
    kx, ky, kp = jax.random.split(key, 3)

    B, input_dim, output_dim = 8, 1024, 100  # module hardcodes 1024-dim backbones
    x = jax.random.normal(kx, (B, input_dim // 2), jnp.float32)
    y = jax.random.normal(ky, (B, input_dim // 2), jnp.float32)
    params = init_params(kp, input_dim, output_dim)

    x_o, y_o, out, auxi_out, mu_dul, std_dul = concat_fusion_forward(x, y, params)
    jax.block_until_ready((x_o, y_o, out, auxi_out, mu_dul, std_dul))

    ref_out, ref_auxi, ref_mu, ref_std = _reference_forward(x, y, params)
    assert jnp.allclose(out, ref_out, rtol=2e-2, atol=2e-2)
    assert jnp.allclose(auxi_out, ref_auxi, rtol=2e-2, atol=2e-2)
    assert jnp.allclose(mu_dul, ref_mu, rtol=2e-2, atol=2e-2)
    assert jnp.allclose(std_dul, ref_std, rtol=2e-2, atol=2e-2)
    assert jnp.array_equal(x_o, x) and jnp.array_equal(y_o, y)

    print("KERNEL_OK")
</pallas_src>

<mosaic_0001>
module attributes {stable_mosaic.version = 11 : i64} {
  func.func @_concat_fusion_kernel(%arg0: i32, %arg1: memref<8x512xbf16, #tpu.memory_space<vmem>>, %arg2: memref<8x512xbf16, #tpu.memory_space<vmem>>, %arg3: memref<1x512x1024xi8, #tpu.memory_space<vmem>>, %arg4: memref<1x512x1024xi8, #tpu.memory_space<vmem>>, %arg5: memref<1x2x1024xf32, #tpu.memory_space<vmem>>, %arg6: memref<1024x128xbf16, #tpu.memory_space<vmem>>, %arg7: memref<1x128xf32, #tpu.memory_space<vmem>>, %arg8: memref<1x8x1024xf32, #tpu.memory_space<vmem>>, %arg9: memref<1x8x128xf32, #tpu.memory_space<vmem>>) attributes {dimension_semantics = [#tpu.dimension_semantics<parallel>], iteration_bounds = array<i64: 2>, scalar_prefetch = 0 : i64, scratch_operands = 0 : i64, tpu.core_type = #tpu.core_type<tc>, window_params = [{pipeline_mode = #tpu.pipeline_mode<synchronous>, transform_indices = @transform_0, window_bounds = array<i64: 8, 512>}, {pipeline_mode = #tpu.pipeline_mode<synchronous>, transform_indices = @transform_1, window_bounds = array<i64: 8, 512>}, {transform_indices = @transform_2, window_bounds = array<i64: 1, 512, 1024>}, {transform_indices = @transform_3, window_bounds = array<i64: 1, 512, 1024>}, {transform_indices = @transform_4, window_bounds = array<i64: 1, 2, 1024>}, {pipeline_mode = #tpu.pipeline_mode<synchronous>, transform_indices = @transform_5, window_bounds = array<i64: 1024, 128>}, {pipeline_mode = #tpu.pipeline_mode<synchronous>, transform_indices = @transform_6, window_bounds = array<i64: 1, 128>}, {transform_indices = @transform_7, window_bounds = array<i64: 1, 8, 1024>}, {transform_indices = @transform_8, window_bounds = array<i64: 1, 8, 128>}]} {
    %c0 = arith.constant 0 : index
    %c0_0 = arith.constant 0 : index
    %c0_1 = arith.constant 0 : index
    %0 = vector.load %arg3[%c0, %c0_0, %c0_1] : memref<1x512x1024xi8, #tpu.memory_space<vmem>>, vector<1x512x1024xi8>
    %1 = vector.shape_cast %0 : vector<1x512x1024xi8> to vector<512x1024xi8>
    %2 = arith.sitofp %1 : vector<512x1024xi8> to vector<512x1024xbf16>
    %c0_2 = arith.constant 0 : index
    %c0_3 = arith.constant 0 : index
    %c0_4 = arith.constant 0 : index
    %3 = vector.load %arg4[%c0_2, %c0_3, %c0_4] : memref<1x512x1024xi8, #tpu.memory_space<vmem>>, vector<1x512x1024xi8>
    %4 = vector.shape_cast %3 : vector<1x512x1024xi8> to vector<512x1024xi8>
    %5 = arith.sitofp %4 : vector<512x1024xi8> to vector<512x1024xbf16>
    %c0_5 = arith.constant 0 : index
    %c0_6 = arith.constant 0 : index
    %6 = vector.load %arg1[%c0_5, %c0_6] : memref<8x512xbf16, #tpu.memory_space<vmem>>, vector<8x512xbf16>
    %cst = arith.constant dense<0.000000e+00> : vector<8x1024xf32>
    %7 = tpu.matmul %6, %2, %cst {dimension_numbers = #tpu.dot_dimension_numbers<[1], [0], [0], [1], [0, 0, 1, 1], [], []>} : vector<8x512xbf16>, vector<512x1024xbf16>, vector<8x1024xf32> -> vector<8x1024xf32>
    %c0_7 = arith.constant 0 : index
    %c0_8 = arith.constant 0 : index
    %8 = vector.load %arg2[%c0_7, %c0_8] : memref<8x512xbf16, #tpu.memory_space<vmem>>, vector<8x512xbf16>
    %cst_9 = arith.constant dense<0.000000e+00> : vector<8x1024xf32>
    %9 = tpu.matmul %8, %5, %cst_9 {dimension_numbers = #tpu.dot_dimension_numbers<[1], [0], [0], [1], [0, 0, 1, 1], [], []>} : vector<8x512xbf16>, vector<512x1024xbf16>, vector<8x1024xf32> -> vector<8x1024xf32>
    %10 = arith.addf %7, %9 : vector<8x1024xf32>
    %c0_10 = arith.constant 0 : index
    %c0_11 = arith.constant 0 : index
    %c0_12 = arith.constant 0 : index
    %11 = vector.load %arg5[%c0_10, %c0_11, %c0_12] : memref<1x2x1024xf32, #tpu.memory_space<vmem>>, vector<1x2x1024xf32>
    %12 = vector.shape_cast %11 : vector<1x2x1024xf32> to vector<2x1024xf32>
    %13 = vector.extract_strided_slice %12 {offsets = [0, 0], sizes = [1, 1024], strides = [1, 1]} : vector<2x1024xf32> to vector<1x1024xf32>
    %14 = vector.broadcast %13 : vector<1x1024xf32> to vector<8x1024xf32>
    %15 = arith.mulf %10, %14 : vector<8x1024xf32>
    %16 = vector.extract_strided_slice %12 {offsets = [1, 0], sizes = [1, 1024], strides = [1, 1]} : vector<2x1024xf32> to vector<1x1024xf32>
    %17 = vector.broadcast %16 : vector<1x1024xf32> to vector<8x1024xf32>
    %18 = arith.addf %15, %17 : vector<8x1024xf32>
    %c0_i32 = arith.constant 0 : i32
    %19 = arith.cmpi eq, %arg0, %c0_i32 : i32
    %20 = arith.extui %19 : i1 to i32
    %c0_i32_13 = arith.constant 0 : i32
    %21 = arith.cmpi ne, %20, %c0_i32_13 : i32
    scf.if %21 {
      %c0_15 = arith.constant 0 : index
      %c0_16 = arith.constant 0 : index
      %c0_17 = arith.constant 0 : index
      %25 = vector.load %arg8[%c0_15, %c0_16, %c0_17] : memref<1x8x1024xf32, #tpu.memory_space<vmem>>, vector<1x8x1024xf32>
      %26 = vector.shape_cast %25 : vector<1x8x1024xf32> to vector<8x1024xf32>
      %27 = vector.shape_cast %18 : vector<8x1024xf32> to vector<1x8x1024xf32>
      tpu.vector_store %arg8[%c0_15, %c0_16, %c0_17], %27 {strides = array<i32>} : memref<1x8x1024xf32, #tpu.memory_space<vmem>>, vector<1x8x1024xf32>,
      %c0_18 = arith.constant 0 : index
      %c0_19 = arith.constant 0 : index
      %28 = vector.load %arg7[%c0_18, %c0_19] : memref<1x128xf32, #tpu.memory_space<vmem>>, vector<1x128xf32>
      %29 = arith.truncf %18 : vector<8x1024xf32> to vector<8x1024xbf16>
      %c0_20 = arith.constant 0 : index
      %c0_21 = arith.constant 0 : index
      %30 = vector.load %arg6[%c0_20, %c0_21] : memref<1024x128xbf16, #tpu.memory_space<vmem>>, vector<1024x128xbf16>
      %cst_22 = arith.constant dense<0.000000e+00> : vector<8x128xf32>
      %31 = tpu.matmul %29, %30, %cst_22 {dimension_numbers = #tpu.dot_dimension_numbers<[1], [0], [0], [1], [0, 0, 1, 1], [], []>} : vector<8x1024xbf16>, vector<1024x128xbf16>, vector<8x128xf32> -> vector<8x128xf32>
      %32 = vector.broadcast %28 : vector<1x128xf32> to vector<8x128xf32>
      %33 = arith.addf %32, %31 : vector<8x128xf32>
      %c0_23 = arith.constant 0 : index
      %c0_24 = arith.constant 0 : index
      %c0_25 = arith.constant 0 : index
      %34 = vector.load %arg9[%c0_23, %c0_24, %c0_25] : memref<1x8x128xf32, #tpu.memory_space<vmem>>, vector<1x8x128xf32>
      %35 = vector.shape_cast %34 : vector<1x8x128xf32> to vector<8x128xf32>
      %36 = vector.shape_cast %33 : vector<8x128xf32> to vector<1x8x128xf32>
      tpu.vector_store %arg9[%c0_23, %c0_24, %c0_25], %36 {strides = array<i32>} : memref<1x8x128xf32, #tpu.memory_space<vmem>>, vector<1x8x128xf32>,
    } else {
    }
    %c1_i32 = arith.constant 1 : i32
    %22 = arith.cmpi eq, %arg0, %c1_i32 : i32
    %23 = arith.extui %22 : i1 to i32
    %c0_i32_14 = arith.constant 0 : i32
    %24 = arith.cmpi ne, %23, %c0_i32_14 : i32
    scf.if %24 {
      %cst_15 = arith.constant 5.000000e-01 : f32
      %25 = vector.broadcast %cst_15 : f32 to vector<8x1024xf32>
      %26 = arith.mulf %25, %18 : vector<8x1024xf32>
      %27 = math.exp %26 : vector<8x1024xf32>
      %c0_16 = arith.constant 0 : index
      %c0_17 = arith.constant 0 : index
      %c0_18 = arith.constant 0 : index
      %28 = vector.load %arg8[%c0_16, %c0_17, %c0_18] : memref<1x8x1024xf32, #tpu.memory_space<vmem>>, vector<1x8x1024xf32>
      %29 = vector.shape_cast %28 : vector<1x8x1024xf32> to vector<8x1024xf32>
      %30 = vector.shape_cast %27 : vector<8x1024xf32> to vector<1x8x1024xf32>
      tpu.vector_store %arg8[%c0_16, %c0_17, %c0_18], %30 {strides = array<i32>} : memref<1x8x1024xf32, #tpu.memory_space<vmem>>, vector<1x8x1024xf32>,
      %cst_19 = arith.constant 0.000000e+00 : f32
      %31 = vector.broadcast %cst_19 : f32 to vector<1x8x128xf32>
      %c0_20 = arith.constant 0 : index
      %c0_21 = arith.constant 0 : index
      %c0_22 = arith.constant 0 : index
      %32 = vector.load %arg9[%c0_20, %c0_21, %c0_22] : memref<1x8x128xf32, #tpu.memory_space<vmem>>, vector<1x8x128xf32>
      tpu.vector_store %arg9[%c0_20, %c0_21, %c0_22], %31 {strides = array<i32>} : memref<1x8x128xf32, #tpu.memory_space<vmem>>, vector<1x8x128xf32>,
    } else {
    }
    return
  }
  func.func @transform_0(%arg0: i32) -> (i32, i32) {
    %c0_i32 = arith.constant 0 : i32
    %c0_i32_0 = arith.constant 0 : i32
    %c0_i32_1 = arith.constant 0 : i32
    return %c0_i32, %c0_i32_0 : i32, i32
  }
  func.func @transform_1(%arg0: i32) -> (i32, i32) {
    %c0_i32 = arith.constant 0 : i32
    %c0_i32_0 = arith.constant 0 : i32
    %c0_i32_1 = arith.constant 0 : i32
    return %c0_i32, %c0_i32_0 : i32, i32
  }
  func.func @transform_2(%arg0: i32) -> (i32, i32, i32) {
    %c0_i32 = arith.constant 0 : i32
    %c0_i32_0 = arith.constant 0 : i32
    %c0_i32_1 = arith.constant 0 : i32
    return %arg0, %c0_i32, %c0_i32_0 : i32, i32, i32
  }
  func.func @transform_3(%arg0: i32) -> (i32, i32, i32) {
    %c0_i32 = arith.constant 0 : i32
    %c0_i32_0 = arith.constant 0 : i32
    %c0_i32_1 = arith.constant 0 : i32
    return %arg0, %c0_i32, %c0_i32_0 : i32, i32, i32
  }
  func.func @transform_4(%arg0: i32) -> (i32, i32, i32) {
    %c0_i32 = arith.constant 0 : i32
    %c0_i32_0 = arith.constant 0 : i32
    %c0_i32_1 = arith.constant 0 : i32
    return %arg0, %c0_i32, %c0_i32_0 : i32, i32, i32
  }
  func.func @transform_5(%arg0: i32) -> (i32, i32) {
    %c0_i32 = arith.constant 0 : i32
    %c0_i32_0 = arith.constant 0 : i32
    %c0_i32_1 = arith.constant 0 : i32
    return %c0_i32, %c0_i32_0 : i32, i32
  }
  func.func @transform_6(%arg0: i32) -> (i32, i32) {
    %c0_i32 = arith.constant 0 : i32
    %c0_i32_0 = arith.constant 0 : i32
    %c0_i32_1 = arith.constant 0 : i32
    return %c0_i32, %c0_i32_0 : i32, i32
  }
  func.func @transform_7(%arg0: i32) -> (i32, i32, i32) {
    %c0_i32 = arith.constant 0 : i32
    %c0_i32_0 = arith.constant 0 : i32
    %c0_i32_1 = arith.constant 0 : i32
    return %arg0, %c0_i32, %c0_i32_0 : i32, i32, i32
  }
  func.func @transform_8(%arg0: i32) -> (i32, i32, i32) {
    %c0_i32 = arith.constant 0 : i32
    %c0_i32_0 = arith.constant 0 : i32
    %c0_i32_1 = arith.constant 0 : i32
    return %arg0, %c0_i32, %c0_i32_0 : i32, i32, i32
  }
}

</mosaic_0001>

<llo_original>
// kernel: tpu_custom_call.1
$region0: #{tpu_custom_call.1}
  #allocation0 [shape = 'u32[]', space=smem, size = 0x4, offset = 0x4, fixed_abs, tag = 'smem constant byte address 0x4 - core index']
  #allocation1 [shape = 'u32[144,128]{1,0:T(1,128)}', space=vmem, size = 0x12000, scoped, tag = 'internal scratch']
  %s0 = inlined_call_operand.hbm [shape: bf16[8,512], index: 0, kind: input, shape index: {}]
  %s1 = inlined_call_operand.hbm [shape: bf16[8,512], index: 1, kind: input, shape index: {}]
  %s2 = inlined_call_operand.hbm [shape: s8[2,512,1024], index: 2, kind: input, shape index: {}]
  %s3 = inlined_call_operand.hbm [shape: s8[2,512,1024], index: 3, kind: input, shape index: {}]
  %s4 = inlined_call_operand.hbm [shape: f32[2,2,1024], index: 4, kind: input, shape index: {}]
  %s5 = inlined_call_operand.hbm [shape: bf16[1024,128], index: 5, kind: input, shape index: {}]
  %s6 = inlined_call_operand.vmem [shape: f32[1,128], index: 6, kind: input, shape index: {}]
  %s7 = inlined_call_operand.hbm [shape: f32[2,8,1024], index: 7, kind: output, shape index: {0}]
  %s8 = inlined_call_operand.hbm [shape: f32[2,8,128], index: 8, kind: output, shape index: {1}]
  %9 = xla_tuple %s7, %s8
  %s10 = sld [smem:[#allocation0]]
  $region101: #{tpu_custom_call.1} parent=0
    _
  %s12 = ssub.s32 1, %s10
  %s13 = scalar_select 0, %s12, %s10
  $region1: #{tpu_custom_call.1} parent=0
    #allocation2 [shape = 'u8[8192]{0}', space=vmem, size = 0x2000, scoped, tag = 'input window, operand 0, single buffered']
    #allocation3 [shape = 's32[2]{0}', space=sflag, size = 0x8, scoped, tag = 'scoped memory for tpu_custom_call.1']
    #allocation4 [shape = 's32[2]{0}', space=sflag, size = 0x8, scoped, tag = 'scoped memory for tpu_custom_call.1']
    #allocation5 [shape = 'u8[8192]{0}', space=vmem, size = 0x2000, scoped, tag = 'input window, operand 1, single buffered']
    #allocation6 [shape = 's32[1]{0}', space=sflag, size = 0x4, scoped, tag = 'scoped memory for tpu_custom_call.1']
    #allocation7 [shape = 'u8[1048576]{0}', space=vmem, size = 0x100000, scoped, tag = 'input window, operand 2']
    #allocation8 [shape = 'u8[1048576]{0}', space=vmem, size = 0x100000, scoped, tag = 'input window, operand 3']
    #allocation9 [shape = 'u8[16384]{0}', space=vmem, size = 0x4000, scoped, tag = 'input window, operand 4']
    #allocation10 [shape = 'u8[262144]{0}', space=vmem, size = 0x40000, scoped, tag = 'input window, operand 5, single buffered']
    #allocation11 [shape = 'u8[65536]{0}', space=vmem, size = 0x10000, scoped, tag = 'output window, operand 0']
    #allocation12 [shape = 'u8[8192]{0}', space=vmem, size = 0x2000, scoped, tag = 'output window, operand 1']
    #allocation13 [shape = 's32[2]{0}', space=sflag, size = 0x8, scoped, tag = 'scoped memory for tpu_custom_call.1']
    %14 = vsyncpa [#allocation3], 0
    %15 = vsyncpa [#allocation6], 0
    %16 = vsyncpa [#allocation4], 0
    %s17 = scalar_lea.sflag [#allocation4], 1
    %18 = vsyncpa %s17, 0
    %19 = vsyncpa [#allocation13], 0
    %s20 = scalar_lea.sflag [#allocation13], 1
    %21 = vsyncpa %s20, 0
    loop: start=0, step=1, limit=4
    $region2: #{tpu_custom_call.1} parent=1 // loop_pre_header
      _
    $region3: #{tpu_custom_call.1} parent=1 // loop_header
      %s23 = sphi 0, %s27
      %p24 = scmp.ge.s32.totalorder %s23, 4
      %s31 = sphi 0, %s31
      %s33 = sphi 0, %s31
      %s34 = sphi 0, %s33
      %s48 = sphi 0, %s34
      %s52 = sphi 0, %s52
      %s54 = sphi 0, %s52
      %s55 = sphi 0, %s54
      %s69 = sphi 0, %s55
      %s75 = sphi 0, %s77
      %s78 = sphi 0, %s75
      %s79 = sphi 0, %s78
      %s95 = sphi 0, %s79
      %s101 = sphi 0, %s103
      %s104 = sphi 0, %s101
      %s105 = sphi 0, %s104
      %s121 = sphi 0, %s105
      %s127 = sphi 0, %s129
      %s130 = sphi 0, %s127
      %s131 = sphi 0, %s130
      %s147 = sphi 0, %s131
      %s151 = sphi 0, %s151
      %s153 = sphi 0, %s151
      %s154 = sphi 0, %s153
      %s168 = sphi 0, %s154
      %s172 = sphi 0, %s172
      %s174 = sphi 0, %s172
      %s175 = sphi 0, %s174
      %s189 = sphi 0, %s175
      %s195 = sphi 0, %s197
      %s198 = sphi 0, %s195
      %s199 = sphi 0, %s198
      %s215 = sphi 0, %s199
      %s221 = sphi 0, %s223
      %s224 = sphi 0, %s221
      %s225 = sphi 0, %s224
      %s241 = sphi 0, %s225
    $region4: #{tpu_custom_call.1} parent=1 // loop_header_branch
      %26 = sbr.rel (%p24) target = $region8
    $region5: #{tpu_custom_call.1} parent=1 // loop_body
      %s28 = ssub.s32 %s23, 1
      %s29 = ssub.s32 %s23, 2
      %s30 = sadd.s32 %s23, 1
      %s32 = sadd.s32 %s31, 1
      %p35 = scmp.eq.s32.totalorder %s23, 1
      %p36 = scmp.ne.s32.totalorder %s31, %s33
      %p37 = scmp.eq.s32.totalorder %s23, 0
      %p38 = por %p36, %p37
      %p39 = scmp.ne.s32.totalorder %s31, %s33
      %p40 = scmp.eq.s32.totalorder %s28, 1
      %p41 = por %p39, %p40
      %p42 = scmp.ne.s32.totalorder %s33, %s34
      %p43 = scmp.eq.s32.totalorder %s28, 0
      %p44 = por %p42, %p43
      %p45 = scmp.ne.s32.totalorder %s33, %s34
      %p46 = scmp.eq.s32.totalorder %s29, 1
      %p47 = por %p45, %p46
      %p49 = scmp.ne.s32.totalorder %s34, %s48
      %p50 = scmp.eq.s32.totalorder %s29, 0
      %p51 = por %p49, %p50
      %s53 = sadd.s32 %s52, 1
      %p56 = scmp.eq.s32.totalorder %s23, 1
      %p57 = scmp.ne.s32.totalorder %s52, %s54
      %p58 = scmp.eq.s32.totalorder %s23, 0
      %p59 = por %p57, %p58
      %p60 = scmp.ne.s32.totalorder %s52, %s54
      %p61 = scmp.eq.s32.totalorder %s28, 1
      %p62 = por %p60, %p61
      %p63 = scmp.ne.s32.totalorder %s54, %s55
      %p64 = scmp.eq.s32.totalorder %s28, 0
      %p65 = por %p63, %p64
      %p66 = scmp.ne.s32.totalorder %s54, %s55
      %p67 = scmp.eq.s32.totalorder %s29, 1
      %p68 = por %p66, %p67
      %p70 = scmp.ne.s32.totalorder %s55, %s69
      %p71 = scmp.eq.s32.totalorder %s29, 0
      %p72 = por %p70, %p71
      %s73 = ssub.s32 %s23, %s30
      %p74 = scmp.eq.s32.totalorder %s73, 0
      %s76 = sadd.s32 %s75, 1
      %s77 = scalar_select %p74, %s75, %s76
      %p80 = pneg %p74
      %p81 = scmp.eq.s32.totalorder %s23, 1
      %p82 = por %p80, %p81
      %p83 = scmp.ne.s32.totalorder %s75, %s78
      %p84 = scmp.eq.s32.totalorder %s23, 0
      %p85 = por %p83, %p84
      %p86 = scmp.ne.s32.totalorder %s75, %s78
      %p87 = scmp.eq.s32.totalorder %s28, 1
      %p88 = por %p86, %p87
      %p89 = scmp.ne.s32.totalorder %s78, %s79
      %p90 = scmp.eq.s32.totalorder %s28, 0
      %p91 = por %p89, %p90
      %p92 = scmp.ne.s32.totalorder %s78, %s79
      %p93 = scmp.eq.s32.totalorder %s29, 1
      %p94 = por %p92, %p93
      %p96 = scmp.ne.s32.totalorder %s79, %s95
      %p97 = scmp.eq.s32.totalorder %s29, 0
      %p98 = por %p96, %p97
      %s99 = ssub.s32 %s23, %s30
      %p100 = scmp.eq.s32.totalorder %s99, 0
      %s102 = sadd.s32 %s101, 1
      %s103 = scalar_select %p100, %s101, %s102
      %p106 = pneg %p100
      %p107 = scmp.eq.s32.totalorder %s23, 1
      %p108 = por %p106, %p107
      %p109 = scmp.ne.s32.totalorder %s101, %s104
      %p110 = scmp.eq.s32.totalorder %s23, 0
      %p111 = por %p109, %p110
      %p112 = scmp.ne.s32.totalorder %s101, %s104
      %p113 = scmp.eq.s32.totalorder %s28, 1
      %p114 = por %p112, %p113
      %p115 = scmp.ne.s32.totalorder %s104, %s105
      %p116 = scmp.eq.s32.totalorder %s28, 0
      %p117 = por %p115, %p116
      %p118 = scmp.ne.s32.totalorder %s104, %s105
      %p119 = scmp.eq.s32.totalorder %s29, 1
      %p120 = por %p118, %p119
      %p122 = scmp.ne.s32.totalorder %s105, %s121
      %p123 = scmp.eq.s32.totalorder %s29, 0
      %p124 = por %p122, %p123
      %s125 = ssub.s32 %s23, %s30
      %p126 = scmp.eq.s32.totalorder %s125, 0
      %s128 = sadd.s32 %s127, 1
      %s129 = scalar_select %p126, %s127, %s128
      %p132 = pneg %p126
      %p133 = scmp.eq.s32.totalorder %s23, 1
      %p134 = por %p132, %p133
      %p135 = scmp.ne.s32.totalorder %s127, %s130
      %p136 = scmp.eq.s32.totalorder %s23, 0
      %p137 = por %p135, %p136
      %p138 = scmp.ne.s32.totalorder %s127, %s130
      %p139 = scmp.eq.s32.totalorder %s28, 1
      %p140 = por %p138, %p139
      %p141 = scmp.ne.s32.totalorder %s130, %s131
      %p142 = scmp.eq.s32.totalorder %s28, 0
      %p143 = por %p141, %p142
      %p144 = scmp.ne.s32.totalorder %s130, %s131
      %p145 = scmp.eq.s32.totalorder %s29, 1
      %p146 = por %p144, %p145
      %p148 = scmp.ne.s32.totalorder %s131, %s147
      %p149 = scmp.eq.s32.totalorder %s29, 0
      %p150 = por %p148, %p149
      %s152 = sadd.s32 %s151, 1
      %p155 = scmp.eq.s32.totalorder %s23, 1
      %p156 = scmp.ne.s32.totalorder %s151, %s153
      %p157 = scmp.eq.s32.totalorder %s23, 0
      %p158 = por %p156, %p157
      %p159 = scmp.ne.s32.totalorder %s151, %s153
      %p160 = scmp.eq.s32.totalorder %s28, 1
      %p161 = por %p159, %p160
      %p162 = scmp.ne.s32.totalorder %s153, %s154
      %p163 = scmp.eq.s32.totalorder %s28, 0
      %p164 = por %p162, %p163
      %p165 = scmp.ne.s32.totalorder %s153, %s154
      %p166 = scmp.eq.s32.totalorder %s29, 1
      %p167 = por %p165, %p166
      %p169 = scmp.ne.s32.totalorder %s154, %s168
      %p170 = scmp.eq.s32.totalorder %s29, 0
      %p171 = por %p169, %p170
      %s173 = sadd.s32 %s172, 1
      %p176 = scmp.eq.s32.totalorder %s23, 1
      %p177 = scmp.ne.s32.totalorder %s172, %s174
      %p178 = scmp.eq.s32.totalorder %s23, 0
      %p179 = por %p177, %p178
      %p180 = scmp.ne.s32.totalorder %s172, %s174
      %p181 = scmp.eq.s32.totalorder %s28, 1
      %p182 = por %p180, %p181
      %p183 = scmp.ne.s32.totalorder %s174, %s175
      %p184 = scmp.eq.s32.totalorder %s28, 0
      %p185 = por %p183, %p184
      %p186 = scmp.ne.s32.totalorder %s174, %s175
      %p187 = scmp.eq.s32.totalorder %s29, 1
      %p188 = por %p186, %p187
      %p190 = scmp.ne.s32.totalorder %s175, %s189
      %p191 = scmp.eq.s32.totalorder %s29, 0
      %p192 = por %p190, %p191
      %s193 = ssub.s32 %s23, %s30
      %p194 = scmp.eq.s32.totalorder %s193, 0
      %s196 = sadd.s32 %s195, 1
      %s197 = scalar_select %p194, %s195, %s196
      %p200 = pneg %p194
      %p201 = scmp.eq.s32.totalorder %s23, 1
      %p202 = por %p200, %p201
      %p203 = scmp.ne.s32.totalorder %s195, %s198
      %p204 = scmp.eq.s32.totalorder %s23, 0
      %p205 = por %p203, %p204
      %p206 = scmp.ne.s32.totalorder %s195, %s198
      %p207 = scmp.eq.s32.totalorder %s28, 1
      %p208 = por %p206, %p207
      %p209 = scmp.ne.s32.totalorder %s198, %s199
      %p210 = scmp.eq.s32.totalorder %s28, 0
      %p211 = por %p209, %p210
      %p212 = scmp.ne.s32.totalorder %s198, %s199
      %p213 = scmp.eq.s32.totalorder %s29, 1
      %p214 = por %p212, %p213
      %p216 = scmp.ne.s32.totalorder %s199, %s215
      %p217 = scmp.eq.s32.totalorder %s29, 0
      %p218 = por %p216, %p217
      %s219 = ssub.s32 %s23, %s30
      %p220 = scmp.eq.s32.totalorder %s219, 0
      %s222 = sadd.s32 %s221, 1
      %s223 = scalar_select %p220, %s221, %s222
      %p226 = pneg %p220
      %p227 = scmp.eq.s32.totalorder %s23, 1
      %p228 = por %p226, %p227
      %p229 = scmp.ne.s32.totalorder %s221, %s224
      %p230 = scmp.eq.s32.totalorder %s23, 0
      %p231 = por %p229, %p230
      %p232 = scmp.ne.s32.totalorder %s221, %s224
      %p233 = scmp.eq.s32.totalorder %s28, 1
      %p234 = por %p232, %p233
      %p235 = scmp.ne.s32.totalorder %s224, %s225
      %p236 = scmp.eq.s32.totalorder %s28, 0
      %p237 = por %p235, %p236
      %p238 = scmp.ne.s32.totalorder %s224, %s225
      %p239 = scmp.eq.s32.totalorder %s29, 1
      %p240 = por %p238, %p239
      %p242 = scmp.ne.s32.totalorder %s225, %s241
      %p243 = scmp.eq.s32.totalorder %s29, 0
      %p244 = por %p242, %p243
      %p245 = scmp.le.s32.totalorder 1, %s23
      %p246 = scmp.lt.s32.totalorder %s23, 3
      %p247 = pnand %p245, %p246
      %p248 = pneg %p247
      // Predicated region
      $region9: #{tpu_custom_call.1} parent=5 // pred_check
        _
      $region10: #{tpu_custom_call.1} parent=5 // pred_check_branch
        %250 = sbr.rel (%p247) target = $region12
      $region11: #{tpu_custom_call.1} parent=5 // pred_region
        %s251 = ssub.s32 %s23, 1
        // Predicated region
        $region13: #{tpu_custom_call.1} parent=11 // pred_check
          %p252 = pneg %p44
        $region14: #{tpu_custom_call.1} parent=11 // pred_check_branch
          %254 = sbr.rel (%p252) target = $region16
        $region15: #{tpu_custom_call.1} parent=11 // pred_region
          %s256 = ssub.s32 256, 256
          %257 = vsyncadd [#allocation3], %s256
          %s259 = sshll.u32 [#allocation2], 4
          %s260 = int_to_ptr.vmem [resolvable:$true] %s259
          %262 = dma.hbm_to_vmem [thread:$0]  %s0, 256, %s260, [#allocation3]
        $region16: #{tpu_custom_call.1} parent=11 // pred_fallthru
          _
        // Predicated region
        $region17: #{tpu_custom_call.1} parent=11 // pred_check
          %p263 = pneg %p65
        $region18: #{tpu_custom_call.1} parent=11 // pred_check_branch
          %265 = sbr.rel (%p263) target = $region20
        $region19: #{tpu_custom_call.1} parent=11 // pred_region
          %s267 = ssub.s32 256, 256
          %268 = vsyncadd [#allocation6], %s267
          %s270 = sshll.u32 [#allocation5], 4
          %s271 = int_to_ptr.vmem [resolvable:$true] %s270
          %273 = dma.hbm_to_vmem [thread:$0]  %s1, 256, %s271, [#allocation6]
        $region20: #{tpu_custom_call.1} parent=11 // pred_fallthru
          _
        // Predicated region
        $region21: #{tpu_custom_call.1} parent=11 // pred_check
          %p274 = pneg %p164
        $region22: #{tpu_custom_call.1} parent=11 // pred_check_branch
          %276 = sbr.rel (%p274) target = $region24
        $region23: #{tpu_custom_call.1} parent=11 // pred_region
          %s278 = ssub.s32 8192, 8192
          %279 = vsyncadd [#allocation6], %s278
          %s280 = sshll.u32 [#allocation10], 4
          %s281 = int_to_ptr.vmem [resolvable:$true] %s280
          %286 = dma.hbm_to_vmem [thread:$0]  %s5, 8192, %s281, [#allocation6], 64, 64, 4
        $region24: #{tpu_custom_call.1} parent=11 // pred_fallthru
          _
        // Predicated region
        $region25: #{tpu_custom_call.1} parent=11 // pred_check
          %p287 = pneg %p185
        $region26: #{tpu_custom_call.1} parent=11 // pred_check_branch
          %289 = sbr.rel (%p287) target = $region28
        $region27: #{tpu_custom_call.1} parent=11 // pred_region
          _
        $region28: #{tpu_custom_call.1} parent=11 // pred_fallthru
          _
      $region12: #{tpu_custom_call.1} parent=5 // pred_fallthru
        _
      %p290 = scmp.lt.s32.totalorder %s23, 2
      // Predicated region
      $region29: #{tpu_custom_call.1} parent=5 // pred_check
        %p291 = pneg %p290
      $region30: #{tpu_custom_call.1} parent=5 // pred_check_branch
        %293 = sbr.rel (%p291) target = $region32
      $region31: #{tpu_custom_call.1} parent=5 // pred_region
        // Predicated region
        $region33: #{tpu_custom_call.1} parent=31 // pred_check
          %p294 = pneg %p85
        $region34: #{tpu_custom_call.1} parent=31 // pred_check_branch
          %296 = sbr.rel (%p294) target = $region36
        $region35: #{tpu_custom_call.1} parent=31 // pred_region
          %s297 = sand.u32 %s23, 1
          %s298 = scalar_lea.sflag [#allocation3], %s297
          %s299 = sand.u32 %s75, 1
          %s300 = smul.addr %s299, 1024
          %s301 = scalar_lea.vmem [#allocation7], %s300
          %s303 = ssub.s32 16384, 16384
          %304 = vsyncadd %s298, %s303
          %s305 = smul.addr %s23, 128
          %s306 = smul.addr %s305, 128
          %s307 = scalar_lea.hbm %s2, %s306
          %s308 = sshll.u32 %s301, 4
          %s309 = int_to_ptr.vmem [resolvable:$true] %s308
          %314 = dma.hbm_to_vmem [thread:$0]  %s307, 16384, %s309, %s298, 1024, 1024, 64
        $region36: #{tpu_custom_call.1} parent=31 // pred_fallthru
          _
        // Predicated region
        $region37: #{tpu_custom_call.1} parent=31 // pred_check
          %p315 = pneg %p111
        $region38: #{tpu_custom_call.1} parent=31 // pred_check_branch
          %317 = sbr.rel (%p315) target = $region40
        $region39: #{tpu_custom_call.1} parent=31 // pred_region
          %s318 = sand.u32 %s23, 1
          %s319 = scalar_lea.sflag [#allocation3], %s318
          %s320 = sand.u32 %s101, 1
          %s321 = smul.addr %s320, 1024
          %s322 = scalar_lea.vmem [#allocation8], %s321
          %s324 = ssub.s32 16384, 16384
          %325 = vsyncadd %s319, %s324
          %s326 = smul.addr %s23, 128
          %s327 = smul.addr %s326, 128
          %s328 = scalar_lea.hbm %s3, %s327
          %s329 = sshll.u32 %s322, 4
          %s330 = int_to_ptr.vmem [resolvable:$true] %s329
          %335 = dma.hbm_to_vmem [thread:$0]  %s328, 16384, %s330, %s319, 1024, 1024, 64
        $region40: #{tpu_custom_call.1} parent=31 // pred_fallthru
          _
        // Predicated region
        $region41: #{tpu_custom_call.1} parent=31 // pred_check
          %p336 = pneg %p137
        $region42: #{tpu_custom_call.1} parent=31 // pred_check_branch
          %338 = sbr.rel (%p336) target = $region44
        $region43: #{tpu_custom_call.1} parent=31 // pred_region
          %s339 = sand.u32 %s23, 1
          %s340 = scalar_lea.sflag [#allocation3], %s339
          %s341 = sand.u32 %s127, 1
          %s342 = smul.addr %s341, 16
          %s343 = scalar_lea.vmem [#allocation9], %s342
          %s345 = ssub.s32 256, 256
          %346 = vsyncadd %s340, %s345
          %s347 = smul.addr %s23, 8
          %s348 = smul.addr %s347, 32
          %s349 = scalar_lea.hbm %s4, %s348
          %s351 = sshll.u32 %s343, 4
          %s352 = int_to_ptr.vmem [resolvable:$true] %s351
          %354 = dma.hbm_to_vmem [thread:$0]  %s349, 256, %s352, %s340
        $region44: #{tpu_custom_call.1} parent=31 // pred_fallthru
          _
      $region32: #{tpu_custom_call.1} parent=5 // pred_fallthru
        _
      %p355 = scmp.le.s32.totalorder 1, %s23
      %p356 = scmp.lt.s32.totalorder %s23, 3
      %p357 = pnand %p355, %p356
      %p358 = pneg %p357
      // Predicated region
      $region45: #{tpu_custom_call.1} parent=5 // pred_check
        _
      $region46: #{tpu_custom_call.1} parent=5 // pred_check_branch
        %360 = sbr.rel (%p357) target = $region48
      $region47: #{tpu_custom_call.1} parent=5 // pred_region
        %s361 = ssub.s32 %s23, 1
        // Predicated region
        $region49: #{tpu_custom_call.1} parent=47 // pred_check
          %p362 = pneg %p44
        $region50: #{tpu_custom_call.1} parent=47 // pred_check_branch
          %364 = sbr.rel (%p362) target = $region52
        $region51: #{tpu_custom_call.1} parent=47 // pred_region
          %365 = dma.done [#allocation3], 256
        $region52: #{tpu_custom_call.1} parent=47 // pred_fallthru
          _
        // Predicated region
        $region53: #{tpu_custom_call.1} parent=47 // pred_check
          %p366 = pneg %p65
        $region54: #{tpu_custom_call.1} parent=47 // pred_check_branch
          %368 = sbr.rel (%p366) target = $region56
        $region55: #{tpu_custom_call.1} parent=47 // pred_region
          %369 = dma.done [#allocation6], 256
        $region56: #{tpu_custom_call.1} parent=47 // pred_fallthru
          _
        %s370 = sand.u32 %s28, 1
        %s371 = scalar_lea.sflag [#allocation3], %s370
        %s372 = sand.u32 %s78, 1
        %s373 = smul.addr %s372, 1024
        %s374 = scalar_lea.vmem [#allocation7], %s373
        // Predicated region
        $region57: #{tpu_custom_call.1} parent=47 // pred_check
          %p375 = pneg %p91
        $region58: #{tpu_custom_call.1} parent=47 // pred_check_branch
          %377 = sbr.rel (%p375) target = $region60
        $region59: #{tpu_custom_call.1} parent=47 // pred_region
          %378 = dma.done %s371, 16384
        $region60: #{tpu_custom_call.1} parent=47 // pred_fallthru
          _
        %s379 = sand.u32 %s28, 1
        %s380 = scalar_lea.sflag [#allocation3], %s379
        %s381 = sand.u32 %s104, 1
        %s382 = smul.addr %s381, 1024
        %s383 = scalar_lea.vmem [#allocation8], %s382
        // Predicated region
        $region61: #{tpu_custom_call.1} parent=47 // pred_check
          %p384 = pneg %p117
        $region62: #{tpu_custom_call.1} parent=47 // pred_check_branch
          %386 = sbr.rel (%p384) target = $region64
        $region63: #{tpu_custom_call.1} parent=47 // pred_region
          %387 = dma.done %s380, 16384
        $region64: #{tpu_custom_call.1} parent=47 // pred_fallthru
          _
        %s388 = sand.u32 %s28, 1
        %s389 = scalar_lea.sflag [#allocation3], %s388
        %s390 = sand.u32 %s130, 1
        %s391 = smul.addr %s390, 16
        %s392 = scalar_lea.vmem [#allocation9], %s391
        // Predicated region
        $region65: #{tpu_custom_call.1} parent=47 // pred_check
          %p393 = pneg %p143
        $region66: #{tpu_custom_call.1} parent=47 // pred_check_branch
          %395 = sbr.rel (%p393) target = $region68
        $region67: #{tpu_custom_call.1} parent=47 // pred_region
          %396 = dma.done %s389, 256
        $region68: #{tpu_custom_call.1} parent=47 // pred_fallthru
          _
        // Predicated region
        $region69: #{tpu_custom_call.1} parent=47 // pred_check
          %p397 = pneg %p164
        $region70: #{tpu_custom_call.1} parent=47 // pred_check_branch
          %399 = sbr.rel (%p397) target = $region72
        $region71: #{tpu_custom_call.1} parent=47 // pred_region
          %400 = dma.done [#allocation6], 8192
        $region72: #{tpu_custom_call.1} parent=47 // pred_fallthru
          _
        %p401 = pneg %p44
        %p402 = pneg %p41
        %p403 = pneg %p65
        %p404 = pneg %p62
        %s405 = sand.u32 %s28, 1
        %s406 = scalar_lea.sflag [#allocation3], %s405
        %s407 = sand.u32 %s78, 1
        %s408 = smul.addr %s407, 1024
        %s409 = scalar_lea.vmem [#allocation7], %s408
        %p410 = pneg %p91
        %p411 = pneg %p88
        %s412 = sand.u32 %s28, 1
        %s413 = scalar_lea.sflag [#allocation3], %s412
        %s414 = sand.u32 %s104, 1
        %s415 = smul.addr %s414, 1024
        %s416 = scalar_lea.vmem [#allocation8], %s415
        %p417 = pneg %p117
        %p418 = pneg %p114
        %s419 = sand.u32 %s28, 1
        %s420 = scalar_lea.sflag [#allocation3], %s419
        %s421 = sand.u32 %s130, 1
        %s422 = smul.addr %s421, 16
        %s423 = scalar_lea.vmem [#allocation9], %s422
        %p424 = pneg %p143
        %p425 = pneg %p140
        %p426 = pneg %p164
        %p427 = pneg %p161
        %p428 = pneg %p185
        %p429 = pneg %p182
        %p430 = pneg %p211
        %p431 = pneg %p208
        %s432 = sand.u32 %s198, 1
        %s433 = scalar_lea.sflag [#allocation4], %s432
        %s434 = sand.u32 %s198, 1
        %s435 = smul.addr %s434, 64
        %s436 = scalar_lea.vmem [#allocation11], %s435
        %p437 = pneg %p237
        %p438 = pneg %p234
        %s439 = sand.u32 %s224, 1
        %s440 = scalar_lea.sflag [#allocation13], %s439
        %s441 = sand.u32 %s224, 1
        %s442 = smul.addr %s441, 8
        %s443 = scalar_lea.vmem [#allocation12], %s442
        %v445 = vld [vmem:[%s374] sm:$0xff]
        %v446 = vld [vmem:[%s374 + $0x8] sm:$0xff]
        %v447 = vld [vmem:[%s374 + $0x10] sm:$0xff]
        %v448 = vld [vmem:[%s374 + $0x18] sm:$0xff]
        %v449 = vld [vmem:[%s374 + $0x20] sm:$0xff]
        %v450 = vld [vmem:[%s374 + $0x28] sm:$0xff]
        %v451 = vld [vmem:[%s374 + $0x30] sm:$0xff]
        %v452 = vld [vmem:[%s374 + $0x38] sm:$0xff]
        %v453 = vld [vmem:[%s374 + $0x40] sm:$0xff]
        %v454 = vld [vmem:[%s374 + $0x48] sm:$0xff]
        %v455 = vld [vmem:[%s374 + $0x50] sm:$0xff]
        %v456 = vld [vmem:[%s374 + $0x58] sm:$0xff]
        %v457 = vld [vmem:[%s374 + $0x60] sm:$0xff]
        %v458 = vld [vmem:[%s374 + $0x68] sm:$0xff]
        %v459 = vld [vmem:[%s374 + $0x70] sm:$0xff]
        %v460 = vld [vmem:[%s374 + $0x78] sm:$0xff]
        %v461 = vld [vmem:[%s374 + $0x80] sm:$0xff]
        %v462 = vld [vmem:[%s374 + $0x88] sm:$0xff]
        %v463 = vld [vmem:[%s374 + $0x90] sm:$0xff]
        %v464 = vld [vmem:[%s374 + $0x98] sm:$0xff]
        %v465 = vld [vmem:[%s374 + $0xa0] sm:$0xff]
        %v466 = vld [vmem:[%s374 + $0xa8] sm:$0xff]
        %v467 = vld [vmem:[%s374 + $0xb0] sm:$0xff]
        %v468 = vld [vmem:[%s374 + $0xb8] sm:$0xff]
        %v469 = vld [vmem:[%s374 + $0xc0] sm:$0xff]
        %v470 = vld [vmem:[%s374 + $0xc8] sm:$0xff]
        %v471 = vld [vmem:[%s374 + $0xd0] sm:$0xff]
        %v472 = vld [vmem:[%s374 + $0xd8] sm:$0xff]
        %v473 = vld [vmem:[%s374 + $0xe0] sm:$0xff]
        %v474 = vld [vmem:[%s374 + $0xe8] sm:$0xff]
        %v475 = vld [vmem:[%s374 + $0xf0] sm:$0xff]
        %v476 = vld [vmem:[%s374 + $0xf8] sm:$0xff]
        %v477 = vld [vmem:[%s374 + $0x100] sm:$0xff]
        %v478 = vld [vmem:[%s374 + $0x108] sm:$0xff]
        %v479 = vld [vmem:[%s374 + $0x110] sm:$0xff]
        %v480 = vld [vmem:[%s374 + $0x118] sm:$0xff]
        %v481 = vld [vmem:[%s374 + $0x120] sm:$0xff]
        %v482 = vld [vmem:[%s374 + $0x128] sm:$0xff]
        %v483 = vld [vmem:[%s374 + $0x130] sm:$0xff]
        %v484 = vld [vmem:[%s374 + $0x138] sm:$0xff]
        %v485 = vld [vmem:[%s374 + $0x140] sm:$0xff]
        %v486 = vld [vmem:[%s374 + $0x148] sm:$0xff]
        %v487 = vld [vmem:[%s374 + $0x150] sm:$0xff]
        %v488 = vld [vmem:[%s374 + $0x158] sm:$0xff]
        %v489 = vld [vmem:[%s374 + $0x160] sm:$0xff]
        %v490 = vld [vmem:[%s374 + $0x168] sm:$0xff]
        %v491 = vld [vmem:[%s374 + $0x170] sm:$0xff]
        %v492 = vld [vmem:[%s374 + $0x178] sm:$0xff]
        %v493 = vld [vmem:[%s374 + $0x180] sm:$0xff]
        %v494 = vld [vmem:[%s374 + $0x188] sm:$0xff]
        %v495 = vld [vmem:[%s374 + $0x190] sm:$0xff]
        %v496 = vld [vmem:[%s374 + $0x198] sm:$0xff]
        %v497 = vld [vmem:[%s374 + $0x1a0] sm:$0xff]
        %v498 = vld [vmem:[%s374 + $0x1a8] sm:$0xff]
        %v499 = vld [vmem:[%s374 + $0x1b0] sm:$0xff]
        %v500 = vld [vmem:[%s374 + $0x1b8] sm:$0xff]
        %v501 = vld [vmem:[%s374 + $0x1c0] sm:$0xff]
        %v502 = vld [vmem:[%s374 + $0x1c8] sm:$0xff]
        %v503 = vld [vmem:[%s374 + $0x1d0] sm:$0xff]
        %v504 = vld [vmem:[%s374 + $0x1d8] sm:$0xff]
        %v505 = vld [vmem:[%s374 + $0x1e0] sm:$0xff]
        %v506 = vld [vmem:[%s374 + $0x1e8] sm:$0xff]
        %v507 = vld [vmem:[%s374 + $0x1f0] sm:$0xff]
        %v508 = vld [vmem:[%s374 + $0x1f8] sm:$0xff]
        %v509 = vld [vmem:[%s374 + $0x200] sm:$0xff]
        %v510 = vld [vmem:[%s374 + $0x208] sm:$0xff]
        %v511 = vld [vmem:[%s374 + $0x210] sm:$0xff]
        %v512 = vld [vmem:[%s374 + $0x218] sm:$0xff]
        %v513 = vld [vmem:[%s374 + $0x220] sm:$0xff]
        %v514 = vld [vmem:[%s374 + $0x228] sm:$0xff]
        %v515 = vld [vmem:[%s374 + $0x230] sm:$0xff]
        %v516 = vld [vmem:[%s374 + $0x238] sm:$0xff]
        %v517 = vld [vmem:[%s374 + $0x240] sm:$0xff]
        %v518 = vld [vmem:[%s374 + $0x248] sm:$0xff]
        %v519 = vld [vmem:[%s374 + $0x250] sm:$0xff]
        %v520 = vld [vmem:[%s374 + $0x258] sm:$0xff]
        %v521 = vld [vmem:[%s374 + $0x260] sm:$0xff]
        %v522 = vld [vmem:[%s374 + $0x268] sm:$0xff]
        %v523 = vld [vmem:[%s374 + $0x270] sm:$0xff]
        %v524 = vld [vmem:[%s374 + $0x278] sm:$0xff]
        %v525 = vld [vmem:[%s374 + $0x280] sm:$0xff]
        %v526 = vld [vmem:[%s374 + $0x288] sm:$0xff]
        %v527 = vld [vmem:[%s374 + $0x290] sm:$0xff]
        %v528 = vld [vmem:[%s374 + $0x298] sm:$0xff]
        %v529 = vld [vmem:[%s374 + $0x2a0] sm:$0xff]
        %v530 = vld [vmem:[%s374 + $0x2a8] sm:$0xff]
        %v531 = vld [vmem:[%s374 + $0x2b0] sm:$0xff]
        %v532 = vld [vmem:[%s374 + $0x2b8] sm:$0xff]
        %v533 = vld [vmem:[%s374 + $0x2c0] sm:$0xff]
        %v534 = vld [vmem:[%s374 + $0x2c8] sm:$0xff]
        %v535 = vld [vmem:[%s374 + $0x2d0] sm:$0xff]
        %v536 = vld [vmem:[%s374 + $0x2d8] sm:$0xff]
        %v537 = vld [vmem:[%s374 + $0x2e0] sm:$0xff]
        %v538 = vld [vmem:[%s374 + $0x2e8] sm:$0xff]
        %v539 = vld [vmem:[%s374 + $0x2f0] sm:$0xff]
        %v540 = vld [vmem:[%s374 + $0x2f8] sm:$0xff]
        %v541 = vld [vmem:[%s374 + $0x300] sm:$0xff]
        %v542 = vld [vmem:[%s374 + $0x308] sm:$0xff]
        %v543 = vld [vmem:[%s374 + $0x310] sm:$0xff]
        %v544 = vld [vmem:[%s374 + $0x318] sm:$0xff]
        %v545 = vld [vmem:[%s374 + $0x320] sm:$0xff]
        %v546 = vld [vmem:[%s374 + $0x328] sm:$0xff]
        %v547 = vld [vmem:[%s374 + $0x330] sm:$0xff]
        %v548 = vld [vmem:[%s374 + $0x338] sm:$0xff]
        %v549 = vld [vmem:[%s374 + $0x340] sm:$0xff]
        %v550 = vld [vmem:[%s374 + $0x348] sm:$0xff]
        %v551 = vld [vmem:[%s374 + $0x350] sm:$0xff]
        %v552 = vld [vmem:[%s374 + $0x358] sm:$0xff]
        %v553 = vld [vmem:[%s374 + $0x360] sm:$0xff]
        %v554 = vld [vmem:[%s374 + $0x368] sm:$0xff]
        %v555 = vld [vmem:[%s374 + $0x370] sm:$0xff]
        %v556 = vld [vmem:[%s374 + $0x378] sm:$0xff]
        %v557 = vld [vmem:[%s374 + $0x380] sm:$0xff]
        %v558 = vld [vmem:[%s374 + $0x388] sm:$0xff]
        %v559 = vld [vmem:[%s374 + $0x390] sm:$0xff]
        %v560 = vld [vmem:[%s374 + $0x398] sm:$0xff]
        %v561 = vld [vmem:[%s374 + $0x3a0] sm:$0xff]
        %v562 = vld [vmem:[%s374 + $0x3a8] sm:$0xff]
        %v563 = vld [vmem:[%s374 + $0x3b0] sm:$0xff]
        %v564 = vld [vmem:[%s374 + $0x3b8] sm:$0xff]
        %v565 = vld [vmem:[%s374 + $0x3c0] sm:$0xff]
        %v566 = vld [vmem:[%s374 + $0x3c8] sm:$0xff]
        %v567 = vld [vmem:[%s374 + $0x3d0] sm:$0xff]
        %v568 = vld [vmem:[%s374 + $0x3d8] sm:$0xff]
        %v569 = vld [vmem:[%s374 + $0x3e0] sm:$0xff]
        %v570 = vld [vmem:[%s374 + $0x3e8] sm:$0xff]
        %v571 = vld [vmem:[%s374 + $0x3f0] sm:$0xff]
        %v572 = vld [vmem:[%s374 + $0x3f8] sm:$0xff]
        %v573 = vunpack.c.l.s8.bf16 %v445
        %v574 = vunpack.c.l.s8.bf16 %v446
        %v575 = vunpack.c.l.s8.bf16 %v447
        %v576 = vunpack.c.l.s8.bf16 %v448
        %v577 = vunpack.c.l.s8.bf16 %v449
        %v578 = vunpack.c.l.s8.bf16 %v450
        %v579 = vunpack.c.l.s8.bf16 %v451
        %v580 = vunpack.c.l.s8.bf16 %v452
        %v581 = vunpack.c.h.s8.bf16 %v445
        %v582 = vunpack.c.h.s8.bf16 %v446
        %v583 = vunpack.c.h.s8.bf16 %v447
        %v584 = vunpack.c.h.s8.bf16 %v448
        %v585 = vunpack.c.h.s8.bf16 %v449
        %v586 = vunpack.c.h.s8.bf16 %v450
        %v587 = vunpack.c.h.s8.bf16 %v451
        %v588 = vunpack.c.h.s8.bf16 %v452
        %v589 = vunpack.c.l.s8.bf16 %v453
        %v590 = vunpack.c.l.s8.bf16 %v454
        %v591 = vunpack.c.l.s8.bf16 %v455
        %v592 = vunpack.c.l.s8.bf16 %v456
        %v593 = vunpack.c.l.s8.bf16 %v457
        %v594 = vunpack.c.l.s8.bf16 %v458
        %v595 = vunpack.c.l.s8.bf16 %v459
        %v596 = vunpack.c.l.s8.bf16 %v460
        %v597 = vunpack.c.h.s8.bf16 %v453
        %v598 = vunpack.c.h.s8.bf16 %v454
        %v599 = vunpack.c.h.s8.bf16 %v455
        %v600 = vunpack.c.h.s8.bf16 %v456
        %v601 = vunpack.c.h.s8.bf16 %v457
        %v602 = vunpack.c.h.s8.bf16 %v458
        %v603 = vunpack.c.h.s8.bf16 %v459
        %v604 = vunpack.c.h.s8.bf16 %v460
        %v605 = vunpack.c.l.s8.bf16 %v461
        %v606 = vunpack.c.l.s8.bf16 %v462
        %v607 = vunpack.c.l.s8.bf16 %v463
        %v608 = vunpack.c.l.s8.bf16 %v464
        %v609 = vunpack.c.l.s8.bf16 %v465
        %v610 = vunpack.c.l.s8.bf16 %v466
        %v611 = vunpack.c.l.s8.bf16 %v467
        %v612 = vunpack.c.l.s8.bf16 %v468
        %v613 = vunpack.c.h.s8.bf16 %v461
        %v614 = vunpack.c.h.s8.bf16 %v462
        %v615 = vunpack.c.h.s8.bf16 %v463
        %v616 = vunpack.c.h.s8.bf16 %v464
        %v617 = vunpack.c.h.s8.bf16 %v465
        %v618 = vunpack.c.h.s8.bf16 %v466
        %v619 = vunpack.c.h.s8.bf16 %v467
        %v620 = vunpack.c.h.s8.bf16 %v468
        %v621 = vunpack.c.l.s8.bf16 %v469
        %v622 = vunpack.c.l.s8.bf16 %v470
        %v623 = vunpack.c.l.s8.bf16 %v471
        %v624 = vunpack.c.l.s8.bf16 %v472
        %v625 = vunpack.c.l.s8.bf16 %v473
        %v626 = vunpack.c.l.s8.bf16 %v474
        %v627 = vunpack.c.l.s8.bf16 %v475
        %v628 = vunpack.c.l.s8.bf16 %v476
        %v629 = vunpack.c.h.s8.bf16 %v469
        %v630 = vunpack.c.h.s8.bf16 %v470
        %v631 = vunpack.c.h.s8.bf16 %v471
        %v632 = vunpack.c.h.s8.bf16 %v472
        %v633 = vunpack.c.h.s8.bf16 %v473
        %v634 = vunpack.c.h.s8.bf16 %v474
        %v635 = vunpack.c.h.s8.bf16 %v475
        %v636 = vunpack.c.h.s8.bf16 %v476
        %v637 = vunpack.c.l.s8.bf16 %v477
        %v638 = vunpack.c.l.s8.bf16 %v478
        %v639 = vunpack.c.l.s8.bf16 %v479
        %v640 = vunpack.c.l.s8.bf16 %v480
        %v641 = vunpack.c.l.s8.bf16 %v481
        %v642 = vunpack.c.l.s8.bf16 %v482
        %v643 = vunpack.c.l.s8.bf16 %v483
        %v644 = vunpack.c.l.s8.bf16 %v484
        %v645 = vunpack.c.h.s8.bf16 %v477
        %v646 = vunpack.c.h.s8.bf16 %v478
        %v647 = vunpack.c.h.s8.bf16 %v479
        %v648 = vunpack.c.h.s8.bf16 %v480
        %v649 = vunpack.c.h.s8.bf16 %v481
        %v650 = vunpack.c.h.s8.bf16 %v482
        %v651 = vunpack.c.h.s8.bf16 %v483
        %v652 = vunpack.c.h.s8.bf16 %v484
        %v653 = vunpack.c.l.s8.bf16 %v485
        %v654 = vunpack.c.l.s8.bf16 %v486
        %v655 = vunpack.c.l.s8.bf16 %v487
        %v656 = vunpack.c.l.s8.bf16 %v488
        %v657 = vunpack.c.l.s8.bf16 %v489
        %v658 = vunpack.c.l.s8.bf16 %v490
        %v659 = vunpack.c.l.s8.bf16 %v491
        %v660 = vunpack.c.l.s8.bf16 %v492
        %v661 = vunpack.c.h.s8.bf16 %v485
        %v662 = vunpack.c.h.s8.bf16 %v486
        %v663 = vunpack.c.h.s8.bf16 %v487
        %v664 = vunpack.c.h.s8.bf16 %v488
        %v665 = vunpack.c.h.s8.bf16 %v489
        %v666 = vunpack.c.h.s8.bf16 %v490
        %v667 = vunpack.c.h.s8.bf16 %v491
        %v668 = vunpack.c.h.s8.bf16 %v492
        %v669 = vunpack.c.l.s8.bf16 %v493
        %v670 = vunpack.c.l.s8.bf16 %v494
        %v671 = vunpack.c.l.s8.bf16 %v495
        %v672 = vunpack.c.l.s8.bf16 %v496
        %v673 = vunpack.c.l.s8.bf16 %v497
        %v674 = vunpack.c.l.s8.bf16 %v498
        %v675 = vunpack.c.l.s8.bf16 %v499
        %v676 = vunpack.c.l.s8.bf16 %v500
        %v677 = vunpack.c.h.s8.bf16 %v493
        %v678 = vunpack.c.h.s8.bf16 %v494
        %v679 = vunpack.c.h.s8.bf16 %v495
        %v680 = vunpack.c.h.s8.bf16 %v496
        %v681 = vunpack.c.h.s8.bf16 %v497
        %v682 = vunpack.c.h.s8.bf16 %v498
        %v683 = vunpack.c.h.s8.bf16 %v499
        %v684 = vunpack.c.h.s8.bf16 %v500
        %v685 = vunpack.c.l.s8.bf16 %v501
        %v686 = vunpack.c.l.s8.bf16 %v502
        %v687 = vunpack.c.l.s8.bf16 %v503
        %v688 = vunpack.c.l.s8.bf16 %v504
        %v689 = vunpack.c.l.s8.bf16 %v505
        %v690 = vunpack.c.l.s8.bf16 %v506
        %v691 = vunpack.c.l.s8.bf16 %v507
        %v692 = vunpack.c.l.s8.bf16 %v508
        %v693 = vunpack.c.h.s8.bf16 %v501
        %v694 = vunpack.c.h.s8.bf16 %v502
        %v695 = vunpack.c.h.s8.bf16 %v503
        %v696 = vunpack.c.h.s8.bf16 %v504
        %v697 = vunpack.c.h.s8.bf16 %v505
        %v698 = vunpack.c.h.s8.bf16 %v506
        %v699 = vunpack.c.h.s8.bf16 %v507
        %v700 = vunpack.c.h.s8.bf16 %v508
        %v701 = vunpack.c.l.s8.bf16 %v509
        %v702 = vunpack.c.l.s8.bf16 %v510
        %v703 = vunpack.c.l.s8.bf16 %v511
        %v704 = vunpack.c.l.s8.bf16 %v512
        %v705 = vunpack.c.l.s8.bf16 %v513
        %v706 = vunpack.c.l.s8.bf16 %v514
        %v707 = vunpack.c.l.s8.bf16 %v515
        %v708 = vunpack.c.l.s8.bf16 %v516
        %v709 = vunpack.c.h.s8.bf16 %v509
        %v710 = vunpack.c.h.s8.bf16 %v510
        %v711 = vunpack.c.h.s8.bf16 %v511
        %v712 = vunpack.c.h.s8.bf16 %v512
        %v713 = vunpack.c.h.s8.bf16 %v513
        %v714 = vunpack.c.h.s8.bf16 %v514
        %v715 = vunpack.c.h.s8.bf16 %v515
        %v716 = vunpack.c.h.s8.bf16 %v516
        %v717 = vunpack.c.l.s8.bf16 %v517
        %v718 = vunpack.c.l.s8.bf16 %v518
        %v719 = vunpack.c.l.s8.bf16 %v519
        %v720 = vunpack.c.l.s8.bf16 %v520
        %v721 = vunpack.c.l.s8.bf16 %v521
        %v722 = vunpack.c.l.s8.bf16 %v522
        %v723 = vunpack.c.l.s8.bf16 %v523
        %v724 = vunpack.c.l.s8.bf16 %v524
        %v725 = vunpack.c.h.s8.bf16 %v517
        %v726 = vunpack.c.h.s8.bf16 %v518
        %v727 = vunpack.c.h.s8.bf16 %v519
        %v728 = vunpack.c.h.s8.bf16 %v520
        %v729 = vunpack.c.h.s8.bf16 %v521
        %v730 = vunpack.c.h.s8.bf16 %v522
        %v731 = vunpack.c.h.s8.bf16 %v523
        %v732 = vunpack.c.h.s8.bf16 %v524
        %v733 = vunpack.c.l.s8.bf16 %v525
        %v734 = vunpack.c.l.s8.bf16 %v526
        %v735 = vunpack.c.l.s8.bf16 %v527
        %v736 = vunpack.c.l.s8.bf16 %v528
        %v737 = vunpack.c.l.s8.bf16 %v529
        %v738 = vunpack.c.l.s8.bf16 %v530
        %v739 = vunpack.c.l.s8.bf16 %v531
        %v740 = vunpack.c.l.s8.bf16 %v532
        %v741 = vunpack.c.h.s8.bf16 %v525
        %v742 = vunpack.c.h.s8.bf16 %v526
        %v743 = vunpack.c.h.s8.bf16 %v527
        %v744 = vunpack.c.h.s8.bf16 %v528
        %v745 = vunpack.c.h.s8.bf16 %v529
        %v746 = vunpack.c.h.s8.bf16 %v530
        %v747 = vunpack.c.h.s8.bf16 %v531
        %v748 = vunpack.c.h.s8.bf16 %v532
        %v749 = vunpack.c.l.s8.bf16 %v533
        %v750 = vunpack.c.l.s8.bf16 %v534
        %v751 = vunpack.c.l.s8.bf16 %v535
        %v752 = vunpack.c.l.s8.bf16 %v536
        %v753 = vunpack.c.l.s8.bf16 %v537
        %v754 = vunpack.c.l.s8.bf16 %v538
        %v755 = vunpack.c.l.s8.bf16 %v539
        %v756 = vunpack.c.l.s8.bf16 %v540
        %v757 = vunpack.c.h.s8.bf16 %v533
        %v758 = vunpack.c.h.s8.bf16 %v534
        %v759 = vunpack.c.h.s8.bf16 %v535
        %v760 = vunpack.c.h.s8.bf16 %v536
        %v761 = vunpack.c.h.s8.bf16 %v537
        %v762 = vunpack.c.h.s8.bf16 %v538
        %v763 = vunpack.c.h.s8.bf16 %v539
        %v764 = vunpack.c.h.s8.bf16 %v540
        %v765 = vunpack.c.l.s8.bf16 %v541
        %v766 = vunpack.c.l.s8.bf16 %v542
        %v767 = vunpack.c.l.s8.bf16 %v543
        %v768 = vunpack.c.l.s8.bf16 %v544
        %v769 = vunpack.c.l.s8.bf16 %v545
        %v770 = vunpack.c.l.s8.bf16 %v546
        %v771 = vunpack.c.l.s8.bf16 %v547
        %v772 = vunpack.c.l.s8.bf16 %v548
        %v773 = vunpack.c.h.s8.bf16 %v541
        %v774 = vunpack.c.h.s8.bf16 %v542
        %v775 = vunpack.c.h.s8.bf16 %v543
        %v776 = vunpack.c.h.s8.bf16 %v544
        %v777 = vunpack.c.h.s8.bf16 %v545
        %v778 = vunpack.c.h.s8.bf16 %v546
        %v779 = vunpack.c.h.s8.bf16 %v547
        %v780 = vunpack.c.h.s8.bf16 %v548
        %v781 = vunpack.c.l.s8.bf16 %v549
        %v782 = vunpack.c.l.s8.bf16 %v550
        %v783 = vunpack.c.l.s8.bf16 %v551
        %v784 = vunpack.c.l.s8.bf16 %v552
        %v785 = vunpack.c.l.s8.bf16 %v553
        %v786 = vunpack.c.l.s8.bf16 %v554
        %v787 = vunpack.c.l.s8.bf16 %v555
        %v788 = vunpack.c.l.s8.bf16 %v556
        %v789 = vunpack.c.h.s8.bf16 %v549
        %v790 = vunpack.c.h.s8.bf16 %v550
        %v791 = vunpack.c.h.s8.bf16 %v551
        %v792 = vunpack.c.h.s8.bf16 %v552
        %v793 = vunpack.c.h.s8.bf16 %v553
        %v794 = vunpack.c.h.s8.bf16 %v554
        %v795 = vunpack.c.h.s8.bf16 %v555
        %v796 = vunpack.c.h.s8.bf16 %v556
        %v797 = vunpack.c.l.s8.bf16 %v557
        %v798 = vunpack.c.l.s8.bf16 %v558
        %v799 = vunpack.c.l.s8.bf16 %v559
        %v800 = vunpack.c.l.s8.bf16 %v560
        %v801 = vunpack.c.l.s8.bf16 %v561
        %v802 = vunpack.c.l.s8.bf16 %v562
        %v803 = vunpack.c.l.s8.bf16 %v563
        %v804 = vunpack.c.l.s8.bf16 %v564
        %v805 = vunpack.c.h.s8.bf16 %v557
        %v806 = vunpack.c.h.s8.bf16 %v558
        %v807 = vunpack.c.h.s8.bf16 %v559
        %v808 = vunpack.c.h.s8.bf16 %v560
        %v809 = vunpack.c.h.s8.bf16 %v561
        %v810 = vunpack.c.h.s8.bf16 %v562
        %v811 = vunpack.c.h.s8.bf16 %v563
        %v812 = vunpack.c.h.s8.bf16 %v564
        %v813 = vunpack.c.l.s8.bf16 %v565
        %v814 = vunpack.c.l.s8.bf16 %v566
        %v815 = vunpack.c.l.s8.bf16 %v567
        %v816 = vunpack.c.l.s8.bf16 %v568
        %v817 = vunpack.c.l.s8.bf16 %v569
        %v818 = vunpack.c.l.s8.bf16 %v570
        %v819 = vunpack.c.l.s8.bf16 %v571
        %v820 = vunpack.c.l.s8.bf16 %v572
        %v821 = vunpack.c.h.s8.bf16 %v565
        %v822 = vunpack.c.h.s8.bf16 %v566
        %v823 = vunpack.c.h.s8.bf16 %v567
        %v824 = vunpack.c.h.s8.bf16 %v568
        %v825 = vunpack.c.h.s8.bf16 %v569
        %v826 = vunpack.c.h.s8.bf16 %v570
        %v827 = vunpack.c.h.s8.bf16 %v571
        %v828 = vunpack.c.h.s8.bf16 %v572
        %v829 = vld [vmem:[%s383] sm:$0xff]
        %v830 = vld [vmem:[%s383 + $0x8] sm:$0xff]
        %v831 = vld [vmem:[%s383 + $0x10] sm:$0xff]
        %v832 = vld [vmem:[%s383 + $0x18] sm:$0xff]
        %v833 = vld [vmem:[%s383 + $0x20] sm:$0xff]
        %v834 = vld [vmem:[%s383 + $0x28] sm:$0xff]
        %v835 = vld [vmem:[%s383 + $0x30] sm:$0xff]
        %v836 = vld [vmem:[%s383 + $0x38] sm:$0xff]
        %v837 = vld [vmem:[%s383 + $0x40] sm:$0xff]
        %v838 = vld [vmem:[%s383 + $0x48] sm:$0xff]
        %v839 = vld [vmem:[%s383 + $0x50] sm:$0xff]
        %v840 = vld [vmem:[%s383 + $0x58] sm:$0xff]
        %v841 = vld [vmem:[%s383 + $0x60] sm:$0xff]
        %v842 = vld [vmem:[%s383 + $0x68] sm:$0xff]
        %v843 = vld [vmem:[%s383 + $0x70] sm:$0xff]
        %v844 = vld [vmem:[%s383 + $0x78] sm:$0xff]
        %v845 = vld [vmem:[%s383 + $0x80] sm:$0xff]
        %v846 = vld [vmem:[%s383 + $0x88] sm:$0xff]
        %v847 = vld [vmem:[%s383 + $0x90] sm:$0xff]
        %v848 = vld [vmem:[%s383 + $0x98] sm:$0xff]
        %v849 = vld [vmem:[%s383 + $0xa0] sm:$0xff]
        %v850 = vld [vmem:[%s383 + $0xa8] sm:$0xff]
        %v851 = vld [vmem:[%s383 + $0xb0] sm:$0xff]
        %v852 = vld [vmem:[%s383 + $0xb8] sm:$0xff]
        %v853 = vld [vmem:[%s383 + $0xc0] sm:$0xff]
        %v854 = vld [vmem:[%s383 + $0xc8] sm:$0xff]
        %v855 = vld [vmem:[%s383 + $0xd0] sm:$0xff]
        %v856 = vld [vmem:[%s383 + $0xd8] sm:$0xff]
        %v857 = vld [vmem:[%s383 + $0xe0] sm:$0xff]
        %v858 = vld [vmem:[%s383 + $0xe8] sm:$0xff]
        %v859 = vld [vmem:[%s383 + $0xf0] sm:$0xff]
        %v860 = vld [vmem:[%s383 + $0xf8] sm:$0xff]
        %v861 = vld [vmem:[%s383 + $0x100] sm:$0xff]
        %v862 = vld [vmem:[%s383 + $0x108] sm:$0xff]
        %v863 = vld [vmem:[%s383 + $0x110] sm:$0xff]
        %v864 = vld [vmem:[%s383 + $0x118] sm:$0xff]
        %v865 = vld [vmem:[%s383 + $0x120] sm:$0xff]
        %v866 = vld [vmem:[%s383 + $0x128] sm:$0xff]
        %v867 = vld [vmem:[%s383 + $0x130] sm:$0xff]
        %v868 = vld [vmem:[%s383 + $0x138] sm:$0xff]
        %v869 = vld [vmem:[%s383 + $0x140] sm:$0xff]
        %v870 = vld [vmem:[%s383 + $0x148] sm:$0xff]
        %v871 = vld [vmem:[%s383 + $0x150] sm:$0xff]
        %v872 = vld [vmem:[%s383 + $0x158] sm:$0xff]
        %v873 = vld [vmem:[%s383 + $0x160] sm:$0xff]
        %v874 = vld [vmem:[%s383 + $0x168] sm:$0xff]
        %v875 = vld [vmem:[%s383 + $0x170] sm:$0xff]
        %v876 = vld [vmem:[%s383 + $0x178] sm:$0xff]
        %v877 = vld [vmem:[%s383 + $0x180] sm:$0xff]
        %v878 = vld [vmem:[%s383 + $0x188] sm:$0xff]
        %v879 = vld [vmem:[%s383 + $0x190] sm:$0xff]
        %v880 = vld [vmem:[%s383 + $0x198] sm:$0xff]
        %v881 = vld [vmem:[%s383 + $0x1a0] sm:$0xff]
        %v882 = vld [vmem:[%s383 + $0x1a8] sm:$0xff]
        %v883 = vld [vmem:[%s383 + $0x1b0] sm:$0xff]
        %v884 = vld [vmem:[%s383 + $0x1b8] sm:$0xff]
        %v885 = vld [vmem:[%s383 + $0x1c0] sm:$0xff]
        %v886 = vld [vmem:[%s383 + $0x1c8] sm:$0xff]
        %v887 = vld [vmem:[%s383 + $0x1d0] sm:$0xff]
        %v888 = vld [vmem:[%s383 + $0x1d8] sm:$0xff]
        %v889 = vld [vmem:[%s383 + $0x1e0] sm:$0xff]
        %v890 = vld [vmem:[%s383 + $0x1e8] sm:$0xff]
        %v891 = vld [vmem:[%s383 + $0x1f0] sm:$0xff]
        %v892 = vld [vmem:[%s383 + $0x1f8] sm:$0xff]
        %v893 = vld [vmem:[%s383 + $0x200] sm:$0xff]
        %v894 = vld [vmem:[%s383 + $0x208] sm:$0xff]
        %v895 = vld [vmem:[%s383 + $0x210] sm:$0xff]
        %v896 = vld [vmem:[%s383 + $0x218] sm:$0xff]
        %v897 = vld [vmem:[%s383 + $0x220] sm:$0xff]
        %v898 = vld [vmem:[%s383 + $0x228] sm:$0xff]
        %v899 = vld [vmem:[%s383 + $0x230] sm:$0xff]
        %v900 = vld [vmem:[%s383 + $0x238] sm:$0xff]
        %v901 = vld [vmem:[%s383 + $0x240] sm:$0xff]
        %v902 = vld [vmem:[%s383 + $0x248] sm:$0xff]
        %v903 = vld [vmem:[%s383 + $0x250] sm:$0xff]
        %v904 = vld [vmem:[%s383 + $0x258] sm:$0xff]
        %v905 = vld [vmem:[%s383 + $0x260] sm:$0xff]
        %v906 = vld [vmem:[%s383 + $0x268] sm:$0xff]
        %v907 = vld [vmem:[%s383 + $0x270] sm:$0xff]
        %v908 = vld [vmem:[%s383 + $0x278] sm:$0xff]
        %v909 = vld [vmem:[%s383 + $0x280] sm:$0xff]
        %v910 = vld [vmem:[%s383 + $0x288] sm:$0xff]
        %v911 = vld [vmem:[%s383 + $0x290] sm:$0xff]
        %v912 = vld [vmem:[%s383 + $0x298] sm:$0xff]
        %v913 = vld [vmem:[%s383 + $0x2a0] sm:$0xff]
        %v914 = vld [vmem:[%s383 + $0x2a8] sm:$0xff]
        %v915 = vld [vmem:[%s383 + $0x2b0] sm:$0xff]
        %v916 = vld [vmem:[%s383 + $0x2b8] sm:$0xff]
        %v917 = vld [vmem:[%s383 + $0x2c0] sm:$0xff]
        %v918 = vld [vmem:[%s383 + $0x2c8] sm:$0xff]
        %v919 = vld [vmem:[%s383 + $0x2d0] sm:$0xff]
        %v920 = vld [vmem:[%s383 + $0x2d8] sm:$0xff]
        %v921 = vld [vmem:[%s383 + $0x2e0] sm:$0xff]
        %v922 = vld [vmem:[%s383 + $0x2e8] sm:$0xff]
        %v923 = vld [vmem:[%s383 + $0x2f0] sm:$0xff]
        %v924 = vld [vmem:[%s383 + $0x2f8] sm:$0xff]
        %v925 = vld [vmem:[%s383 + $0x300] sm:$0xff]
        %v926 = vld [vmem:[%s383 + $0x308] sm:$0xff]
        %v927 = vld [vmem:[%s383 + $0x310] sm:$0xff]
        %v928 = vld [vmem:[%s383 + $0x318] sm:$0xff]
        %v929 = vld [vmem:[%s383 + $0x320] sm:$0xff]
        %v930 = vld [vmem:[%s383 + $0x328] sm:$0xff]
        %v931 = vld [vmem:[%s383 + $0x330] sm:$0xff]
        %v932 = vld [vmem:[%s383 + $0x338] sm:$0xff]
        %v933 = vld [vmem:[%s383 + $0x340] sm:$0xff]
        %v934 = vld [vmem:[%s383 + $0x348] sm:$0xff]
        %v935 = vld [vmem:[%s383 + $0x350] sm:$0xff]
        %v936 = vld [vmem:[%s383 + $0x358] sm:$0xff]
        %v937 = vld [vmem:[%s383 + $0x360] sm:$0xff]
        %v938 = vld [vmem:[%s383 + $0x368] sm:$0xff]
        %v939 = vld [vmem:[%s383 + $0x370] sm:$0xff]
        %v940 = vld [vmem:[%s383 + $0x378] sm:$0xff]
        %v941 = vld [vmem:[%s383 + $0x380] sm:$0xff]
        %v942 = vld [vmem:[%s383 + $0x388] sm:$0xff]
        %v943 = vld [vmem:[%s383 + $0x390] sm:$0xff]
        %v944 = vld [vmem:[%s383 + $0x398] sm:$0xff]
        %v945 = vld [vmem:[%s383 + $0x3a0] sm:$0xff]
        %v946 = vld [vmem:[%s383 + $0x3a8] sm:$0xff]
        %v947 = vld [vmem:[%s383 + $0x3b0] sm:$0xff]
        %v948 = vld [vmem:[%s383 + $0x3b8] sm:$0xff]
        %v949 = vld [vmem:[%s383 + $0x3c0] sm:$0xff]
        %v950 = vld [vmem:[%s383 + $0x3c8] sm:$0xff]
        %v951 = vld [vmem:[%s383 + $0x3d0] sm:$0xff]
        %v952 = vld [vmem:[%s383 + $0x3d8] sm:$0xff]
        %v953 = vld [vmem:[%s383 + $0x3e0] sm:$0xff]
        %v954 = vld [vmem:[%s383 + $0x3e8] sm:$0xff]
        %v955 = vld [vmem:[%s383 + $0x3f0] sm:$0xff]
        %v956 = vld [vmem:[%s383 + $0x3f8] sm:$0xff]
        %v957 = vunpack.c.l.s8.bf16 %v829
        %v958 = vunpack.c.l.s8.bf16 %v830
        %v959 = vunpack.c.l.s8.bf16 %v831
        %v960 = vunpack.c.l.s8.bf16 %v832
        %v961 = vunpack.c.l.s8.bf16 %v833
        %v962 = vunpack.c.l.s8.bf16 %v834
        %v963 = vunpack.c.l.s8.bf16 %v835
        %v964 = vunpack.c.l.s8.bf16 %v836
        %v965 = vunpack.c.h.s8.bf16 %v829
        %v966 = vunpack.c.h.s8.bf16 %v830
        %v967 = vunpack.c.h.s8.bf16 %v831
        %v968 = vunpack.c.h.s8.bf16 %v832
        %v969 = vunpack.c.h.s8.bf16 %v833
        %v970 = vunpack.c.h.s8.bf16 %v834
        %v971 = vunpack.c.h.s8.bf16 %v835
        %v972 = vunpack.c.h.s8.bf16 %v836
        %v973 = vunpack.c.l.s8.bf16 %v837
        %v974 = vunpack.c.l.s8.bf16 %v838
        %v975 = vunpack.c.l.s8.bf16 %v839
        %v976 = vunpack.c.l.s8.bf16 %v840
        %v977 = vunpack.c.l.s8.bf16 %v841
        %v978 = vunpack.c.l.s8.bf16 %v842
        %v979 = vunpack.c.l.s8.bf16 %v843
        %v980 = vunpack.c.l.s8.bf16 %v844
        %v981 = vunpack.c.h.s8.bf16 %v837
        %v982 = vunpack.c.h.s8.bf16 %v838
        %v983 = vunpack.c.h.s8.bf16 %v839
        %v984 = vunpack.c.h.s8.bf16 %v840
        %v985 = vunpack.c.h.s8.bf16 %v841
        %v986 = vunpack.c.h.s8.bf16 %v842
        %v987 = vunpack.c.h.s8.bf16 %v843
        %v988 = vunpack.c.h.s8.bf16 %v844
        %v989 = vunpack.c.l.s8.bf16 %v845
        %v990 = vunpack.c.l.s8.bf16 %v846
        %v991 = vunpack.c.l.s8.bf16 %v847
        %v992 = vunpack.c.l.s8.bf16 %v848
        %v993 = vunpack.c.l.s8.bf16 %v849
        %v994 = vunpack.c.l.s8.bf16 %v850
        %v995 = vunpack.c.l.s8.bf16 %v851
        %v996 = vunpack.c.l.s8.bf16 %v852
        %v997 = vunpack.c.h.s8.bf16 %v845
        %v998 = vunpack.c.h.s8.bf16 %v846
        %v999 = vunpack.c.h.s8.bf16 %v847
        %v1000 = vunpack.c.h.s8.bf16 %v848
        %v1001 = vunpack.c.h.s8.bf16 %v849
        %v1002 = vunpack.c.h.s8.bf16 %v850
        %v1003 = vunpack.c.h.s8.bf16 %v851
        %v1004 = vunpack.c.h.s8.bf16 %v852
        %v1005 = vunpack.c.l.s8.bf16 %v853
        %v1006 = vunpack.c.l.s8.bf16 %v854
        %v1007 = vunpack.c.l.s8.bf16 %v855
        %v1008 = vunpack.c.l.s8.bf16 %v856
        %v1009 = vunpack.c.l.s8.bf16 %v857
        %v1010 = vunpack.c.l.s8.bf16 %v858
        %v1011 = vunpack.c.l.s8.bf16 %v859
        %v1012 = vunpack.c.l.s8.bf16 %v860
        %v1013 = vunpack.c.h.s8.bf16 %v853
        %v1014 = vunpack.c.h.s8.bf16 %v854
        %v1015 = vunpack.c.h.s8.bf16 %v855
        %v1016 = vunpack.c.h.s8.bf16 %v856
        %v1017 = vunpack.c.h.s8.bf16 %v857
        %v1018 = vunpack.c.h.s8.bf16 %v858
        %v1019 = vunpack.c.h.s8.bf16 %v859
        %v1020 = vunpack.c.h.s8.bf16 %v860
        %v1021 = vunpack.c.l.s8.bf16 %v861
        %v1022 = vunpack.c.l.s8.bf16 %v862
        %v1023 = vunpack.c.l.s8.bf16 %v863
        %v1024 = vunpack.c.l.s8.bf16 %v864
        %v1025 = vunpack.c.l.s8.bf16 %v865
        %v1026 = vunpack.c.l.s8.bf16 %v866
        %v1027 = vunpack.c.l.s8.bf16 %v867
        %v1028 = vunpack.c.l.s8.bf16 %v868
        %v1029 = vunpack.c.h.s8.bf16 %v861
        %v1030 = vunpack.c.h.s8.bf16 %v862
        %v1031 = vunpack.c.h.s8.bf16 %v863
        %v1032 = vunpack.c.h.s8.bf16 %v864
        %v1033 = vunpack.c.h.s8.bf16 %v865
        %v1034 = vunpack.c.h.s8.bf16 %v866
        %v1035 = vunpack.c.h.s8.bf16 %v867
        %v1036 = vunpack.c.h.s8.bf16 %v868
        %v1037 = vunpack.c.l.s8.bf16 %v869
        %v1038 = vunpack.c.l.s8.bf16 %v870
        %v1039 = vunpack.c.l.s8.bf16 %v871
        %v1040 = vunpack.c.l.s8.bf16 %v872
        %v1041 = vunpack.c.l.s8.bf16 %v873
        %v1042 = vunpack.c.l.s8.bf16 %v874
        %v1043 = vunpack.c.l.s8.bf16 %v875
        %v1044 = vunpack.c.l.s8.bf16 %v876
        %v1045 = vunpack.c.h.s8.bf16 %v869
        %v1046 = vunpack.c.h.s8.bf16 %v870
        %v1047 = vunpack.c.h.s8.bf16 %v871
        %v1048 = vunpack.c.h.s8.bf16 %v872
        %v1049 = vunpack.c.h.s8.bf16 %v873
        %v1050 = vunpack.c.h.s8.bf16 %v874
        %v1051 = vunpack.c.h.s8.bf16 %v875
        %v1052 = vunpack.c.h.s8.bf16 %v876
        %v1053 = vunpack.c.l.s8.bf16 %v877
        %v1054 = vunpack.c.l.s8.bf16 %v878
        %v1055 = vunpack.c.l.s8.bf16 %v879
        %v1056 = vunpack.c.l.s8.bf16 %v880
        %v1057 = vunpack.c.l.s8.bf16 %v881
        %v1058 = vunpack.c.l.s8.bf16 %v882
        %v1059 = vunpack.c.l.s8.bf16 %v883
        %v1060 = vunpack.c.l.s8.bf16 %v884
        %v1061 = vunpack.c.h.s8.bf16 %v877
        %v1062 = vunpack.c.h.s8.bf16 %v878
        %v1063 = vunpack.c.h.s8.bf16 %v879
        %v1064 = vunpack.c.h.s8.bf16 %v880
        %v1065 = vunpack.c.h.s8.bf16 %v881
        %v1066 = vunpack.c.h.s8.bf16 %v882
        %v1067 = vunpack.c.h.s8.bf16 %v883
        %v1068 = vunpack.c.h.s8.bf16 %v884
        %v1069 = vunpack.c.l.s8.bf16 %v885
        %v1070 = vunpack.c.l.s8.bf16 %v886
        %v1071 = vunpack.c.l.s8.bf16 %v887
        %v1072 = vunpack.c.l.s8.bf16 %v888
        %v1073 = vunpack.c.l.s8.bf16 %v889
        %v1074 = vunpack.c.l.s8.bf16 %v890
        %v1075 = vunpack.c.l.s8.bf16 %v891
        %v1076 = vunpack.c.l.s8.bf16 %v892
        %v1077 = vunpack.c.h.s8.bf16 %v885
        %v1078 = vunpack.c.h.s8.bf16 %v886
        %v1079 = vunpack.c.h.s8.bf16 %v887
        %v1080 = vunpack.c.h.s8.bf16 %v888
        %v1081 = vunpack.c.h.s8.bf16 %v889
        %v1082 = vunpack.c.h.s8.bf16 %v890
        %v1083 = vunpack.c.h.s8.bf16 %v891
        %v1084 = vunpack.c.h.s8.bf16 %v892
        %v1085 = vunpack.c.l.s8.bf16 %v893
        %v1086 = vunpack.c.l.s8.bf16 %v894
        %v1087 = vunpack.c.l.s8.bf16 %v895
        %v1088 = vunpack.c.l.s8.bf16 %v896
        %v1089 = vunpack.c.l.s8.bf16 %v897
        %v1090 = vunpack.c.l.s8.bf16 %v898
        %v1091 = vunpack.c.l.s8.bf16 %v899
        %v1092 = vunpack.c.l.s8.bf16 %v900
        %v1093 = vunpack.c.h.s8.bf16 %v893
        %v1094 = vunpack.c.h.s8.bf16 %v894
        %v1095 = vunpack.c.h.s8.bf16 %v895
        %v1096 = vunpack.c.h.s8.bf16 %v896
        %v1097 = vunpack.c.h.s8.bf16 %v897
        %v1098 = vunpack.c.h.s8.bf16 %v898
        %v1099 = vunpack.c.h.s8.bf16 %v899
        %v1100 = vunpack.c.h.s8.bf16 %v900
        %v1101 = vunpack.c.l.s8.bf16 %v901
        %v1102 = vunpack.c.l.s8.bf16 %v902
        %v1103 = vunpack.c.l.s8.bf16 %v903
        %v1104 = vunpack.c.l.s8.bf16 %v904
        %v1105 = vunpack.c.l.s8.bf16 %v905
        %v1106 = vunpack.c.l.s8.bf16 %v906
        %v1107 = vunpack.c.l.s8.bf16 %v907
        %v1108 = vunpack.c.l.s8.bf16 %v908
        %v1109 = vunpack.c.h.s8.bf16 %v901
        %v1110 = vunpack.c.h.s8.bf16 %v902
        %v1111 = vunpack.c.h.s8.bf16 %v903
        %v1112 = vunpack.c.h.s8.bf16 %v904
        %v1113 = vunpack.c.h.s8.bf16 %v905
        %v1114 = vunpack.c.h.s8.bf16 %v906
        %v1115 = vunpack.c.h.s8.bf16 %v907
        %v1116 = vunpack.c.h.s8.bf16 %v908
        %v1117 = vunpack.c.l.s8.bf16 %v909
        %v1118 = vunpack.c.l.s8.bf16 %v910
        %v1119 = vunpack.c.l.s8.bf16 %v911
        %v1120 = vunpack.c.l.s8.bf16 %v912
        %v1121 = vunpack.c.l.s8.bf16 %v913
        %v1122 = vunpack.c.l.s8.bf16 %v914
        %v1123 = vunpack.c.l.s8.bf16 %v915
        %v1124 = vunpack.c.l.s8.bf16 %v916
        %v1125 = vunpack.c.h.s8.bf16 %v909
        %v1126 = vunpack.c.h.s8.bf16 %v910
        %v1127 = vunpack.c.h.s8.bf16 %v911
        %v1128 = vunpack.c.h.s8.bf16 %v912
        %v1129 = vunpack.c.h.s8.bf16 %v913
        %v1130 = vunpack.c.h.s8.bf16 %v914
        %v1131 = vunpack.c.h.s8.bf16 %v915
        %v1132 = vunpack.c.h.s8.bf16 %v916
        %v1133 = vunpack.c.l.s8.bf16 %v917
        %v1134 = vunpack.c.l.s8.bf16 %v918
        %v1135 = vunpack.c.l.s8.bf16 %v919
        %v1136 = vunpack.c.l.s8.bf16 %v920
        %v1137 = vunpack.c.l.s8.bf16 %v921
        %v1138 = vunpack.c.l.s8.bf16 %v922
        %v1139 = vunpack.c.l.s8.bf16 %v923
        %v1140 = vunpack.c.l.s8.bf16 %v924
        %v1141 = vunpack.c.h.s8.bf16 %v917
        %v1142 = vunpack.c.h.s8.bf16 %v918
        %v1143 = vunpack.c.h.s8.bf16 %v919
        %v1144 = vunpack.c.h.s8.bf16 %v920
        %v1145 = vunpack.c.h.s8.bf16 %v921
        %v1146 = vunpack.c.h.s8.bf16 %v922
        %v1147 = vunpack.c.h.s8.bf16 %v923
        %v1148 = vunpack.c.h.s8.bf16 %v924
        %v1149 = vunpack.c.l.s8.bf16 %v925
        %v1150 = vunpack.c.l.s8.bf16 %v926
        %v1151 = vunpack.c.l.s8.bf16 %v927
        %v1152 = vunpack.c.l.s8.bf16 %v928
        %v1153 = vunpack.c.l.s8.bf16 %v929
        %v1154 = vunpack.c.l.s8.bf16 %v930
        %v1155 = vunpack.c.l.s8.bf16 %v931
        %v1156 = vunpack.c.l.s8.bf16 %v932
        %v1157 = vunpack.c.h.s8.bf16 %v925
        %v1158 = vunpack.c.h.s8.bf16 %v926
        %v1159 = vunpack.c.h.s8.bf16 %v927
        %v1160 = vunpack.c.h.s8.bf16 %v928
        %v1161 = vunpack.c.h.s8.bf16 %v929
        %v1162 = vunpack.c.h.s8.bf16 %v930
        %v1163 = vunpack.c.h.s8.bf16 %v931
        %v1164 = vunpack.c.h.s8.bf16 %v932
        %v1165 = vunpack.c.l.s8.bf16 %v933
        %v1166 = vunpack.c.l.s8.bf16 %v934
        %v1167 = vunpack.c.l.s8.bf16 %v935
        %v1168 = vunpack.c.l.s8.bf16 %v936
        %v1169 = vunpack.c.l.s8.bf16 %v937
        %v1170 = vunpack.c.l.s8.bf16 %v938
        %v1171 = vunpack.c.l.s8.bf16 %v939
        %v1172 = vunpack.c.l.s8.bf16 %v940
        %v1173 = vunpack.c.h.s8.bf16 %v933
        %v1174 = vunpack.c.h.s8.bf16 %v934
        %v1175 = vunpack.c.h.s8.bf16 %v935
        %v1176 = vunpack.c.h.s8.bf16 %v936
        %v1177 = vunpack.c.h.s8.bf16 %v937
        %v1178 = vunpack.c.h.s8.bf16 %v938
        %v1179 = vunpack.c.h.s8.bf16 %v939
        %v1180 = vunpack.c.h.s8.bf16 %v940
        %v1181 = vunpack.c.l.s8.bf16 %v941
        %v1182 = vunpack.c.l.s8.bf16 %v942
        %v1183 = vunpack.c.l.s8.bf16 %v943
        %v1184 = vunpack.c.l.s8.bf16 %v944
        %v1185 = vunpack.c.l.s8.bf16 %v945
        %v1186 = vunpack.c.l.s8.bf16 %v946
        %v1187 = vunpack.c.l.s8.bf16 %v947
        %v1188 = vunpack.c.l.s8.bf16 %v948
        %v1189 = vunpack.c.h.s8.bf16 %v941
        %v1190 = vunpack.c.h.s8.bf16 %v942
        %v1191 = vunpack.c.h.s8.bf16 %v943
        %v1192 = vunpack.c.h.s8.bf16 %v944
        %v1193 = vunpack.c.h.s8.bf16 %v945
        %v1194 = vunpack.c.h.s8.bf16 %v946
        %v1195 = vunpack.c.h.s8.bf16 %v947
        %v1196 = vunpack.c.h.s8.bf16 %v948
        %v1197 = vunpack.c.l.s8.bf16 %v949
        %v1198 = vunpack.c.l.s8.bf16 %v950
        %v1199 = vunpack.c.l.s8.bf16 %v951
        %v1200 = vunpack.c.l.s8.bf16 %v952
        %v1201 = vunpack.c.l.s8.bf16 %v953
        %v1202 = vunpack.c.l.s8.bf16 %v954
        %v1203 = vunpack.c.l.s8.bf16 %v955
        %v1204 = vunpack.c.l.s8.bf16 %v956
        %v1205 = vunpack.c.h.s8.bf16 %v949
        %v1206 = vunpack.c.h.s8.bf16 %v950
        %v1207 = vunpack.c.h.s8.bf16 %v951
        %v1208 = vunpack.c.h.s8.bf16 %v952
        %v1209 = vunpack.c.h.s8.bf16 %v953
        %v1210 = vunpack.c.h.s8.bf16 %v954
        %v1211 = vunpack.c.h.s8.bf16 %v955
        %v1212 = vunpack.c.h.s8.bf16 %v956
        %v1213 = vld [vmem:[#allocation2] sm:$0xff]
        %v1214 = vld [vmem:[#allocation2 + $0x8] sm:$0xff]
        %v1215 = vld [vmem:[#allocation5] sm:$0xff]
        %v1216 = vld [vmem:[#allocation5 + $0x8] sm:$0xff]
        %v1219 = vunpack.c.l.b16 %v1215
        %v1220 = vunpack.c.h.b16 %v1215
        %v1221 = vunpack.c.l.b16 %v1216
        %v1222 = vunpack.c.h.b16 %v1216
        %v1223 = vpack.c.b16 %v1219, %v1219
        %v1224 = vpack.c.b16 %v1220, %v1220
        %v1225 = vpack.c.b16 %v1221, %v1221
        %v1226 = vpack.c.b16 %v1222, %v1222
        %1231 = vmatprep.subr.bf16.mxu0 %v958
        %1232 = vmatpush1.bf16.msra.mxu0 %v957
        %1233 = vmatprep.subr.bf16.mxu0 %v966
        %1234 = vmatpush1.bf16.msra.mxu0 %v965
        %1235 = vmatprep.subr.bf16.mxu0 %v974
        %1236 = vmatpush1.bf16.msra.mxu0 %v973
        %1237 = vmatprep.subr.bf16.mxu0 %v982
        %1238 = vmatpush1.bf16.msra.mxu0 %v981
        %1239 = vmatprep.subr.bf16.mxu0 %v990
        %1240 = vmatpush1.bf16.msra.mxu0 %v989
        %1241 = vmatprep.subr.bf16.mxu0 %v998
        %1242 = vmatpush1.bf16.msra.mxu0 %v997
        %1243 = vmatprep.subr.bf16.mxu0 %v1006
        %1244 = vmatpush1.bf16.msra.mxu0 %v1005
        %1245 = vmatprep.subr.bf16.mxu0 %v1014
        %1246 = vmatpush1.bf16.msra.mxu0 %v1013
        %1247 = vmatprep.subr.bf16.mxu0 %v1022
        %1248 = vmatpush1.bf16.msra.mxu0 %v1021
        %1249 = vmatprep.subr.bf16.mxu0 %v1030
        %1250 = vmatpush1.bf16.msra.mxu0 %v1029
        %1251 = vmatprep.subr.bf16.mxu0 %v1038
        %1252 = vmatpush1.bf16.msra.mxu0 %v1037
        %1253 = vmatprep.subr.bf16.mxu0 %v1046
        %1254 = vmatpush1.bf16.msra.mxu0 %v1045
        %1255 = vmatprep.subr.bf16.mxu0 %v1054
        %1256 = vmatpush1.bf16.msra.mxu0 %v1053
        %1257 = vmatprep.subr.bf16.mxu0 %v1062
        %1258 = vmatpush1.bf16.msra.mxu0 %v1061
        %1259 = vmatprep.subr.bf16.mxu0 %v1070
        %1260 = vmatpush1.bf16.msra.mxu0 %v1069
        %1261 = vmatprep.subr.bf16.mxu0 %v1078
        %1262 = vmatpush1.bf16.msra.mxu0 %v1077
        %1263 = vmatprep.mubr.bf16.mxu0 %v1224
        %1264 = vmatmul.mubr.bf16.gmra.mrb[0].mxu0 %v1223
        %v1265 = vpop.f32.mrb[0].mxu0
        %v1266 = vadd.f32 0.0, %v1265
        %v1267 = vpop.f32.mrb[0].mxu0
        %v1268 = vadd.f32 0.0, %v1267
        %v1269 = vpop.f32.mrb[0].mxu0
        %v1270 = vpop.f32.mrb[0].mxu0
        %1271 = vdwg.mxu0
        %1272 = vmatprep.subr.bf16.mxu0 %v1086
        %1273 = vmatpush1.bf16.msra.mxu0 %v1085
        %1274 = vmatprep.subr.bf16.mxu0 %v1094
        %1275 = vmatpush1.bf16.msra.mxu0 %v1093
        %1276 = vmatprep.subr.bf16.mxu0 %v1102
        %1277 = vmatpush1.bf16.msra.mxu0 %v1101
        %1278 = vmatprep.subr.bf16.mxu0 %v1110
        %1279 = vmatpush1.bf16.msra.mxu0 %v1109
        %1280 = vmatprep.subr.bf16.mxu0 %v1118
        %1281 = vmatpush1.bf16.msra.mxu0 %v1117
        %1282 = vmatprep.subr.bf16.mxu0 %v1126
        %1283 = vmatpush1.bf16.msra.mxu0 %v1125
        %1284 = vmatprep.subr.bf16.mxu0 %v1134
        %1285 = vmatpush1.bf16.msra.mxu0 %v1133
        %1286 = vmatprep.subr.bf16.mxu0 %v1142
        %1287 = vmatpush1.bf16.msra.mxu0 %v1141
        %1288 = vmatprep.subr.bf16.mxu0 %v1150
        %1289 = vmatpush1.bf16.msra.mxu0 %v1149
        %1290 = vmatprep.subr.bf16.mxu0 %v1158
        %1291 = vmatpush1.bf16.msra.mxu0 %v1157
        %1292 = vmatprep.subr.bf16.mxu0 %v1166
        %1293 = vmatpush1.bf16.msra.mxu0 %v1165
        %1294 = vmatprep.subr.bf16.mxu0 %v1174
        %1295 = vmatpush1.bf16.msra.mxu0 %v1173
        %1296 = vmatprep.subr.bf16.mxu0 %v1182
        %1297 = vmatpush1.bf16.msra.mxu0 %v1181
        %1298 = vmatprep.subr.bf16.mxu0 %v1190
        %1299 = vmatpush1.bf16.msra.mxu0 %v1189
        %1300 = vmatprep.subr.bf16.mxu0 %v1198
        %1301 = vmatpush1.bf16.msra.mxu0 %v1197
        %1302 = vmatprep.subr.bf16.mxu0 %v1206
        %1303 = vmatpush1.bf16.msra.mxu0 %v1205
        %1304 = vmatprep.mubr.bf16.mxu0 %v1226
        %1305 = vmatmul.mubr.bf16.gmra.mrb[0].mxu0 %v1225
        %v1306 = vpop.f32.mrb[0].mxu0
        %v1307 = vadd.f32 %v1266, %v1306
        %v1308 = vpop.f32.mrb[0].mxu0
        %v1309 = vadd.f32 %v1268, %v1308
        %v1310 = vpop.f32.mrb[0].mxu0
        %v1311 = vpop.f32.mrb[0].mxu0
        %1312 = vdwg.mxu0
        %1313 = vmatprep.subr.bf16.mxu0 %v960
        %1314 = vmatpush1.bf16.msra.mxu0 %v959
        %1315 = vmatprep.subr.bf16.mxu0 %v968
        %1316 = vmatpush1.bf16.msra.mxu0 %v967
        %1317 = vmatprep.subr.bf16.mxu0 %v976
        %1318 = vmatpush1.bf16.msra.mxu0 %v975
        %1319 = vmatprep.subr.bf16.mxu0 %v984
        %1320 = vmatpush1.bf16.msra.mxu0 %v983
        %1321 = vmatprep.subr.bf16.mxu0 %v992
        %1322 = vmatpush1.bf16.msra.mxu0 %v991
        %1323 = vmatprep.subr.bf16.mxu0 %v1000
        %1324 = vmatpush1.bf16.msra.mxu0 %v999
        %1325 = vmatprep.subr.bf16.mxu0 %v1008
        %1326 = vmatpush1.bf16.msra.mxu0 %v1007
        %1327 = vmatprep.subr.bf16.mxu0 %v1016
        %1328 = vmatpush1.bf16.msra.mxu0 %v1015
        %1329 = vmatprep.subr.bf16.mxu0 %v1024
        %1330 = vmatpush1.bf16.msra.mxu0 %v1023
        %1331 = vmatprep.subr.bf16.mxu0 %v1032
        %1332 = vmatpush1.bf16.msra.mxu0 %v1031
        %1333 = vmatprep.subr.bf16.mxu0 %v1040
        %1334 = vmatpush1.bf16.msra.mxu0 %v1039
        %1335 = vmatprep.subr.bf16.mxu0 %v1048
        %1336 = vmatpush1.bf16.msra.mxu0 %v1047
        %1337 = vmatprep.subr.bf16.mxu0 %v1056
        %1338 = vmatpush1.bf16.msra.mxu0 %v1055
        %1339 = vmatprep.subr.bf16.mxu0 %v1064
        %1340 = vmatpush1.bf16.msra.mxu0 %v1063
        %1341 = vmatprep.subr.bf16.mxu0 %v1072
        %1342 = vmatpush1.bf16.msra.mxu0 %v1071
        %1343 = vmatprep.subr.bf16.mxu0 %v1080
        %1344 = vmatpush1.bf16.msra.mxu0 %v1079
        %1345 = vmatprep.mubr.bf16.mxu0 %v1224
        %1346 = vmatmul.mubr.bf16.gmra.mrb[0].mxu0 %v1223
        %v1347 = vpop.f32.mrb[0].mxu0
        %v1348 = vadd.f32 0.0, %v1347
        %v1349 = vpop.f32.mrb[0].mxu0
        %v1350 = vadd.f32 0.0, %v1349
        %v1351 = vpop.f32.mrb[0].mxu0
        %v1352 = vpop.f32.mrb[0].mxu0
        %1353 = vdwg.mxu0
        %1354 = vmatprep.subr.bf16.mxu0 %v1088
        %1355 = vmatpush1.bf16.msra.mxu0 %v1087
        %1356 = vmatprep.subr.bf16.mxu0 %v1096
        %1357 = vmatpush1.bf16.msra.mxu0 %v1095
        %1358 = vmatprep.subr.bf16.mxu0 %v1104
        %1359 = vmatpush1.bf16.msra.mxu0 %v1103
        %1360 = vmatprep.subr.bf16.mxu0 %v1112
        %1361 = vmatpush1.bf16.msra.mxu0 %v1111
        %1362 = vmatprep.subr.bf16.mxu0 %v1120
        %1363 = vmatpush1.bf16.msra.mxu0 %v1119
        %1364 = vmatprep.subr.bf16.mxu0 %v1128
        %1365 = vmatpush1.bf16.msra.mxu0 %v1127
        %1366 = vmatprep.subr.bf16.mxu0 %v1136
        %1367 = vmatpush1.bf16.msra.mxu0 %v1135
        %1368 = vmatprep.subr.bf16.mxu0 %v1144
        %1369 = vmatpush1.bf16.msra.mxu0 %v1143
        %1370 = vmatprep.subr.bf16.mxu0 %v1152
        %1371 = vmatpush1.bf16.msra.mxu0 %v1151
        %1372 = vmatprep.subr.bf16.mxu0 %v1160
        %1373 = vmatpush1.bf16.msra.mxu0 %v1159
        %1374 = vmatprep.subr.bf16.mxu0 %v1168
        %1375 = vmatpush1.bf16.msra.mxu0 %v1167
        %1376 = vmatprep.subr.bf16.mxu0 %v1176
        %1377 = vmatpush1.bf16.msra.mxu0 %v1175
        %1378 = vmatprep.subr.bf16.mxu0 %v1184
        %1379 = vmatpush1.bf16.msra.mxu0 %v1183
        %1380 = vmatprep.subr.bf16.mxu0 %v1192
        %1381 = vmatpush1.bf16.msra.mxu0 %v1191
        %1382 = vmatprep.subr.bf16.mxu0 %v1200
        %1383 = vmatpush1.bf16.msra.mxu0 %v1199
        %1384 = vmatprep.subr.bf16.mxu0 %v1208
        %1385 = vmatpush1.bf16.msra.mxu0 %v1207
        %1386 = vmatprep.mubr.bf16.mxu0 %v1226
        %1387 = vmatmul.mubr.bf16.gmra.mrb[0].mxu0 %v1225
        %v1388 = vpop.f32.mrb[0].mxu0
        %v1389 = vadd.f32 %v1348, %v1388
        %v1390 = vpop.f32.mrb[0].mxu0
        %v1391 = vadd.f32 %v1350, %v1390
        %v1392 = vpop.f32.mrb[0].mxu0
        %v1393 = vpop.f32.mrb[0].mxu0
        %1394 = vdwg.mxu0
        %1395 = vmatprep.subr.bf16.mxu0 %v962
        %1396 = vmatpush1.bf16.msra.mxu0 %v961
        %1397 = vmatprep.subr.bf16.mxu0 %v970
        %1398 = vmatpush1.bf16.msra.mxu0 %v969
        %1399 = vmatprep.subr.bf16.mxu0 %v978
        %1400 = vmatpush1.bf16.msra.mxu0 %v977
        %1401 = vmatprep.subr.bf16.mxu0 %v986
        %1402 = vmatpush1.bf16.msra.mxu0 %v985
        %1403 = vmatprep.subr.bf16.mxu0 %v994
        %1404 = vmatpush1.bf16.msra.mxu0 %v993
        %1405 = vmatprep.subr.bf16.mxu0 %v1002
        %1406 = vmatpush1.bf16.msra.mxu0 %v1001
        %1407 = vmatprep.subr.bf16.mxu0 %v1010
        %1408 = vmatpush1.bf16.msra.mxu0 %v1009
        %1409 = vmatprep.subr.bf16.mxu0 %v1018
        %1410 = vmatpush1.bf16.msra.mxu0 %v1017
        %1411 = vmatprep.subr.bf16.mxu0 %v1026
        %1412 = vmatpush1.bf16.msra.mxu0 %v1025
        %1413 = vmatprep.subr.bf16.mxu0 %v1034
        %1414 = vmatpush1.bf16.msra.mxu0 %v1033
        %1415 = vmatprep.subr.bf16.mxu0 %v1042
        %1416 = vmatpush1.bf16.msra.mxu0 %v1041
        %1417 = vmatprep.subr.bf16.mxu0 %v1050
        %1418 = vmatpush1.bf16.msra.mxu0 %v1049
        %1419 = vmatprep.subr.bf16.mxu0 %v1058
        %1420 = vmatpush1.bf16.msra.mxu0 %v1057
        %1421 = vmatprep.subr.bf16.mxu0 %v1066
        %1422 = vmatpush1.bf16.msra.mxu0 %v1065
        %1423 = vmatprep.subr.bf16.mxu0 %v1074
        %1424 = vmatpush1.bf16.msra.mxu0 %v1073
        %1425 = vmatprep.subr.bf16.mxu0 %v1082
        %1426 = vmatpush1.bf16.msra.mxu0 %v1081
        %1427 = vmatprep.mubr.bf16.mxu0 %v1224
        %1428 = vmatmul.mubr.bf16.gmra.mrb[0].mxu0 %v1223
        %v1429 = vpop.f32.mrb[0].mxu0
        %v1430 = vadd.f32 0.0, %v1429
        %v1431 = vpop.f32.mrb[0].mxu0
        %v1432 = vadd.f32 0.0, %v1431
        %v1433 = vpop.f32.mrb[0].mxu0
        %v1434 = vpop.f32.mrb[0].mxu0
        %1435 = vdwg.mxu0
        %1436 = vmatprep.subr.bf16.mxu0 %v1090
        %1437 = vmatpush1.bf16.msra.mxu0 %v1089
        %1438 = vmatprep.subr.bf16.mxu0 %v1098
        %1439 = vmatpush1.bf16.msra.mxu0 %v1097
        %1440 = vmatprep.subr.bf16.mxu0 %v1106
        %1441 = vmatpush1.bf16.msra.mxu0 %v1105
        %1442 = vmatprep.subr.bf16.mxu0 %v1114
        %1443 = vmatpush1.bf16.msra.mxu0 %v1113
        %1444 = vmatprep.subr.bf16.mxu0 %v1122
        %1445 = vmatpush1.bf16.msra.mxu0 %v1121
        %1446 = vmatprep.subr.bf16.mxu0 %v1130
        %1447 = vmatpush1.bf16.msra.mxu0 %v1129
        %1448 = vmatprep.subr.bf16.mxu0 %v1138
        %1449 = vmatpush1.bf16.msra.mxu0 %v1137
        %1450 = vmatprep.subr.bf16.mxu0 %v1146
        %1451 = vmatpush1.bf16.msra.mxu0 %v1145
        %1452 = vmatprep.subr.bf16.mxu0 %v1154
        %1453 = vmatpush1.bf16.msra.mxu0 %v1153
        %1454 = vmatprep.subr.bf16.mxu0 %v1162
        %1455 = vmatpush1.bf16.msra.mxu0 %v1161
        %1456 = vmatprep.subr.bf16.mxu0 %v1170
        %1457 = vmatpush1.bf16.msra.mxu0 %v1169
        %1458 = vmatprep.subr.bf16.mxu0 %v1178
        %1459 = vmatpush1.bf16.msra.mxu0 %v1177
        %1460 = vmatprep.subr.bf16.mxu0 %v1186
        %1461 = vmatpush1.bf16.msra.mxu0 %v1185
        %1462 = vmatprep.subr.bf16.mxu0 %v1194
        %1463 = vmatpush1.bf16.msra.mxu0 %v1193
        %1464 = vmatprep.subr.bf16.mxu0 %v1202
        %1465 = vmatpush1.bf16.msra.mxu0 %v1201
        %1466 = vmatprep.subr.bf16.mxu0 %v1210
        %1467 = vmatpush1.bf16.msra.mxu0 %v1209
        %1468 = vmatprep.mubr.bf16.mxu0 %v1226
        %1469 = vmatmul.mubr.bf16.gmra.mrb[0].mxu0 %v1225
        %v1470 = vpop.f32.mrb[0].mxu0
        %v1471 = vadd.f32 %v1430, %v1470
        %v1472 = vpop.f32.mrb[0].mxu0
        %v1473 = vadd.f32 %v1432, %v1472
        %v1474 = vpop.f32.mrb[0].mxu0
        %v1475 = vpop.f32.mrb[0].mxu0
        %1476 = vdwg.mxu0
        %1477 = vmatprep.subr.bf16.mxu0 %v964
        %1478 = vmatpush1.bf16.msra.mxu0 %v963
        %1479 = vmatprep.subr.bf16.mxu0 %v972
        %1480 = vmatpush1.bf16.msra.mxu0 %v971
        %1481 = vmatprep.subr.bf16.mxu0 %v980
        %1482 = vmatpush1.bf16.msra.mxu0 %v979
        %1483 = vmatprep.subr.bf16.mxu0 %v988
        %1484 = vmatpush1.bf16.msra.mxu0 %v987
        %1485 = vmatprep.subr.bf16.mxu0 %v996
        %1486 = vmatpush1.bf16.msra.mxu0 %v995
        %1487 = vmatprep.subr.bf16.mxu0 %v1004
        %1488 = vmatpush1.bf16.msra.mxu0 %v1003
        %1489 = vmatprep.subr.bf16.mxu0 %v1012
        %1490 = vmatpush1.bf16.msra.mxu0 %v1011
        %1491 = vmatprep.subr.bf16.mxu0 %v1020
        %1492 = vmatpush1.bf16.msra.mxu0 %v1019
        %1493 = vmatprep.subr.bf16.mxu0 %v1028
        %1494 = vmatpush1.bf16.msra.mxu0 %v1027
        %1495 = vmatprep.subr.bf16.mxu0 %v1036
        %1496 = vmatpush1.bf16.msra.mxu0 %v1035
        %1497 = vmatprep.subr.bf16.mxu0 %v1044
        %1498 = vmatpush1.bf16.msra.mxu0 %v1043
        %1499 = vmatprep.subr.bf16.mxu0 %v1052
        %1500 = vmatpush1.bf16.msra.mxu0 %v1051
        %1501 = vmatprep.subr.bf16.mxu0 %v1060
        %1502 = vmatpush1.bf16.msra.mxu0 %v1059
        %1503 = vmatprep.subr.bf16.mxu0 %v1068
        %1504 = vmatpush1.bf16.msra.mxu0 %v1067
        %1505 = vmatprep.subr.bf16.mxu0 %v1076
        %1506 = vmatpush1.bf16.msra.mxu0 %v1075
        %1507 = vmatprep.subr.bf16.mxu0 %v1084
        %1508 = vmatpush1.bf16.msra.mxu0 %v1083
        %1509 = vmatprep.mubr.bf16.mxu0 %v1224
        %1510 = vmatmul.mubr.bf16.gmra.mrb[0].mxu0 %v1223
        %v1511 = vpop.f32.mrb[0].mxu0
        %v1512 = vadd.f32 0.0, %v1511
        %v1513 = vpop.f32.mrb[0].mxu0
        %v1514 = vadd.f32 0.0, %v1513
        %v1515 = vpop.f32.mrb[0].mxu0
        %v1516 = vpop.f32.mrb[0].mxu0
        %1517 = vdwg.mxu0
        %1518 = vmatprep.subr.bf16.mxu0 %v1092
        %1519 = vmatpush1.bf16.msra.mxu0 %v1091
        %1520 = vmatprep.subr.bf16.mxu0 %v1100
        %1521 = vmatpush1.bf16.msra.mxu0 %v1099
        %1522 = vmatprep.subr.bf16.mxu0 %v1108
        %1523 = vmatpush1.bf16.msra.mxu0 %v1107
        %1524 = vmatprep.subr.bf16.mxu0 %v1116
        %1525 = vmatpush1.bf16.msra.mxu0 %v1115
        %1526 = vmatprep.subr.bf16.mxu0 %v1124
        %1527 = vmatpush1.bf16.msra.mxu0 %v1123
        %1528 = vmatprep.subr.bf16.mxu0 %v1132
        %1529 = vmatpush1.bf16.msra.mxu0 %v1131
        %1530 = vmatprep.subr.bf16.mxu0 %v1140
        %1531 = vmatpush1.bf16.msra.mxu0 %v1139
        %1532 = vmatprep.subr.bf16.mxu0 %v1148
        %1533 = vmatpush1.bf16.msra.mxu0 %v1147
        %1534 = vmatprep.subr.bf16.mxu0 %v1156
        %1535 = vmatpush1.bf16.msra.mxu0 %v1155
        %1536 = vmatprep.subr.bf16.mxu0 %v1164
        %1537 = vmatpush1.bf16.msra.mxu0 %v1163
        %1538 = vmatprep.subr.bf16.mxu0 %v1172
        %1539 = vmatpush1.bf16.msra.mxu0 %v1171
        %1540 = vmatprep.subr.bf16.mxu0 %v1180
        %1541 = vmatpush1.bf16.msra.mxu0 %v1179
        %1542 = vmatprep.subr.bf16.mxu0 %v1188
        %1543 = vmatpush1.bf16.msra.mxu0 %v1187
        %1544 = vmatprep.subr.bf16.mxu0 %v1196
        %1545 = vmatpush1.bf16.msra.mxu0 %v1195
        %1546 = vmatprep.subr.bf16.mxu0 %v1204
        %1547 = vmatpush1.bf16.msra.mxu0 %v1203
        %1548 = vmatprep.subr.bf16.mxu0 %v1212
        %1549 = vmatpush1.bf16.msra.mxu0 %v1211
        %1550 = vmatprep.mubr.bf16.mxu0 %v1226
        %1551 = vmatmul.mubr.bf16.gmra.mrb[0].mxu0 %v1225
        %v1552 = vpop.f32.mrb[0].mxu0
        %v1553 = vadd.f32 %v1512, %v1552
        %v1554 = vpop.f32.mrb[0].mxu0
        %v1555 = vadd.f32 %v1514, %v1554
        %v1556 = vpop.f32.mrb[0].mxu0
        %v1557 = vpop.f32.mrb[0].mxu0
        %1558 = vdwg.mxu0
        %v1561 = vunpack.c.l.b16 %v1213
        %v1562 = vunpack.c.h.b16 %v1213
        %v1563 = vunpack.c.l.b16 %v1214
        %v1564 = vunpack.c.h.b16 %v1214
        %v1565 = vpack.c.b16 %v1561, %v1561
        %v1566 = vpack.c.b16 %v1562, %v1562
        %v1567 = vpack.c.b16 %v1563, %v1563
        %v1568 = vpack.c.b16 %v1564, %v1564
        %1573 = vmatprep.subr.bf16.mxu0 %v574
        %1574 = vmatpush1.bf16.msra.mxu0 %v573
        %1575 = vmatprep.subr.bf16.mxu0 %v582
        %1576 = vmatpush1.bf16.msra.mxu0 %v581
        %1577 = vmatprep.subr.bf16.mxu0 %v590
        %1578 = vmatpush1.bf16.msra.mxu0 %v589
        %1579 = vmatprep.subr.bf16.mxu0 %v598
        %1580 = vmatpush1.bf16.msra.mxu0 %v597
        %1581 = vmatprep.subr.bf16.mxu0 %v606
        %1582 = vmatpush1.bf16.msra.mxu0 %v605
        %1583 = vmatprep.subr.bf16.mxu0 %v614
        %1584 = vmatpush1.bf16.msra.mxu0 %v613
        %1585 = vmatprep.subr.bf16.mxu0 %v622
        %1586 = vmatpush1.bf16.msra.mxu0 %v621
        %1587 = vmatprep.subr.bf16.mxu0 %v630
        %1588 = vmatpush1.bf16.msra.mxu0 %v629
        %1589 = vmatprep.subr.bf16.mxu0 %v638
        %1590 = vmatpush1.bf16.msra.mxu0 %v637
        %1591 = vmatprep.subr.bf16.mxu0 %v646
        %1592 = vmatpush1.bf16.msra.mxu0 %v645
        %1593 = vmatprep.subr.bf16.mxu0 %v654
        %1594 = vmatpush1.bf16.msra.mxu0 %v653
        %1595 = vmatprep.subr.bf16.mxu0 %v662
        %1596 = vmatpush1.bf16.msra.mxu0 %v661
        %1597 = vmatprep.subr.bf16.mxu0 %v670
        %1598 = vmatpush1.bf16.msra.mxu0 %v669
        %1599 = vmatprep.subr.bf16.mxu0 %v678
        %1600 = vmatpush1.bf16.msra.mxu0 %v677
        %1601 = vmatprep.subr.bf16.mxu0 %v686
        %1602 = vmatpush1.bf16.msra.mxu0 %v685
        %1603 = vmatprep.subr.bf16.mxu0 %v694
        %1604 = vmatpush1.bf16.msra.mxu0 %v693
        %1605 = vmatprep.mubr.bf16.mxu0 %v1566
        %1606 = vmatmul.mubr.bf16.gmra.mrb[0].mxu0 %v1565
        %v1607 = vpop.f32.mrb[0].mxu0
        %v1608 = vadd.f32 %v1307, %v1607
        %v1609 = vpop.f32.mrb[0].mxu0
        %v1610 = vadd.f32 %v1309, %v1609
        %v1611 = vpop.f32.mrb[0].mxu0
        %v1612 = vpop.f32.mrb[0].mxu0
        %1613 = vdwg.mxu0
        %1614 = vmatprep.subr.bf16.mxu0 %v702
        %1615 = vmatpush1.bf16.msra.mxu0 %v701
        %1616 = vmatprep.subr.bf16.mxu0 %v710
        %1617 = vmatpush1.bf16.msra.mxu0 %v709
        %1618 = vmatprep.subr.bf16.mxu0 %v718
        %1619 = vmatpush1.bf16.msra.mxu0 %v717
        %1620 = vmatprep.subr.bf16.mxu0 %v726
        %1621 = vmatpush1.bf16.msra.mxu0 %v725
        %1622 = vmatprep.subr.bf16.mxu0 %v734
        %1623 = vmatpush1.bf16.msra.mxu0 %v733
        %1624 = vmatprep.subr.bf16.mxu0 %v742
        %1625 = vmatpush1.bf16.msra.mxu0 %v741
        %1626 = vmatprep.subr.bf16.mxu0 %v750
        %1627 = vmatpush1.bf16.msra.mxu0 %v749
        %1628 = vmatprep.subr.bf16.mxu0 %v758
        %1629 = vmatpush1.bf16.msra.mxu0 %v757
        %1630 = vmatprep.subr.bf16.mxu0 %v766
        %1631 = vmatpush1.bf16.msra.mxu0 %v765
        %1632 = vmatprep.subr.bf16.mxu0 %v774
        %1633 = vmatpush1.bf16.msra.mxu0 %v773
        %1634 = vmatprep.subr.bf16.mxu0 %v782
        %1635 = vmatpush1.bf16.msra.mxu0 %v781
        %1636 = vmatprep.subr.bf16.mxu0 %v790
        %1637 = vmatpush1.bf16.msra.mxu0 %v789
        %1638 = vmatprep.subr.bf16.mxu0 %v798
        %1639 = vmatpush1.bf16.msra.mxu0 %v797
        %1640 = vmatprep.subr.bf16.mxu0 %v806
        %1641 = vmatpush1.bf16.msra.mxu0 %v805
        %1642 = vmatprep.subr.bf16.mxu0 %v814
        %1643 = vmatpush1.bf16.msra.mxu0 %v813
        %1644 = vmatprep.subr.bf16.mxu0 %v822
        %1645 = vmatpush1.bf16.msra.mxu0 %v821
        %1646 = vmatprep.mubr.bf16.mxu0 %v1568
        %1647 = vmatmul.mubr.bf16.gmra.mrb[0].mxu0 %v1567
        %v1648 = vpop.f32.mrb[0].mxu0
        %v1649 = vadd.f32 %v1608, %v1648
        %v1650 = vpop.f32.mrb[0].mxu0
        %v1651 = vadd.f32 %v1610, %v1650
        %v1652 = vpop.f32.mrb[0].mxu0
        %v1653 = vpop.f32.mrb[0].mxu0
        %1654 = vdwg.mxu0
        %1655 = vmatprep.subr.bf16.mxu0 %v576
        %1656 = vmatpush1.bf16.msra.mxu0 %v575
        %1657 = vmatprep.subr.bf16.mxu0 %v584
        %1658 = vmatpush1.bf16.msra.mxu0 %v583
        %1659 = vmatprep.subr.bf16.mxu0 %v592
        %1660 = vmatpush1.bf16.msra.mxu0 %v591
        %1661 = vmatprep.subr.bf16.mxu0 %v600
        %1662 = vmatpush1.bf16.msra.mxu0 %v599
        %1663 = vmatprep.subr.bf16.mxu0 %v608
        %1664 = vmatpush1.bf16.msra.mxu0 %v607
        %1665 = vmatprep.subr.bf16.mxu0 %v616
        %1666 = vmatpush1.bf16.msra.mxu0 %v615
        %1667 = vmatprep.subr.bf16.mxu0 %v624
        %1668 = vmatpush1.bf16.msra.mxu0 %v623
        %1669 = vmatprep.subr.bf16.mxu0 %v632
        %1670 = vmatpush1.bf16.msra.mxu0 %v631
        %1671 = vmatprep.subr.bf16.mxu0 %v640
        %1672 = vmatpush1.bf16.msra.mxu0 %v639
        %1673 = vmatprep.subr.bf16.mxu0 %v648
        %1674 = vmatpush1.bf16.msra.mxu0 %v647
        %1675 = vmatprep.subr.bf16.mxu0 %v656
        %1676 = vmatpush1.bf16.msra.mxu0 %v655
        %1677 = vmatprep.subr.bf16.mxu0 %v664
        %1678 = vmatpush1.bf16.msra.mxu0 %v663
        %1679 = vmatprep.subr.bf16.mxu0 %v672
        %1680 = vmatpush1.bf16.msra.mxu0 %v671
        %1681 = vmatprep.subr.bf16.mxu0 %v680
        %1682 = vmatpush1.bf16.msra.mxu0 %v679
        %1683 = vmatprep.subr.bf16.mxu0 %v688
        %1684 = vmatpush1.bf16.msra.mxu0 %v687
        %1685 = vmatprep.subr.bf16.mxu0 %v696
        %1686 = vmatpush1.bf16.msra.mxu0 %v695
        %1687 = vmatprep.mubr.bf16.mxu0 %v1566
        %1688 = vmatmul.mubr.bf16.gmra.mrb[0].mxu0 %v1565
        %v1689 = vpop.f32.mrb[0].mxu0
        %v1690 = vadd.f32 %v1389, %v1689
        %v1691 = vpop.f32.mrb[0].mxu0
        %v1692 = vadd.f32 %v1391, %v1691
        %v1693 = vpop.f32.mrb[0].mxu0
        %v1694 = vpop.f32.mrb[0].mxu0
        %1695 = vdwg.mxu0
        %1696 = vmatprep.subr.bf16.mxu0 %v704
        %1697 = vmatpush1.bf16.msra.mxu0 %v703
        %1698 = vmatprep.subr.bf16.mxu0 %v712
        %1699 = vmatpush1.bf16.msra.mxu0 %v711
        %1700 = vmatprep.subr.bf16.mxu0 %v720
        %1701 = vmatpush1.bf16.msra.mxu0 %v719
        %1702 = vmatprep.subr.bf16.mxu0 %v728
        %1703 = vmatpush1.bf16.msra.mxu0 %v727
        %1704 = vmatprep.subr.bf16.mxu0 %v736
        %1705 = vmatpush1.bf16.msra.mxu0 %v735
        %1706 = vmatprep.subr.bf16.mxu0 %v744
        %1707 = vmatpush1.bf16.msra.mxu0 %v743
        %1708 = vmatprep.subr.bf16.mxu0 %v752
        %1709 = vmatpush1.bf16.msra.mxu0 %v751
        %1710 = vmatprep.subr.bf16.mxu0 %v760
        %1711 = vmatpush1.bf16.msra.mxu0 %v759
        %1712 = vmatprep.subr.bf16.mxu0 %v768
        %1713 = vmatpush1.bf16.msra.mxu0 %v767
        %1714 = vmatprep.subr.bf16.mxu0 %v776
        %1715 = vmatpush1.bf16.msra.mxu0 %v775
        %1716 = vmatprep.subr.bf16.mxu0 %v784
        %1717 = vmatpush1.bf16.msra.mxu0 %v783
        %1718 = vmatprep.subr.bf16.mxu0 %v792
        %1719 = vmatpush1.bf16.msra.mxu0 %v791
        %1720 = vmatprep.subr.bf16.mxu0 %v800
        %1721 = vmatpush1.bf16.msra.mxu0 %v799
        %1722 = vmatprep.subr.bf16.mxu0 %v808
        %1723 = vmatpush1.bf16.msra.mxu0 %v807
        %1724 = vmatprep.subr.bf16.mxu0 %v816
        %1725 = vmatpush1.bf16.msra.mxu0 %v815
        %1726 = vmatprep.subr.bf16.mxu0 %v824
        %1727 = vmatpush1.bf16.msra.mxu0 %v823
        %1728 = vmatprep.mubr.bf16.mxu0 %v1568
        %1729 = vmatmul.mubr.bf16.gmra.mrb[0].mxu0 %v1567
        %v1730 = vpop.f32.mrb[0].mxu0
        %v1731 = vadd.f32 %v1690, %v1730
        %v1732 = vpop.f32.mrb[0].mxu0
        %v1733 = vadd.f32 %v1692, %v1732
        %v1734 = vpop.f32.mrb[0].mxu0
        %v1735 = vpop.f32.mrb[0].mxu0
        %1736 = vdwg.mxu0
        %1737 = vmatprep.subr.bf16.mxu0 %v578
        %1738 = vmatpush1.bf16.msra.mxu0 %v577
        %1739 = vmatprep.subr.bf16.mxu0 %v586
        %1740 = vmatpush1.bf16.msra.mxu0 %v585
        %1741 = vmatprep.subr.bf16.mxu0 %v594
        %1742 = vmatpush1.bf16.msra.mxu0 %v593
        %1743 = vmatprep.subr.bf16.mxu0 %v602
        %1744 = vmatpush1.bf16.msra.mxu0 %v601
        %1745 = vmatprep.subr.bf16.mxu0 %v610
        %1746 = vmatpush1.bf16.msra.mxu0 %v609
        %1747 = vmatprep.subr.bf16.mxu0 %v618
        %1748 = vmatpush1.bf16.msra.mxu0 %v617
        %1749 = vmatprep.subr.bf16.mxu0 %v626
        %1750 = vmatpush1.bf16.msra.mxu0 %v625
        %1751 = vmatprep.subr.bf16.mxu0 %v634
        %1752 = vmatpush1.bf16.msra.mxu0 %v633
        %1753 = vmatprep.subr.bf16.mxu0 %v642
        %1754 = vmatpush1.bf16.msra.mxu0 %v641
        %1755 = vmatprep.subr.bf16.mxu0 %v650
        %1756 = vmatpush1.bf16.msra.mxu0 %v649
        %1757 = vmatprep.subr.bf16.mxu0 %v658
        %1758 = vmatpush1.bf16.msra.mxu0 %v657
        %1759 = vmatprep.subr.bf16.mxu0 %v666
        %1760 = vmatpush1.bf16.msra.mxu0 %v665
        %1761 = vmatprep.subr.bf16.mxu0 %v674
        %1762 = vmatpush1.bf16.msra.mxu0 %v673
        %1763 = vmatprep.subr.bf16.mxu0 %v682
        %1764 = vmatpush1.bf16.msra.mxu0 %v681
        %1765 = vmatprep.subr.bf16.mxu0 %v690
        %1766 = vmatpush1.bf16.msra.mxu0 %v689
        %1767 = vmatprep.subr.bf16.mxu0 %v698
        %1768 = vmatpush1.bf16.msra.mxu0 %v697
        %1769 = vmatprep.mubr.bf16.mxu0 %v1566
        %1770 = vmatmul.mubr.bf16.gmra.mrb[0].mxu0 %v1565
        %v1771 = vpop.f32.mrb[0].mxu0
        %v1772 = vadd.f32 %v1471, %v1771
        %v1773 = vpop.f32.mrb[0].mxu0
        %v1774 = vadd.f32 %v1473, %v1773
        %v1775 = vpop.f32.mrb[0].mxu0
        %v1776 = vpop.f32.mrb[0].mxu0
        %1777 = vdwg.mxu0
        %1778 = vmatprep.subr.bf16.mxu0 %v706
        %1779 = vmatpush1.bf16.msra.mxu0 %v705
        %1780 = vmatprep.subr.bf16.mxu0 %v714
        %1781 = vmatpush1.bf16.msra.mxu0 %v713
        %1782 = vmatprep.subr.bf16.mxu0 %v722
        %1783 = vmatpush1.bf16.msra.mxu0 %v721
        %1784 = vmatprep.subr.bf16.mxu0 %v730
        %1785 = vmatpush1.bf16.msra.mxu0 %v729
        %1786 = vmatprep.subr.bf16.mxu0 %v738
        %1787 = vmatpush1.bf16.msra.mxu0 %v737
        %1788 = vmatprep.subr.bf16.mxu0 %v746
        %1789 = vmatpush1.bf16.msra.mxu0 %v745
        %1790 = vmatprep.subr.bf16.mxu0 %v754
        %1791 = vmatpush1.bf16.msra.mxu0 %v753
        %1792 = vmatprep.subr.bf16.mxu0 %v762
        %1793 = vmatpush1.bf16.msra.mxu0 %v761
        %1794 = vmatprep.subr.bf16.mxu0 %v770
        %1795 = vmatpush1.bf16.msra.mxu0 %v769
        %1796 = vmatprep.subr.bf16.mxu0 %v778
        %1797 = vmatpush1.bf16.msra.mxu0 %v777
        %1798 = vmatprep.subr.bf16.mxu0 %v786
        %1799 = vmatpush1.bf16.msra.mxu0 %v785
        %1800 = vmatprep.subr.bf16.mxu0 %v794
        %1801 = vmatpush1.bf16.msra.mxu0 %v793
        %1802 = vmatprep.subr.bf16.mxu0 %v802
        %1803 = vmatpush1.bf16.msra.mxu0 %v801
        %1804 = vmatprep.subr.bf16.mxu0 %v810
        %1805 = vmatpush1.bf16.msra.mxu0 %v809
        %1806 = vmatprep.subr.bf16.mxu0 %v818
        %1807 = vmatpush1.bf16.msra.mxu0 %v817
        %1808 = vmatprep.subr.bf16.mxu0 %v826
        %1809 = vmatpush1.bf16.msra.mxu0 %v825
        %1810 = vmatprep.mubr.bf16.mxu0 %v1568
        %1811 = vmatmul.mubr.bf16.gmra.mrb[0].mxu0 %v1567
        %v1812 = vpop.f32.mrb[0].mxu0
        %v1813 = vadd.f32 %v1772, %v1812
        %v1814 = vpop.f32.mrb[0].mxu0
        %v1815 = vadd.f32 %v1774, %v1814
        %v1816 = vpop.f32.mrb[0].mxu0
        %v1817 = vpop.f32.mrb[0].mxu0
        %1818 = vdwg.mxu0
        %1819 = vmatprep.subr.bf16.mxu0 %v580
        %1820 = vmatpush1.bf16.msra.mxu0 %v579
        %1821 = vmatprep.subr.bf16.mxu0 %v588
        %1822 = vmatpush1.bf16.msra.mxu0 %v587
        %1823 = vmatprep.subr.bf16.mxu0 %v596
        %1824 = vmatpush1.bf16.msra.mxu0 %v595
        %1825 = vmatprep.subr.bf16.mxu0 %v604
        %1826 = vmatpush1.bf16.msra.mxu0 %v603
        %1827 = vmatprep.subr.bf16.mxu0 %v612
        %1828 = vmatpush1.bf16.msra.mxu0 %v611
        %1829 = vmatprep.subr.bf16.mxu0 %v620
        %1830 = vmatpush1.bf16.msra.mxu0 %v619
        %1831 = vmatprep.subr.bf16.mxu0 %v628
        %1832 = vmatpush1.bf16.msra.mxu0 %v627
        %1833 = vmatprep.subr.bf16.mxu0 %v636
        %1834 = vmatpush1.bf16.msra.mxu0 %v635
        %1835 = vmatprep.subr.bf16.mxu0 %v644
        %1836 = vmatpush1.bf16.msra.mxu0 %v643
        %1837 = vmatprep.subr.bf16.mxu0 %v652
        %1838 = vmatpush1.bf16.msra.mxu0 %v651
        %1839 = vmatprep.subr.bf16.mxu0 %v660
        %1840 = vmatpush1.bf16.msra.mxu0 %v659
        %1841 = vmatprep.subr.bf16.mxu0 %v668
        %1842 = vmatpush1.bf16.msra.mxu0 %v667
        %1843 = vmatprep.subr.bf16.mxu0 %v676
        %1844 = vmatpush1.bf16.msra.mxu0 %v675
        %1845 = vmatprep.subr.bf16.mxu0 %v684
        %1846 = vmatpush1.bf16.msra.mxu0 %v683
        %1847 = vmatprep.subr.bf16.mxu0 %v692
        %1848 = vmatpush1.bf16.msra.mxu0 %v691
        %1849 = vmatprep.subr.bf16.mxu0 %v700
        %1850 = vmatpush1.bf16.msra.mxu0 %v699
        %1851 = vmatprep.mubr.bf16.mxu0 %v1566
        %1852 = vmatmul.mubr.bf16.gmra.mrb[0].mxu0 %v1565
        %v1853 = vpop.f32.mrb[0].mxu0
        %v1854 = vadd.f32 %v1553, %v1853
        %v1855 = vpop.f32.mrb[0].mxu0
        %v1856 = vadd.f32 %v1555, %v1855
        %v1857 = vpop.f32.mrb[0].mxu0
        %v1858 = vpop.f32.mrb[0].mxu0
        %1859 = vdwg.mxu0
        %1860 = vmatprep.subr.bf16.mxu0 %v708
        %1861 = vmatpush1.bf16.msra.mxu0 %v707
        %1862 = vmatprep.subr.bf16.mxu0 %v716
        %1863 = vmatpush1.bf16.msra.mxu0 %v715
        %1864 = vmatprep.subr.bf16.mxu0 %v724
        %1865 = vmatpush1.bf16.msra.mxu0 %v723
        %1866 = vmatprep.subr.bf16.mxu0 %v732
        %1867 = vmatpush1.bf16.msra.mxu0 %v731
        %1868 = vmatprep.subr.bf16.mxu0 %v740
        %1869 = vmatpush1.bf16.msra.mxu0 %v739
        %1870 = vmatprep.subr.bf16.mxu0 %v748
        %1871 = vmatpush1.bf16.msra.mxu0 %v747
        %1872 = vmatprep.subr.bf16.mxu0 %v756
        %1873 = vmatpush1.bf16.msra.mxu0 %v755
        %1874 = vmatprep.subr.bf16.mxu0 %v764
        %1875 = vmatpush1.bf16.msra.mxu0 %v763
        %1876 = vmatprep.subr.bf16.mxu0 %v772
        %1877 = vmatpush1.bf16.msra.mxu0 %v771
        %1878 = vmatprep.subr.bf16.mxu0 %v780
        %1879 = vmatpush1.bf16.msra.mxu0 %v779
        %1880 = vmatprep.subr.bf16.mxu0 %v788
        %1881 = vmatpush1.bf16.msra.mxu0 %v787
        %1882 = vmatprep.subr.bf16.mxu0 %v796
        %1883 = vmatpush1.bf16.msra.mxu0 %v795
        %1884 = vmatprep.subr.bf16.mxu0 %v804
        %1885 = vmatpush1.bf16.msra.mxu0 %v803
        %1886 = vmatprep.subr.bf16.mxu0 %v812
        %1887 = vmatpush1.bf16.msra.mxu0 %v811
        %1888 = vmatprep.subr.bf16.mxu0 %v820
        %1889 = vmatpush1.bf16.msra.mxu0 %v819
        %1890 = vmatprep.subr.bf16.mxu0 %v828
        %1891 = vmatpush1.bf16.msra.mxu0 %v827
        %1892 = vmatprep.mubr.bf16.mxu0 %v1568
        %1893 = vmatmul.mubr.bf16.gmra.mrb[0].mxu0 %v1567
        %v1894 = vpop.f32.mrb[0].mxu0
        %v1895 = vadd.f32 %v1854, %v1894
        %v1896 = vpop.f32.mrb[0].mxu0
        %v1897 = vadd.f32 %v1856, %v1896
        %v1898 = vpop.f32.mrb[0].mxu0
        %v1899 = vpop.f32.mrb[0].mxu0
        %1900 = vdwg.mxu0
        %v1901 = vld [vmem:[%s392] sm:$0xff]
        %v1902 = vld [vmem:[%s392 + $0x8] sm:$0xff]
        %v1905 = vlaneseq
        %v1906 = vshrl.u32 %v1905, 7
        %v1907 = vsub.s32 0, %v1906
        %v1908 = vrot.slane %v1901, %v1907
        %v1909 = vlaneseq
        %v1910 = vshrl.u32 %v1909, 7
        %v1911 = vsub.s32 2, %v1910
        %v1912 = vrot.slane %v1901, %v1911
        %v1913 = vlaneseq
        %v1914 = vshrl.u32 %v1913, 7
        %v1915 = vsub.s32 4, %v1914
        %v1916 = vrot.slane %v1901, %v1915
        %v1917 = vlaneseq
        %v1918 = vshrl.u32 %v1917, 7
        %v1919 = vsub.s32 6, %v1918
        %v1920 = vrot.slane %v1901, %v1919
        %v1921 = vlaneseq
        %v1922 = vshrl.u32 %v1921, 7
        %v1923 = vsub.s32 0, %v1922
        %v1924 = vrot.slane %v1902, %v1923
        %v1925 = vlaneseq
        %v1926 = vshrl.u32 %v1925, 7
        %v1927 = vsub.s32 2, %v1926
        %v1928 = vrot.slane %v1902, %v1927
        %v1929 = vlaneseq
        %v1930 = vshrl.u32 %v1929, 7
        %v1931 = vsub.s32 4, %v1930
        %v1932 = vrot.slane %v1902, %v1931
        %v1933 = vlaneseq
        %v1934 = vshrl.u32 %v1933, 7
        %v1935 = vsub.s32 6, %v1934
        %v1936 = vrot.slane %v1902, %v1935
        %v1945 = vlaneseq
        %v1946 = vshrl.u32 %v1945, 7
        %v1947 = vsub.s32 0, %v1946
        %v1948 = vrot.slane %v1908, %v1947
        %v1949 = vlaneseq
        %v1950 = vshrl.u32 %v1949, 7
        %v1951 = vsub.s32 0, %v1950
        %v1952 = vrot.slane %v1912, %v1951
        %v1953 = vlaneseq
        %v1954 = vshrl.u32 %v1953, 7
        %v1955 = vsub.s32 0, %v1954
        %v1956 = vrot.slane %v1916, %v1955
        %v1957 = vlaneseq
        %v1958 = vshrl.u32 %v1957, 7
        %v1959 = vsub.s32 0, %v1958
        %v1960 = vrot.slane %v1920, %v1959
        %v1961 = vlaneseq
        %v1962 = vshrl.u32 %v1961, 7
        %v1963 = vsub.s32 0, %v1962
        %v1964 = vrot.slane %v1924, %v1963
        %v1965 = vlaneseq
        %v1966 = vshrl.u32 %v1965, 7
        %v1967 = vsub.s32 0, %v1966
        %v1968 = vrot.slane %v1928, %v1967
        %v1969 = vlaneseq
        %v1970 = vshrl.u32 %v1969, 7
        %v1971 = vsub.s32 0, %v1970
        %v1972 = vrot.slane %v1932, %v1971
        %v1973 = vlaneseq
        %v1974 = vshrl.u32 %v1973, 7
        %v1975 = vsub.s32 0, %v1974
        %v1976 = vrot.slane %v1936, %v1975
        %v1977 = vmul.f32 %v1649, %v1948
        %v1978 = vmul.f32 %v1651, %v1952
        %v1979 = vmul.f32 %v1731, %v1956
        %v1980 = vmul.f32 %v1733, %v1960
        %v1981 = vmul.f32 %v1813, %v1964
        %v1982 = vmul.f32 %v1815, %v1968
        %v1983 = vmul.f32 %v1895, %v1972
        %v1984 = vmul.f32 %v1897, %v1976
        %v1985 = vlaneseq
        %v1986 = vshrl.u32 %v1985, 7
        %v1987 = vsub.s32 1, %v1986
        %v1988 = vrot.slane %v1901, %v1987
        %v1989 = vlaneseq
        %v1990 = vshrl.u32 %v1989, 7
        %v1991 = vsub.s32 3, %v1990
        %v1992 = vrot.slane %v1901, %v1991
        %v1993 = vlaneseq
        %v1994 = vshrl.u32 %v1993, 7
        %v1995 = vsub.s32 5, %v1994
        %v1996 = vrot.slane %v1901, %v1995
        %v1997 = vlaneseq
        %v1998 = vshrl.u32 %v1997, 7
        %v1999 = vsub.s32 7, %v1998
        %v2000 = vrot.slane %v1901, %v1999
        %v2001 = vlaneseq
        %v2002 = vshrl.u32 %v2001, 7
        %v2003 = vsub.s32 1, %v2002
        %v2004 = vrot.slane %v1902, %v2003
        %v2005 = vlaneseq
        %v2006 = vshrl.u32 %v2005, 7
        %v2007 = vsub.s32 3, %v2006
        %v2008 = vrot.slane %v1902, %v2007
        %v2009 = vlaneseq
        %v2010 = vshrl.u32 %v2009, 7
        %v2011 = vsub.s32 5, %v2010
        %v2012 = vrot.slane %v1902, %v2011
        %v2013 = vlaneseq
        %v2014 = vshrl.u32 %v2013, 7
        %v2015 = vsub.s32 7, %v2014
        %v2016 = vrot.slane %v1902, %v2015
        %v2025 = vlaneseq
        %v2026 = vshrl.u32 %v2025, 7
        %v2027 = vsub.s32 1, %v2026
        %v2028 = vrot.slane %v1988, %v2027
        %v2029 = vlaneseq
        %v2030 = vshrl.u32 %v2029, 7
        %v2031 = vsub.s32 1, %v2030
        %v2032 = vrot.slane %v1992, %v2031
        %v2033 = vlaneseq
        %v2034 = vshrl.u32 %v2033, 7
        %v2035 = vsub.s32 1, %v2034
        %v2036 = vrot.slane %v1996, %v2035
        %v2037 = vlaneseq
        %v2038 = vshrl.u32 %v2037, 7
        %v2039 = vsub.s32 1, %v2038
        %v2040 = vrot.slane %v2000, %v2039
        %v2041 = vlaneseq
        %v2042 = vshrl.u32 %v2041, 7
        %v2043 = vsub.s32 1, %v2042
        %v2044 = vrot.slane %v2004, %v2043
        %v2045 = vlaneseq
        %v2046 = vshrl.u32 %v2045, 7
        %v2047 = vsub.s32 1, %v2046
        %v2048 = vrot.slane %v2008, %v2047
        %v2049 = vlaneseq
        %v2050 = vshrl.u32 %v2049, 7
        %v2051 = vsub.s32 1, %v2050
        %v2052 = vrot.slane %v2012, %v2051
        %v2053 = vlaneseq
        %v2054 = vshrl.u32 %v2053, 7
        %v2055 = vsub.s32 1, %v2054
        %v2056 = vrot.slane %v2016, %v2055
        %v2057 = vadd.f32 %v1977, %v2028
        %v2058 = vadd.f32 %v1978, %v2032
        %v2059 = vadd.f32 %v1979, %v2036
        %v2060 = vadd.f32 %v1980, %v2040
        %v2061 = vadd.f32 %v1981, %v2044
        %v2062 = vadd.f32 %v1982, %v2048
        %v2063 = vadd.f32 %v1983, %v2052
        %v2064 = vadd.f32 %v1984, %v2056
        %p2065 = scmp.eq.s32.totalorder %s28, 0
        // Predicated region
        $region73: #{tpu_custom_call.1} parent=47 // pred_check
          %p2066 = pneg %p2065
        $region74: #{tpu_custom_call.1} parent=47 // pred_check_branch
          %2068 = sbr.rel (%p2066) target = $region76
        $region75: #{tpu_custom_call.1} parent=47 // pred_region
          %2069 = vst [vmem:[%s436] sm:$0xff] %v2057
          %2070 = vst [vmem:[%s436 + $0x8] sm:$0xff] %v2058
          %2071 = vst [vmem:[%s436 + $0x10] sm:$0xff] %v2059
          %2072 = vst [vmem:[%s436 + $0x18] sm:$0xff] %v2060
          %2073 = vst [vmem:[%s436 + $0x20] sm:$0xff] %v2061
          %2074 = vst [vmem:[%s436 + $0x28] sm:$0xff] %v2062
          %2075 = vst [vmem:[%s436 + $0x30] sm:$0xff] %v2063
          %2076 = vst [vmem:[%s436 + $0x38] sm:$0xff] %v2064
          %v2077 = vld [vmem:[%s6] sm:$0x1]
          %v2078 = vpack.c.bf16 %v2057, %v2057
          %v2079 = vpack.c.bf16 %v2058, %v2058
          %v2080 = vpack.c.bf16 %v2059, %v2059
          %v2081 = vpack.c.bf16 %v2060, %v2060
          %v2082 = vpack.c.bf16 %v2061, %v2061
          %v2083 = vpack.c.bf16 %v2062, %v2062
          %v2084 = vpack.c.bf16 %v2063, %v2063
          %v2085 = vpack.c.bf16 %v2064, %v2064
          %v2086 = vld [vmem:[#allocation10] sm:$0xf]
          %v2087 = vld [vmem:[#allocation10 + $0x4] sm:$0xf]
          %v2088 = vld [vmem:[#allocation10 + $0x8] sm:$0xf]
          %v2089 = vld [vmem:[#allocation10 + $0xc] sm:$0xf]
          %v2090 = vld [vmem:[#allocation10 + $0x10] sm:$0xf]
          %v2091 = vld [vmem:[#allocation10 + $0x14] sm:$0xf]
          %v2092 = vld [vmem:[#allocation10 + $0x18] sm:$0xf]
          %v2093 = vld [vmem:[#allocation10 + $0x1c] sm:$0xf]
          %v2094 = vld [vmem:[#allocation10 + $0x20] sm:$0xf]
          %v2095 = vld [vmem:[#allocation10 + $0x24] sm:$0xf]
          %v2096 = vld [vmem:[#allocation10 + $0x28] sm:$0xf]
          %v2097 = vld [vmem:[#allocation10 + $0x2c] sm:$0xf]
          %v2098 = vld [vmem:[#allocation10 + $0x30] sm:$0xf]
          %v2099 = vld [vmem:[#allocation10 + $0x34] sm:$0xf]
          %v2100 = vld [vmem:[#allocation10 + $0x38] sm:$0xf]
          %v2101 = vld [vmem:[#allocation10 + $0x3c] sm:$0xf]
          %v2102 = vld [vmem:[#allocation10 + $0x40] sm:$0xf]
          %v2103 = vld [vmem:[#allocation10 + $0x44] sm:$0xf]
          %v2104 = vld [vmem:[#allocation10 + $0x48] sm:$0xf]
          %v2105 = vld [vmem:[#allocation10 + $0x4c] sm:$0xf]
          %v2106 = vld [vmem:[#allocation10 + $0x50] sm:$0xf]
          %v2107 = vld [vmem:[#allocation10 + $0x54] sm:$0xf]
          %v2108 = vld [vmem:[#allocation10 + $0x58] sm:$0xf]
          %v2109 = vld [vmem:[#allocation10 + $0x5c] sm:$0xf]
          %v2110 = vld [vmem:[#allocation10 + $0x60] sm:$0xf]
          %v2111 = vld [vmem:[#allocation10 + $0x64] sm:$0xf]
          %v2112 = vld [vmem:[#allocation10 + $0x68] sm:$0xf]
          %v2113 = vld [vmem:[#allocation10 + $0x6c] sm:$0xf]
          %v2114 = vld [vmem:[#allocation10 + $0x70] sm:$0xf]
          %v2115 = vld [vmem:[#allocation10 + $0x74] sm:$0xf]
          %v2116 = vld [vmem:[#allocation10 + $0x78] sm:$0xf]
          %v2117 = vld [vmem:[#allocation10 + $0x7c] sm:$0xf]
          %v2118 = vld [vmem:[#allocation10 + $0x80] sm:$0xf]
          %v2119 = vld [vmem:[#allocation10 + $0x84] sm:$0xf]
          %v2120 = vld [vmem:[#allocation10 + $0x88] sm:$0xf]
          %v2121 = vld [vmem:[#allocation10 + $0x8c] sm:$0xf]
          %v2122 = vld [vmem:[#allocation10 + $0x90] sm:$0xf]
          %v2123 = vld [vmem:[#allocation10 + $0x94] sm:$0xf]
          %v2124 = vld [vmem:[#allocation10 + $0x98] sm:$0xf]
          %v2125 = vld [vmem:[#allocation10 + $0x9c] sm:$0xf]
          %v2126 = vld [vmem:[#allocation10 + $0xa0] sm:$0xf]
          %v2127 = vld [vmem:[#allocation10 + $0xa4] sm:$0xf]
          %v2128 = vld [vmem:[#allocation10 + $0xa8] sm:$0xf]
          %v2129 = vld [vmem:[#allocation10 + $0xac] sm:$0xf]
          %v2130 = vld [vmem:[#allocation10 + $0xb0] sm:$0xf]
          %v2131 = vld [vmem:[#allocation10 + $0xb4] sm:$0xf]
          %v2132 = vld [vmem:[#allocation10 + $0xb8] sm:$0xf]
          %v2133 = vld [vmem:[#allocation10 + $0xbc] sm:$0xf]
          %v2134 = vld [vmem:[#allocation10 + $0xc0] sm:$0xf]
          %v2135 = vld [vmem:[#allocation10 + $0xc4] sm:$0xf]
          %v2136 = vld [vmem:[#allocation10 + $0xc8] sm:$0xf]
          %v2137 = vld [vmem:[#allocation10 + $0xcc] sm:$0xf]
          %v2138 = vld [vmem:[#allocation10 + $0xd0] sm:$0xf]
          %v2139 = vld [vmem:[#allocation10 + $0xd4] sm:$0xf]
          %v2140 = vld [vmem:[#allocation10 + $0xd8] sm:$0xf]
          %v2141 = vld [vmem:[#allocation10 + $0xdc] sm:$0xf]
          %v2142 = vld [vmem:[#allocation10 + $0xe0] sm:$0xf]
          %v2143 = vld [vmem:[#allocation10 + $0xe4] sm:$0xf]
          %v2144 = vld [vmem:[#allocation10 + $0xe8] sm:$0xf]
          %v2145 = vld [vmem:[#allocation10 + $0xec] sm:$0xf]
          %v2146 = vld [vmem:[#allocation10 + $0xf0] sm:$0xf]
          %v2147 = vld [vmem:[#allocation10 + $0xf4] sm:$0xf]
          %v2148 = vld [vmem:[#allocation10 + $0xf8] sm:$0xf]
          %v2149 = vld [vmem:[#allocation10 + $0xfc] sm:$0xf]
          %v2150 = vld [vmem:[#allocation10 + $0x100] sm:$0xf]
          %v2151 = vld [vmem:[#allocation10 + $0x104] sm:$0xf]
          %v2152 = vld [vmem:[#allocation10 + $0x108] sm:$0xf]
          %v2153 = vld [vmem:[#allocation10 + $0x10c] sm:$0xf]
          %v2154 = vld [vmem:[#allocation10 + $0x110] sm:$0xf]
          %v2155 = vld [vmem:[#allocation10 + $0x114] sm:$0xf]
          %v2156 = vld [vmem:[#allocation10 + $0x118] sm:$0xf]
          %v2157 = vld [vmem:[#allocation10 + $0x11c] sm:$0xf]
          %v2158 = vld [vmem:[#allocation10 + $0x120] sm:$0xf]
          %v2159 = vld [vmem:[#allocation10 + $0x124] sm:$0xf]
          %v2160 = vld [vmem:[#allocation10 + $0x128] sm:$0xf]
          %v2161 = vld [vmem:[#allocation10 + $0x12c] sm:$0xf]
          %v2162 = vld [vmem:[#allocation10 + $0x130] sm:$0xf]
          %v2163 = vld [vmem:[#allocation10 + $0x134] sm:$0xf]
          %v2164 = vld [vmem:[#allocation10 + $0x138] sm:$0xf]
          %v2165 = vld [vmem:[#allocation10 + $0x13c] sm:$0xf]
          %v2166 = vld [vmem:[#allocation10 + $0x140] sm:$0xf]
          %v2167 = vld [vmem:[#allocation10 + $0x144] sm:$0xf]
          %v2168 = vld [vmem:[#allocation10 + $0x148] sm:$0xf]
          %v2169 = vld [vmem:[#allocation10 + $0x14c] sm:$0xf]
          %v2170 = vld [vmem:[#allocation10 + $0x150] sm:$0xf]
          %v2171 = vld [vmem:[#allocation10 + $0x154] sm:$0xf]
          %v2172 = vld [vmem:[#allocation10 + $0x158] sm:$0xf]
          %v2173 = vld [vmem:[#allocation10 + $0x15c] sm:$0xf]
          %v2174 = vld [vmem:[#allocation10 + $0x160] sm:$0xf]
          %v2175 = vld [vmem:[#allocation10 + $0x164] sm:$0xf]
          %v2176 = vld [vmem:[#allocation10 + $0x168] sm:$0xf]
          %v2177 = vld [vmem:[#allocation10 + $0x16c] sm:$0xf]
          %v2178 = vld [vmem:[#allocation10 + $0x170] sm:$0xf]
          %v2179 = vld [vmem:[#allocation10 + $0x174] sm:$0xf]
          %v2180 = vld [vmem:[#allocation10 + $0x178] sm:$0xf]
          %v2181 = vld [vmem:[#allocation10 + $0x17c] sm:$0xf]
          %v2182 = vld [vmem:[#allocation10 + $0x180] sm:$0xf]
          %v2183 = vld [vmem:[#allocation10 + $0x184] sm:$0xf]
          %v2184 = vld [vmem:[#allocation10 + $0x188] sm:$0xf]
          %v2185 = vld [vmem:[#allocation10 + $0x18c] sm:$0xf]
          %v2186 = vld [vmem:[#allocation10 + $0x190] sm:$0xf]
          %v2187 = vld [vmem:[#allocation10 + $0x194] sm:$0xf]
          %v2188 = vld [vmem:[#allocation10 + $0x198] sm:$0xf]
          %v2189 = vld [vmem:[#allocation10 + $0x19c] sm:$0xf]
          %v2190 = vld [vmem:[#allocation10 + $0x1a0] sm:$0xf]
          %v2191 = vld [vmem:[#allocation10 + $0x1a4] sm:$0xf]
          %v2192 = vld [vmem:[#allocation10 + $0x1a8] sm:$0xf]
          %v2193 = vld [vmem:[#allocation10 + $0x1ac] sm:$0xf]
          %v2194 = vld [vmem:[#allocation10 + $0x1b0] sm:$0xf]
          %v2195 = vld [vmem:[#allocation10 + $0x1b4] sm:$0xf]
          %v2196 = vld [vmem:[#allocation10 + $0x1b8] sm:$0xf]
          %v2197 = vld [vmem:[#allocation10 + $0x1bc] sm:$0xf]
          %v2198 = vld [vmem:[#allocation10 + $0x1c0] sm:$0xf]
          %v2199 = vld [vmem:[#allocation10 + $0x1c4] sm:$0xf]
          %v2200 = vld [vmem:[#allocation10 + $0x1c8] sm:$0xf]
          %v2201 = vld [vmem:[#allocation10 + $0x1cc] sm:$0xf]
          %v2202 = vld [vmem:[#allocation10 + $0x1d0] sm:$0xf]
          %v2203 = vld [vmem:[#allocation10 + $0x1d4] sm:$0xf]
          %v2204 = vld [vmem:[#allocation10 + $0x1d8] sm:$0xf]
          %v2205 = vld [vmem:[#allocation10 + $0x1dc] sm:$0xf]
          %v2206 = vld [vmem:[#allocation10 + $0x1e0] sm:$0xf]
          %v2207 = vld [vmem:[#allocation10 + $0x1e4] sm:$0xf]
          %v2208 = vld [vmem:[#allocation10 + $0x1e8] sm:$0xf]
          %v2209 = vld [vmem:[#allocation10 + $0x1ec] sm:$0xf]
          %v2210 = vld [vmem:[#allocation10 + $0x1f0] sm:$0xf]
          %v2211 = vld [vmem:[#allocation10 + $0x1f4] sm:$0xf]
          %v2212 = vld [vmem:[#allocation10 + $0x1f8] sm:$0xf]
          %v2213 = vld [vmem:[#allocation10 + $0x1fc] sm:$0xf]
          %v2342 = vunpack.c.l.b16 %v2086
          %v2343 = vunpack.c.l.b16 %v2087
          %v2344 = vunpack.c.l.b16 %v2088
          %v2345 = vunpack.c.l.b16 %v2089
          %v2346 = vunpack.c.l.b16 %v2090
          %v2347 = vunpack.c.l.b16 %v2091
          %v2348 = vunpack.c.l.b16 %v2092
          %v2349 = vunpack.c.l.b16 %v2093
          %v2350 = vunpack.c.l.b16 %v2094
          %v2351 = vunpack.c.l.b16 %v2095
          %v2352 = vunpack.c.l.b16 %v2096
          %v2353 = vunpack.c.l.b16 %v2097
          %v2354 = vunpack.c.l.b16 %v2098
          %v2355 = vunpack.c.l.b16 %v2099
          %v2356 = vunpack.c.l.b16 %v2100
          %v2357 = vunpack.c.l.b16 %v2101
          %v2358 = vunpack.c.l.b16 %v2102
          %v2359 = vunpack.c.l.b16 %v2103
          %v2360 = vunpack.c.l.b16 %v2104
          %v2361 = vunpack.c.l.b16 %v2105
          %v2362 = vunpack.c.l.b16 %v2106
          %v2363 = vunpack.c.l.b16 %v2107
          %v2364 = vunpack.c.l.b16 %v2108
          %v2365 = vunpack.c.l.b16 %v2109
          %v2366 = vunpack.c.l.b16 %v2110
          %v2367 = vunpack.c.l.b16 %v2111
          %v2368 = vunpack.c.l.b16 %v2112
          %v2369 = vunpack.c.l.b16 %v2113
          %v2370 = vunpack.c.l.b16 %v2114
          %v2371 = vunpack.c.l.b16 %v2115
          %v2372 = vunpack.c.l.b16 %v2116
          %v2373 = vunpack.c.l.b16 %v2117
          %v2374 = vunpack.c.l.b16 %v2118
          %v2375 = vunpack.c.l.b16 %v2119
          %v2376 = vunpack.c.l.b16 %v2120
          %v2377 = vunpack.c.l.b16 %v2121
          %v2378 = vunpack.c.l.b16 %v2122
          %v2379 = vunpack.c.l.b16 %v2123
          %v2380 = vunpack.c.l.b16 %v2124
          %v2381 = vunpack.c.l.b16 %v2125
          %v2382 = vunpack.c.l.b16 %v2126
          %v2383 = vunpack.c.l.b16 %v2127
          %v2384 = vunpack.c.l.b16 %v2128
          %v2385 = vunpack.c.l.b16 %v2129
          %v2386 = vunpack.c.l.b16 %v2130
          %v2387 = vunpack.c.l.b16 %v2131
          %v2388 = vunpack.c.l.b16 %v2132
          %v2389 = vunpack.c.l.b16 %v2133
          %v2390 = vunpack.c.l.b16 %v2134
          %v2391 = vunpack.c.l.b16 %v2135
          %v2392 = vunpack.c.l.b16 %v2136
          %v2393 = vunpack.c.l.b16 %v2137
          %v2394 = vunpack.c.l.b16 %v2138
          %v2395 = vunpack.c.l.b16 %v2139
          %v2396 = vunpack.c.l.b16 %v2140
          %v2397 = vunpack.c.l.b16 %v2141
          %v2398 = vunpack.c.l.b16 %v2142
          %v2399 = vunpack.c.l.b16 %v2143
          %v2400 = vunpack.c.l.b16 %v2144
          %v2401 = vunpack.c.l.b16 %v2145
          %v2402 = vunpack.c.l.b16 %v2146
          %v2403 = vunpack.c.l.b16 %v2147
          %v2404 = vunpack.c.l.b16 %v2148
          %v2405 = vunpack.c.l.b16 %v2149
          %v2406 = vunpack.c.l.b16 %v2150
          %v2407 = vunpack.c.l.b16 %v2151
          %v2408 = vunpack.c.l.b16 %v2152
          %v2409 = vunpack.c.l.b16 %v2153
          %v2410 = vunpack.c.l.b16 %v2154
          %v2411 = vunpack.c.l.b16 %v2155
          %v2412 = vunpack.c.l.b16 %v2156
          %v2413 = vunpack.c.l.b16 %v2157
          %v2414 = vunpack.c.l.b16 %v2158
          %v2415 = vunpack.c.l.b16 %v2159
          %v2416 = vunpack.c.l.b16 %v2160
          %v2417 = vunpack.c.l.b16 %v2161
          %v2418 = vunpack.c.l.b16 %v2162
          %v2419 = vunpack.c.l.b16 %v2163
          %v2420 = vunpack.c.l.b16 %v2164
          %v2421 = vunpack.c.l.b16 %v2165
          %v2422 = vunpack.c.l.b16 %v2166
          %v2423 = vunpack.c.l.b16 %v2167
          %v2424 = vunpack.c.l.b16 %v2168
          %v2425 = vunpack.c.l.b16 %v2169
          %v2426 = vunpack.c.l.b16 %v2170
          %v2427 = vunpack.c.l.b16 %v2171
          %v2428 = vunpack.c.l.b16 %v2172
          %v2429 = vunpack.c.l.b16 %v2173
          %v2430 = vunpack.c.l.b16 %v2174
          %v2431 = vunpack.c.l.b16 %v2175
          %v2432 = vunpack.c.l.b16 %v2176
          %v2433 = vunpack.c.l.b16 %v2177
          %v2434 = vunpack.c.l.b16 %v2178
          %v2435 = vunpack.c.l.b16 %v2179
          %v2436 = vunpack.c.l.b16 %v2180
          %v2437 = vunpack.c.l.b16 %v2181
          %v2438 = vunpack.c.l.b16 %v2182
          %v2439 = vunpack.c.l.b16 %v2183
          %v2440 = vunpack.c.l.b16 %v2184
          %v2441 = vunpack.c.l.b16 %v2185
          %v2442 = vunpack.c.l.b16 %v2186
          %v2443 = vunpack.c.l.b16 %v2187
          %v2444 = vunpack.c.l.b16 %v2188
          %v2445 = vunpack.c.l.b16 %v2189
          %v2446 = vunpack.c.l.b16 %v2190
          %v2447 = vunpack.c.l.b16 %v2191
          %v2448 = vunpack.c.l.b16 %v2192
          %v2449 = vunpack.c.l.b16 %v2193
          %v2450 = vunpack.c.l.b16 %v2194
          %v2451 = vunpack.c.l.b16 %v2195
          %v2452 = vunpack.c.l.b16 %v2196
          %v2453 = vunpack.c.l.b16 %v2197
          %v2454 = vunpack.c.l.b16 %v2198
          %v2455 = vunpack.c.l.b16 %v2199
          %v2456 = vunpack.c.l.b16 %v2200
          %v2457 = vunpack.c.l.b16 %v2201
          %v2458 = vunpack.c.l.b16 %v2202
          %v2459 = vunpack.c.l.b16 %v2203
          %v2460 = vunpack.c.l.b16 %v2204
          %v2461 = vunpack.c.l.b16 %v2205
          %v2462 = vunpack.c.l.b16 %v2206
          %v2463 = vunpack.c.l.b16 %v2207
          %v2464 = vunpack.c.l.b16 %v2208
          %v2465 = vunpack.c.l.b16 %v2209
          %v2466 = vunpack.c.l.b16 %v2210
          %v2467 = vunpack.c.l.b16 %v2211
          %v2468 = vunpack.c.l.b16 %v2212
          %v2469 = vunpack.c.l.b16 %v2213
          %v2470 = vpack.c.b16 %v2343, %v2342
          %v2471 = vpack.c.b16 %v2345, %v2344
          %v2472 = vpack.c.b16 %v2347, %v2346
          %v2473 = vpack.c.b16 %v2349, %v2348
          %v2474 = vpack.c.b16 %v2351, %v2350
          %v2475 = vpack.c.b16 %v2353, %v2352
          %v2476 = vpack.c.b16 %v2355, %v2354
          %v2477 = vpack.c.b16 %v2357, %v2356
          %v2478 = vpack.c.b16 %v2359, %v2358
          %v2479 = vpack.c.b16 %v2361, %v2360
          %v2480 = vpack.c.b16 %v2363, %v2362
          %v2481 = vpack.c.b16 %v2365, %v2364
          %v2482 = vpack.c.b16 %v2367, %v2366
          %v2483 = vpack.c.b16 %v2369, %v2368
          %v2484 = vpack.c.b16 %v2371, %v2370
          %v2485 = vpack.c.b16 %v2373, %v2372
          %v2486 = vpack.c.b16 %v2375, %v2374
          %v2487 = vpack.c.b16 %v2377, %v2376
          %v2488 = vpack.c.b16 %v2379, %v2378
          %v2489 = vpack.c.b16 %v2381, %v2380
          %v2490 = vpack.c.b16 %v2383, %v2382
          %v2491 = vpack.c.b16 %v2385, %v2384
          %v2492 = vpack.c.b16 %v2387, %v2386
          %v2493 = vpack.c.b16 %v2389, %v2388
          %v2494 = vpack.c.b16 %v2391, %v2390
          %v2495 = vpack.c.b16 %v2393, %v2392
          %v2496 = vpack.c.b16 %v2395, %v2394
          %v2497 = vpack.c.b16 %v2397, %v2396
          %v2498 = vpack.c.b16 %v2399, %v2398
          %v2499 = vpack.c.b16 %v2401, %v2400
          %v2500 = vpack.c.b16 %v2403, %v2402
          %v2501 = vpack.c.b16 %v2405, %v2404
          %v2502 = vpack.c.b16 %v2407, %v2406
          %v2503 = vpack.c.b16 %v2409, %v2408
          %v2504 = vpack.c.b16 %v2411, %v2410
          %v2505 = vpack.c.b16 %v2413, %v2412
          %v2506 = vpack.c.b16 %v2415, %v2414
          %v2507 = vpack.c.b16 %v2417, %v2416
          %v2508 = vpack.c.b16 %v2419, %v2418
          %v2509 = vpack.c.b16 %v2421, %v2420
          %v2510 = vpack.c.b16 %v2423, %v2422
          %v2511 = vpack.c.b16 %v2425, %v2424
          %v2512 = vpack.c.b16 %v2427, %v2426
          %v2513 = vpack.c.b16 %v2429, %v2428
          %v2514 = vpack.c.b16 %v2431, %v2430
          %v2515 = vpack.c.b16 %v2433, %v2432
          %v2516 = vpack.c.b16 %v2435, %v2434
          %v2517 = vpack.c.b16 %v2437, %v2436
          %v2518 = vpack.c.b16 %v2439, %v2438
          %v2519 = vpack.c.b16 %v2441, %v2440
          %v2520 = vpack.c.b16 %v2443, %v2442
          %v2521 = vpack.c.b16 %v2445, %v2444
          %v2522 = vpack.c.b16 %v2447, %v2446
          %v2523 = vpack.c.b16 %v2449, %v2448
          %v2524 = vpack.c.b16 %v2451, %v2450
          %v2525 = vpack.c.b16 %v2453, %v2452
          %v2526 = vpack.c.b16 %v2455, %v2454
          %v2527 = vpack.c.b16 %v2457, %v2456
          %v2528 = vpack.c.b16 %v2459, %v2458
          %v2529 = vpack.c.b16 %v2461, %v2460
          %v2530 = vpack.c.b16 %v2463, %v2462
          %v2531 = vpack.c.b16 %v2465, %v2464
          %v2532 = vpack.c.b16 %v2467, %v2466
          %v2533 = vpack.c.b16 %v2469, %v2468
          %2598 = vmatprep.subr.bf16.mxu0 0
          %2599 = vmatpush1.bf16.msra.mxu0 %v2470
          %2600 = vmatprep.subr.bf16.mxu0 0
          %2601 = vmatpush1.bf16.msra.mxu0 %v2471
          %2602 = vmatprep.subr.bf16.mxu0 0
          %2603 = vmatpush1.bf16.msra.mxu0 %v2472
          %2604 = vmatprep.subr.bf16.mxu0 0
          %2605 = vmatpush1.bf16.msra.mxu0 %v2473
          %2606 = vmatprep.subr.bf16.mxu0 0
          %2607 = vmatpush1.bf16.msra.mxu0 %v2474
          %2608 = vmatprep.subr.bf16.mxu0 0
          %2609 = vmatpush1.bf16.msra.mxu0 %v2475
          %2610 = vmatprep.subr.bf16.mxu0 0
          %2611 = vmatpush1.bf16.msra.mxu0 %v2476
          %2612 = vmatprep.subr.bf16.mxu0 0
          %2613 = vmatpush1.bf16.msra.mxu0 %v2477
          %2614 = vmatprep.subr.bf16.mxu0 0
          %2615 = vmatpush1.bf16.msra.mxu0 %v2478
          %2616 = vmatprep.subr.bf16.mxu0 0
          %2617 = vmatpush1.bf16.msra.mxu0 %v2479
          %2618 = vmatprep.subr.bf16.mxu0 0
          %2619 = vmatpush1.bf16.msra.mxu0 %v2480
          %2620 = vmatprep.subr.bf16.mxu0 0
          %2621 = vmatpush1.bf16.msra.mxu0 %v2481
          %2622 = vmatprep.subr.bf16.mxu0 0
          %2623 = vmatpush1.bf16.msra.mxu0 %v2482
          %2624 = vmatprep.subr.bf16.mxu0 0
          %2625 = vmatpush1.bf16.msra.mxu0 %v2483
          %2626 = vmatprep.subr.bf16.mxu0 0
          %2627 = vmatpush1.bf16.msra.mxu0 %v2484
          %2628 = vmatprep.subr.bf16.mxu0 0
          %2629 = vmatpush1.bf16.msra.mxu0 %v2485
          %2630 = vmatprep.mubr.bf16.mxu0 %v2079
          %2631 = vmatmul.mubr.bf16.gmra.mrb[0].mxu0 %v2078
          %v2632 = vpop.f32.mrb[0].mxu0
          %v2633 = vadd.f32 0.0, %v2632
          %v2634 = vpop.f32.mrb[0].mxu0
          %v2635 = vpop.f32.mrb[0].mxu0
          %v2636 = vpop.f32.mrb[0].mxu0
          %2637 = vdwg.mxu0
          %2638 = vmatprep.subr.bf16.mxu0 0
          %2639 = vmatpush1.bf16.msra.mxu0 %v2486
          %2640 = vmatprep.subr.bf16.mxu0 0
          %2641 = vmatpush1.bf16.msra.mxu0 %v2487
          %2642 = vmatprep.subr.bf16.mxu0 0
          %2643 = vmatpush1.bf16.msra.mxu0 %v2488
          %2644 = vmatprep.subr.bf16.mxu0 0
          %2645 = vmatpush1.bf16.msra.mxu0 %v2489
          %2646 = vmatprep.subr.bf16.mxu0 0
          %2647 = vmatpush1.bf16.msra.mxu0 %v2490
          %2648 = vmatprep.subr.bf16.mxu0 0
          %2649 = vmatpush1.bf16.msra.mxu0 %v2491
          %2650 = vmatprep.subr.bf16.mxu0 0
          %2651 = vmatpush1.bf16.msra.mxu0 %v2492
          %2652 = vmatprep.subr.bf16.mxu0 0
          %2653 = vmatpush1.bf16.msra.mxu0 %v2493
          %2654 = vmatprep.subr.bf16.mxu0 0
          %2655 = vmatpush1.bf16.msra.mxu0 %v2494
          %2656 = vmatprep.subr.bf16.mxu0 0
          %2657 = vmatpush1.bf16.msra.mxu0 %v2495
          %2658 = vmatprep.subr.bf16.mxu0 0
          %2659 = vmatpush1.bf16.msra.mxu0 %v2496
          %2660 = vmatprep.subr.bf16.mxu0 0
          %2661 = vmatpush1.bf16.msra.mxu0 %v2497
          %2662 = vmatprep.subr.bf16.mxu0 0
          %2663 = vmatpush1.bf16.msra.mxu0 %v2498
          %2664 = vmatprep.subr.bf16.mxu0 0
          %2665 = vmatpush1.bf16.msra.mxu0 %v2499
          %2666 = vmatprep.subr.bf16.mxu0 0
          %2667 = vmatpush1.bf16.msra.mxu0 %v2500
          %2668 = vmatprep.subr.bf16.mxu0 0
          %2669 = vmatpush1.bf16.msra.mxu0 %v2501
          %2670 = vmatprep.mubr.bf16.mxu0 %v2081
          %2671 = vmatmul.mubr.bf16.gmra.mrb[0].mxu0 %v2080
          %v2672 = vpop.f32.mrb[0].mxu0
          %v2673 = vadd.f32 %v2633, %v2672
          %v2674 = vpop.f32.mrb[0].mxu0
          %v2675 = vpop.f32.mrb[0].mxu0
          %v2676 = vpop.f32.mrb[0].mxu0
          %2677 = vdwg.mxu0
          %2678 = vmatprep.subr.bf16.mxu0 0
          %2679 = vmatpush1.bf16.msra.mxu0 %v2502
          %2680 = vmatprep.subr.bf16.mxu0 0
          %2681 = vmatpush1.bf16.msra.mxu0 %v2503
          %2682 = vmatprep.subr.bf16.mxu0 0
          %2683 = vmatpush1.bf16.msra.mxu0 %v2504
          %2684 = vmatprep.subr.bf16.mxu0 0
          %2685 = vmatpush1.bf16.msra.mxu0 %v2505
          %2686 = vmatprep.subr.bf16.mxu0 0
          %2687 = vmatpush1.bf16.msra.mxu0 %v2506
          %2688 = vmatprep.subr.bf16.mxu0 0
          %2689 = vmatpush1.bf16.msra.mxu0 %v2507
          %2690 = vmatprep.subr.bf16.mxu0 0
          %2691 = vmatpush1.bf16.msra.mxu0 %v2508
          %2692 = vmatprep.subr.bf16.mxu0 0
          %2693 = vmatpush1.bf16.msra.mxu0 %v2509
          %2694 = vmatprep.subr.bf16.mxu0 0
          %2695 = vmatpush1.bf16.msra.mxu0 %v2510
          %2696 = vmatprep.subr.bf16.mxu0 0
          %2697 = vmatpush1.bf16.msra.mxu0 %v2511
          %2698 = vmatprep.subr.bf16.mxu0 0
          %2699 = vmatpush1.bf16.msra.mxu0 %v2512
          %2700 = vmatprep.subr.bf16.mxu0 0
          %2701 = vmatpush1.bf16.msra.mxu0 %v2513
          %2702 = vmatprep.subr.bf16.mxu0 0
          %2703 = vmatpush1.bf16.msra.mxu0 %v2514
          %2704 = vmatprep.subr.bf16.mxu0 0
          %2705 = vmatpush1.bf16.msra.mxu0 %v2515
          %2706 = vmatprep.subr.bf16.mxu0 0
          %2707 = vmatpush1.bf16.msra.mxu0 %v2516
          %2708 = vmatprep.subr.bf16.mxu0 0
          %2709 = vmatpush1.bf16.msra.mxu0 %v2517
          %2710 = vmatprep.mubr.bf16.mxu0 %v2083
          %2711 = vmatmul.mubr.bf16.gmra.mrb[0].mxu0 %v2082
          %v2712 = vpop.f32.mrb[0].mxu0
          %v2713 = vadd.f32 %v2673, %v2712
          %v2714 = vpop.f32.mrb[0].mxu0
          %v2715 = vpop.f32.mrb[0].mxu0
          %v2716 = vpop.f32.mrb[0].mxu0
          %2717 = vdwg.mxu0
          %2718 = vmatprep.subr.bf16.mxu0 0
          %2719 = vmatpush1.bf16.msra.mxu0 %v2518
          %2720 = vmatprep.subr.bf16.mxu0 0
          %2721 = vmatpush1.bf16.msra.mxu0 %v2519
          %2722 = vmatprep.subr.bf16.mxu0 0
          %2723 = vmatpush1.bf16.msra.mxu0 %v2520
          %2724 = vmatprep.subr.bf16.mxu0 0
          %2725 = vmatpush1.bf16.msra.mxu0 %v2521
          %2726 = vmatprep.subr.bf16.mxu0 0
          %2727 = vmatpush1.bf16.msra.mxu0 %v2522
          %2728 = vmatprep.subr.bf16.mxu0 0
          %2729 = vmatpush1.bf16.msra.mxu0 %v2523
          %2730 = vmatprep.subr.bf16.mxu0 0
          %2731 = vmatpush1.bf16.msra.mxu0 %v2524
          %2732 = vmatprep.subr.bf16.mxu0 0
          %2733 = vmatpush1.bf16.msra.mxu0 %v2525
          %2734 = vmatprep.subr.bf16.mxu0 0
          %2735 = vmatpush1.bf16.msra.mxu0 %v2526
          %2736 = vmatprep.subr.bf16.mxu0 0
          %2737 = vmatpush1.bf16.msra.mxu0 %v2527
          %2738 = vmatprep.subr.bf16.mxu0 0
          %2739 = vmatpush1.bf16.msra.mxu0 %v2528
          %2740 = vmatprep.subr.bf16.mxu0 0
          %2741 = vmatpush1.bf16.msra.mxu0 %v2529
          %2742 = vmatprep.subr.bf16.mxu0 0
          %2743 = vmatpush1.bf16.msra.mxu0 %v2530
          %2744 = vmatprep.subr.bf16.mxu0 0
          %2745 = vmatpush1.bf16.msra.mxu0 %v2531
          %2746 = vmatprep.subr.bf16.mxu0 0
          %2747 = vmatpush1.bf16.msra.mxu0 %v2532
          %2748 = vmatprep.subr.bf16.mxu0 0
          %2749 = vmatpush1.bf16.msra.mxu0 %v2533
          %2750 = vmatprep.mubr.bf16.mxu0 %v2085
          %2751 = vmatmul.mubr.bf16.gmra.mrb[0].mxu0 %v2084
          %v2752 = vpop.f32.mrb[0].mxu0
          %v2753 = vadd.f32 %v2713, %v2752
          %v2754 = vpop.f32.mrb[0].mxu0
          %v2755 = vpop.f32.mrb[0].mxu0
          %v2756 = vpop.f32.mrb[0].mxu0
          %2757 = vdwg.mxu0
          %v2759 = vlaneseq
          %v2760 = vshrl.u32 %v2759, 7
          %v2761 = vsub.s32 0, %v2760
          %v2762 = vrot.slane %v2077, %v2761
          %v2764 = vadd.f32 %v2762, %v2753
          %2765 = vst [vmem:[%s443] sm:$0xff] %v2764
        $region76: #{tpu_custom_call.1} parent=47 // pred_fallthru
          _
        %p2766 = scmp.eq.s32.totalorder %s28, 1
        // Predicated region
        $region77: #{tpu_custom_call.1} parent=47 // pred_check
          %p2767 = pneg %p2766
        $region78: #{tpu_custom_call.1} parent=47 // pred_check_branch
          %2769 = sbr.rel (%p2767) target = $region80
        $region79: #{tpu_custom_call.1} parent=47 // pred_region
          %v2770 = vmul.f32 %v2057, 0.5
          %v2771 = vmul.f32 %v2058, 0.5
          %v2772 = vmul.f32 %v2059, 0.5
          %v2773 = vmul.f32 %v2060, 0.5
          %v2774 = vmul.f32 %v2061, 0.5
          %v2775 = vmul.f32 %v2062, 0.5
          %v2776 = vmul.f32 %v2063, 0.5
          %v2777 = vmul.f32 %v2064, 0.5
          %v2778 = vmul.f32 %v2770, 1.442695
          %v2779 = vpow.pop %v2778
          %v2780 = vmul.f32 %v2771, 1.442695
          %v2781 = vpow.pop %v2780
          %v2782 = vmul.f32 %v2772, 1.442695
          %v2783 = vpow.pop %v2782
          %v2784 = vmul.f32 %v2773, 1.442695
          %v2785 = vpow.pop %v2784
          %v2786 = vmul.f32 %v2774, 1.442695
          %v2787 = vpow.pop %v2786
          %v2788 = vmul.f32 %v2775, 1.442695
          %v2789 = vpow.pop %v2788
          %v2790 = vmul.f32 %v2776, 1.442695
          %v2791 = vpow.pop %v2790
          %v2792 = vmul.f32 %v2777, 1.442695
          %v2793 = vpow.pop %v2792
          %2794 = vst [vmem:[%s436] sm:$0xff] %v2779
          %2795 = vst [vmem:[%s436 + $0x8] sm:$0xff] %v2781
          %2796 = vst [vmem:[%s436 + $0x10] sm:$0xff] %v2783
          %2797 = vst [vmem:[%s436 + $0x18] sm:$0xff] %v2785
          %2798 = vst [vmem:[%s436 + $0x20] sm:$0xff] %v2787
          %2799 = vst [vmem:[%s436 + $0x28] sm:$0xff] %v2789
          %2800 = vst [vmem:[%s436 + $0x30] sm:$0xff] %v2791
          %2801 = vst [vmem:[%s436 + $0x38] sm:$0xff] %v2793
          %2802 = vst [vmem:[%s443] sm:$0xff] 0.0
        $region80: #{tpu_custom_call.1} parent=47 // pred_fallthru
          _
        %s2803 = sand.u32 %s198, 1
        %s2804 = scalar_lea.sflag [#allocation4], %s2803
        %s2805 = sand.u32 %s198, 1
        %s2806 = smul.addr %s2805, 64
        %s2807 = scalar_lea.vmem [#allocation11], %s2806
        %s2808 = sand.u32 %s224, 1
        %s2809 = scalar_lea.sflag [#allocation13], %s2808
        %s2810 = sand.u32 %s224, 1
        %s2811 = smul.addr %s2810, 8
        %s2812 = scalar_lea.vmem [#allocation12], %s2811
        // Predicated region
        $region81: #{tpu_custom_call.1} parent=47 // pred_check
          %p2813 = pneg %p208
        $region82: #{tpu_custom_call.1} parent=47 // pred_check_branch
          %2815 = sbr.rel (%p2813) target = $region84
        $region83: #{tpu_custom_call.1} parent=47 // pred_region
          %s2817 = ssub.s32 1024, 1024
          %2818 = vsyncadd %s2804, %s2817
          %s2819 = smul.addr %s28, 8
          %s2820 = smul.addr %s2819, 128
          %s2821 = scalar_lea.hbm %s7, %s2820
          %s2823 = sshll.u32 %s2807, 4
          %s2824 = int_to_ptr.vmem [resolvable:$true] %s2823
          %2826 = dma.vmem_to_hbm [thread:$0]  %s2824, 1024, %s2821, %s2804
        $region84: #{tpu_custom_call.1} parent=47 // pred_fallthru
          _
        // Predicated region
        $region85: #{tpu_custom_call.1} parent=47 // pred_check
          %p2827 = pneg %p234
        $region86: #{tpu_custom_call.1} parent=47 // pred_check_branch
          %2829 = sbr.rel (%p2827) target = $region88
        $region87: #{tpu_custom_call.1} parent=47 // pred_region
          %s2831 = ssub.s32 128, 128
          %2832 = vsyncadd %s2809, %s2831
          %s2833 = smul.addr %s28, 128
          %s2834 = scalar_lea.hbm %s8, %s2833
          %s2836 = sshll.u32 %s2812, 4
          %s2837 = int_to_ptr.vmem [resolvable:$true] %s2836
          %2839 = dma.vmem_to_hbm [thread:$0]  %s2837, 128, %s2834, %s2809
        $region88: #{tpu_custom_call.1} parent=47 // pred_fallthru
          _
      $region48: #{tpu_custom_call.1} parent=5 // pred_fallthru
        _
      %p2840 = scmp.le.s32.totalorder 2, %s23
      // Predicated region
      $region89: #{tpu_custom_call.1} parent=5 // pred_check
        %p2841 = pneg %p2840
      $region90: #{tpu_custom_call.1} parent=5 // pred_check_branch
        %2843 = sbr.rel (%p2841) target = $region92
      $region91: #{tpu_custom_call.1} parent=5 // pred_region
        %s2844 = ssub.s32 %s23, 2
        // Predicated region
        $region93: #{tpu_custom_call.1} parent=91 // pred_check
          %p2845 = pneg %p214
        $region94: #{tpu_custom_call.1} parent=91 // pred_check_branch
          %2847 = sbr.rel (%p2845) target = $region96
        $region95: #{tpu_custom_call.1} parent=91 // pred_region
          %s2848 = sand.u32 %s199, 1
          %s2849 = scalar_lea.sflag [#allocation4], %s2848
          %s2850 = sand.u32 %s199, 1
          %s2851 = smul.addr %s2850, 64
          %s2852 = scalar_lea.vmem [#allocation11], %s2851
          %2853 = dma.done %s2849, 1024
        $region96: #{tpu_custom_call.1} parent=91 // pred_fallthru
          _
        // Predicated region
        $region97: #{tpu_custom_call.1} parent=91 // pred_check
          %p2854 = pneg %p240
        $region98: #{tpu_custom_call.1} parent=91 // pred_check_branch
          %2856 = sbr.rel (%p2854) target = $region100
        $region99: #{tpu_custom_call.1} parent=91 // pred_region
          %s2857 = sand.u32 %s225, 1
          %s2858 = scalar_lea.sflag [#allocation13], %s2857
          %s2859 = sand.u32 %s225, 1
          %s2860 = smul.addr %s2859, 8
          %s2861 = scalar_lea.vmem [#allocation12], %s2860
          %2862 = dma.done %s2858, 128
        $region100: #{tpu_custom_call.1} parent=91 // pred_fallthru
          _
      $region92: #{tpu_custom_call.1} parent=5 // pred_fallthru
        _
    $region6: #{tpu_custom_call.1} parent=1 // loop_footer
      %s27 = sadd.s32 1, %s23
    $region7: #{tpu_custom_call.1} parent=1 // loop_footer_branch
      %22 = sbr.rel target = $region3
    $region8: #{tpu_custom_call.1} parent=1 // loop_exit
      _
    %2863 = vsyncpa [#allocation3], 1
    %s2864 = scalar_lea.sflag [#allocation3], 1
    %2865 = vsyncpa %s2864, 1
    %2866 = vsyncpa [#allocation6], 1
    %2867 = vsyncpa [#allocation4], 1
    %s2868 = scalar_lea.sflag [#allocation4], 1
    %2869 = vsyncpa %s2868, 1
    %2870 = vsyncpa [#allocation13], 1
    %s2871 = scalar_lea.sflag [#allocation13], 1
    %2872 = vsyncpa %s2871, 1

</llo_original>
